<compile_context>
chip_gen: v7x
topology: tpu7x:2x2x1
jax: 0.10.0
libtpu: 0.0.40
codegen_flags: <defaults>
</compile_context>

<pallas_src>
import functools

import jax
import jax.numpy as jnp
from jax import lax
from jax.experimental import pallas as pl
from jax.experimental.pallas import tpu as pltpu


_DIMS = [180, 360, 720, 720, 180, 12, 1]   # layer widths (in -> ... -> out)
_LANE = 128
# Padded fan-in / fan-out for the 5 MXU layers (layer-1 K stays unpadded=180).
_IN_P = [180, 384, 768, 768, 256]
_OUT_P = [384, 768, 768, 256, 128]


def _pad_up(n, m):
    return ((n + m - 1) // m) * m


def _pad_axis(a, target, axis):
    pad = [(0, 0)] * a.ndim
    pad[axis] = (0, target - a.shape[axis])
    return jnp.pad(a, pad)


# ----------------------------- Pallas kernel --------------------------------

def _mlp_kernel(x_ref,
                w1_ref, b1_ref,
                w2_ref, b2_ref,
                w3_ref, b3_ref,
                w4_ref, b4_ref,
                w5_ref, b5_ref,
                w6_ref, b6_ref,
                o_ref):
    """Fused 6-layer MLP, ReLU after every layer.

    Layers 1-5 run on the MXU (bf16 operands, f32 accumulation). The final
    12->1 layer contracts the lane dim of w6 (1,128) against the lane dim of
    h (bt,128), producing a lane-dense (1, bt) row that is stored directly.
    """
    h = x_ref[...].astype(jnp.bfloat16)                 # (bt, 180)

    def layer(h, w_ref, b_ref):
        y = jnp.dot(h, w_ref[...], preferred_element_type=jnp.float32)
        return jnp.maximum(y + b_ref[...], 0.0).astype(jnp.bfloat16)

    h = layer(h, w1_ref, b1_ref)                        # (bt, 384)
    h = layer(h, w2_ref, b2_ref)                        # (bt, 768)
    h = layer(h, w3_ref, b3_ref)                        # (bt, 768)
    h = layer(h, w4_ref, b4_ref)                        # (bt, 256)
    h = layer(h, w5_ref, b5_ref)                        # (bt, 128); cols >=12 == 0

    # Final 12->1 layer -> lane-dense (1, bt) row.
    y = lax.dot_general(w6_ref[...], h,
                        dimension_numbers=(((1,), (1,)), ((), ())),
                        preferred_element_type=jnp.float32)   # (1, bt)
    y = jnp.maximum(y + b6_ref[...], 0.0)               # scalar bias + final ReLU
    o_ref[...] = y.reshape(o_ref.shape).astype(o_ref.dtype)


# --------------------------- Parameter handling ------------------------------

def init_params(key):
    """PyTorch-Linear-style init: U(-1/sqrt(fan_in), +1/sqrt(fan_in))."""
    params = []
    for i in range(len(_DIMS) - 1):
        fan_in, fan_out = _DIMS[i], _DIMS[i + 1]
        key, kw, kb = jax.random.split(key, 3)
        bound = 1.0 / jnp.sqrt(jnp.float32(fan_in))
        w = jax.random.uniform(kw, (fan_in, fan_out), jnp.float32, -bound, bound)
        b = jax.random.uniform(kb, (fan_out,), jnp.float32, -bound, bound)
        params.append((w, b))
    return params


def prepare_params(params, *, weight_dtype=jnp.bfloat16):
    """One-time padding + dtype cast (hoisted out of the per-call forward).

    Layers 1-5: weights zero-padded to lane multiples (layer-1 K kept at 180)
    and cast to bf16; biases kept as f32 (1, N) rows (added to f32 accum).
    Layer 6: bf16 (1, 128) weight row + f32 (1, 1) bias scalar.
    """
    flat = []
    for i in range(5):
        w, b = params[i]
        w_p = _pad_axis(_pad_axis(jnp.asarray(w, jnp.float32), _IN_P[i], 0),
                        _OUT_P[i], 1).astype(weight_dtype)
        b_p = _pad_axis(jnp.asarray(b, jnp.float32).reshape(1, -1), _OUT_P[i], 1)
        flat += [w_p, b_p]

    w6, b6 = params[5]                                   # (12, 1), (1,)
    w6_row = _pad_axis(jnp.asarray(w6, jnp.float32).reshape(1, -1), _LANE, 1)
    flat += [w6_row.astype(weight_dtype),
             jnp.asarray(b6, jnp.float32).reshape(1, 1)]
    return tuple(flat)


# ------------------------------- Wrapper -------------------------------------

@functools.partial(jax.jit, static_argnames=("batch_tile",))
def uv_model_forward(x, prepped_params, *, batch_tile=512):
    """x: (B, 180) float32 -> (B, 1) float32, matching UVModel.forward."""
    B, Din = x.shape
    assert Din == _DIMS[0]

    bt = min(batch_tile, _pad_up(B, 8))     # small-B shrink path (sublane-aligned)
    G = pl.cdiv(B, bt)                      # batch tiles; last one may be ragged

    # x block: full (unpadded) feature dim; batch axis tiled by the grid.
    in_specs = [pl.BlockSpec((bt, Din), lambda i: (i, 0))]
    # Grid-invariant weights/biases (constant index_map -> fetched once).
    for li in range(5):
        in_specs.append(pl.BlockSpec((_IN_P[li], _OUT_P[li]), lambda i: (0, 0)))
        in_specs.append(pl.BlockSpec((1, _OUT_P[li]), lambda i: (0, 0)))
    in_specs.append(pl.BlockSpec((1, _LANE), lambda i: (0, 0)))   # w6 row
    in_specs.append(pl.BlockSpec((1, 1), lambda i: (0, 0)))       # b6 scalar

    # Lane-dense output: one (1, bt) f32 row per batch tile.
    out_spec = pl.BlockSpec((1, 1, bt), lambda i: (i, 0, 0))

    n_rows = G * bt
    mxu_flops = 2 * n_rows * (sum(_IN_P[i] * _OUT_P[i] for i in range(5)) + _LANE)
    bytes_accessed = (B * Din * 4
                      + sum(int(p.size) * p.dtype.itemsize for p in prepped_params)
                      + n_rows * 4)

    out_p = pl.pallas_call(
        _mlp_kernel,
        out_shape=jax.ShapeDtypeStruct((G, 1, bt), jnp.float32),
        grid_spec=pltpu.PrefetchScalarGridSpec(
            num_scalar_prefetch=0,
            grid=(G,),
            in_specs=in_specs,
            out_specs=out_spec,
        ),
        compiler_params=pltpu.CompilerParams(
            # On v7x with G >= 2, (pltpu.CORE_PARALLEL,) shards the batch-tile
            # axis across both TensorCores; default kept portable.
            dimension_semantics=("parallel",),
            vmem_limit_bytes=32 * 1024 * 1024,
        ),
        cost_estimate=pl.CostEstimate(
            flops=int(mxu_flops),
            transcendentals=0,
            bytes_accessed=int(bytes_accessed),
        ),
    )(x, *prepped_params)

    # (G, 1, bt) -> (G*bt, 1); rows >= B belong to the discarded ragged tail.
    return out_p.reshape(G * bt, 1)[:B]


# ---------------------------- Reference (JAX) --------------------------------

def uv_model_ref(x, params, *, compute_dtype=jnp.float32):
    """Pure-JAX reference; compute_dtype=bf16 mirrors the kernel numerics."""
    h = x
    for w, b in params:
        y = jnp.dot(h.astype(compute_dtype), w.astype(compute_dtype),
                    preferred_element_type=jnp.float32) + b
        h = jnp.maximum(y, 0.0)
    return h


# --------------------------------- Main ---------------------------------------

if __name__ == "__main__":
    key = jax.random.PRNGKey(0)
    kx, kp = jax.random.split(key)

    params = init_params(kp)
    prepped = prepare_params(params)          # one-time padding + bf16 cast

    # Primary small test: single tile, no ragged tail.
    B = 8
    x = jax.random.normal(kx, (B, 180), jnp.float32)
    out = jax.block_until_ready(uv_model_forward(x, prepped))
    ref = uv_model_ref(x, params, compute_dtype=jnp.bfloat16)
    assert out.shape == (B, 1), out.shape
    assert jnp.allclose(out, ref, atol=2e-3, rtol=2e-3), (
        float(jnp.max(jnp.abs(out - ref))))

    # Multi-tile + ragged-tail path (grid of 3, last tile only partially valid).
    B2 = 20
    x2 = jax.random.normal(jax.random.PRNGKey(1), (B2, 180), jnp.float32)
    out2 = jax.block_until_ready(uv_model_forward(x2, prepped, batch_tile=8))
    ref2 = uv_model_ref(x2, params, compute_dtype=jnp.bfloat16)
    assert out2.shape == (B2, 1), out2.shape
    assert jnp.allclose(out2, ref2, atol=2e-3, rtol=2e-3), (
        float(jnp.max(jnp.abs(out2 - ref2))))

    print("KERNEL_OK")
</pallas_src>

<mosaic_0001>
module attributes {stable_mosaic.version = 11 : i64} {
  func.func @_mlp_kernel(%arg0: i32, %arg1: memref<8x180xf32, #tpu.memory_space<vmem>>, %arg2: memref<180x384xbf16, #tpu.memory_space<vmem>>, %arg3: memref<1x384xf32, #tpu.memory_space<vmem>>, %arg4: memref<384x768xbf16, #tpu.memory_space<vmem>>, %arg5: memref<1x768xf32, #tpu.memory_space<vmem>>, %arg6: memref<768x768xbf16, #tpu.memory_space<vmem>>, %arg7: memref<1x768xf32, #tpu.memory_space<vmem>>, %arg8: memref<768x256xbf16, #tpu.memory_space<vmem>>, %arg9: memref<1x256xf32, #tpu.memory_space<vmem>>, %arg10: memref<256x128xbf16, #tpu.memory_space<vmem>>, %arg11: memref<1x128xf32, #tpu.memory_space<vmem>>, %arg12: memref<1x128xbf16, #tpu.memory_space<vmem>>, %arg13: memref<1x1xf32, #tpu.memory_space<vmem>>, %arg14: memref<1x1x8xf32, #tpu.memory_space<vmem>>) attributes {dimension_semantics = [#tpu.dimension_semantics<parallel>], iteration_bounds = array<i64: 1>, scalar_prefetch = 0 : i64, scratch_operands = 0 : i64, tpu.core_type = #tpu.core_type<tc>, window_params = [{transform_indices = @transform_0, window_bounds = array<i64: 8, 180>}, {pipeline_mode = #tpu.pipeline_mode<synchronous>, transform_indices = @transform_1, window_bounds = array<i64: 180, 384>}, {pipeline_mode = #tpu.pipeline_mode<synchronous>, transform_indices = @transform_2, window_bounds = array<i64: 1, 384>}, {pipeline_mode = #tpu.pipeline_mode<synchronous>, transform_indices = @transform_3, window_bounds = array<i64: 384, 768>}, {pipeline_mode = #tpu.pipeline_mode<synchronous>, transform_indices = @transform_4, window_bounds = array<i64: 1, 768>}, {pipeline_mode = #tpu.pipeline_mode<synchronous>, transform_indices = @transform_5, window_bounds = array<i64: 768, 768>}, {pipeline_mode = #tpu.pipeline_mode<synchronous>, transform_indices = @transform_6, window_bounds = array<i64: 1, 768>}, {pipeline_mode = #tpu.pipeline_mode<synchronous>, transform_indices = @transform_7, window_bounds = array<i64: 768, 256>}, {pipeline_mode = #tpu.pipeline_mode<synchronous>, transform_indices = @transform_8, window_bounds = array<i64: 1, 256>}, {pipeline_mode = #tpu.pipeline_mode<synchronous>, transform_indices = @transform_9, window_bounds = array<i64: 256, 128>}, {pipeline_mode = #tpu.pipeline_mode<synchronous>, transform_indices = @transform_10, window_bounds = array<i64: 1, 128>}, {pipeline_mode = #tpu.pipeline_mode<synchronous>, transform_indices = @transform_11, window_bounds = array<i64: 1, 128>}, {pipeline_mode = #tpu.pipeline_mode<synchronous>, transform_indices = @transform_12, window_bounds = array<i64: 1, 1>}, {transform_indices = @transform_13, window_bounds = array<i64: 1, 1, 8>}]} {
    %c0 = arith.constant 0 : index
    %c0_0 = arith.constant 0 : index
    %0 = vector.load %arg1[%c0, %c0_0] : memref<8x180xf32, #tpu.memory_space<vmem>>, vector<8x180xf32>
    %1 = arith.truncf %0 : vector<8x180xf32> to vector<8x180xbf16>
    %c0_1 = arith.constant 0 : index
    %c0_2 = arith.constant 0 : index
    %2 = vector.load %arg2[%c0_1, %c0_2] : memref<180x384xbf16, #tpu.memory_space<vmem>>, vector<180x384xbf16>
    %cst = arith.constant dense<0.000000e+00> : vector<8x384xf32>
    %3 = tpu.matmul %1, %2, %cst {dimension_numbers = #tpu.dot_dimension_numbers<[1], [0], [0], [1], [0, 0, 1, 1], [], []>} : vector<8x180xbf16>, vector<180x384xbf16>, vector<8x384xf32> -> vector<8x384xf32>
    %c0_3 = arith.constant 0 : index
    %c0_4 = arith.constant 0 : index
    %4 = vector.load %arg3[%c0_3, %c0_4] : memref<1x384xf32, #tpu.memory_space<vmem>>, vector<1x384xf32>
    %5 = vector.broadcast %4 : vector<1x384xf32> to vector<8x384xf32>
    %6 = arith.addf %3, %5 : vector<8x384xf32>
    %cst_5 = arith.constant 0.000000e+00 : f32
    %7 = vector.broadcast %cst_5 : f32 to vector<8x384xf32>
    %8 = arith.maximumf %6, %7 : vector<8x384xf32>
    %9 = arith.truncf %8 : vector<8x384xf32> to vector<8x384xbf16>
    %c0_6 = arith.constant 0 : index
    %c0_7 = arith.constant 0 : index
    %10 = vector.load %arg4[%c0_6, %c0_7] : memref<384x768xbf16, #tpu.memory_space<vmem>>, vector<384x768xbf16>
    %cst_8 = arith.constant dense<0.000000e+00> : vector<8x768xf32>
    %11 = tpu.matmul %9, %10, %cst_8 {dimension_numbers = #tpu.dot_dimension_numbers<[1], [0], [0], [1], [0, 0, 1, 1], [], []>} : vector<8x384xbf16>, vector<384x768xbf16>, vector<8x768xf32> -> vector<8x768xf32>
    %c0_9 = arith.constant 0 : index
    %c0_10 = arith.constant 0 : index
    %12 = vector.load %arg5[%c0_9, %c0_10] : memref<1x768xf32, #tpu.memory_space<vmem>>, vector<1x768xf32>
    %13 = vector.broadcast %12 : vector<1x768xf32> to vector<8x768xf32>
    %14 = arith.addf %11, %13 : vector<8x768xf32>
    %cst_11 = arith.constant 0.000000e+00 : f32
    %15 = vector.broadcast %cst_11 : f32 to vector<8x768xf32>
    %16 = arith.maximumf %14, %15 : vector<8x768xf32>
    %17 = arith.truncf %16 : vector<8x768xf32> to vector<8x768xbf16>
    %c0_12 = arith.constant 0 : index
    %c0_13 = arith.constant 0 : index
    %18 = vector.load %arg6[%c0_12, %c0_13] : memref<768x768xbf16, #tpu.memory_space<vmem>>, vector<768x768xbf16>
    %cst_14 = arith.constant dense<0.000000e+00> : vector<8x768xf32>
    %19 = tpu.matmul %17, %18, %cst_14 {dimension_numbers = #tpu.dot_dimension_numbers<[1], [0], [0], [1], [0, 0, 1, 1], [], []>} : vector<8x768xbf16>, vector<768x768xbf16>, vector<8x768xf32> -> vector<8x768xf32>
    %c0_15 = arith.constant 0 : index
    %c0_16 = arith.constant 0 : index
    %20 = vector.load %arg7[%c0_15, %c0_16] : memref<1x768xf32, #tpu.memory_space<vmem>>, vector<1x768xf32>
    %21 = vector.broadcast %20 : vector<1x768xf32> to vector<8x768xf32>
    %22 = arith.addf %19, %21 : vector<8x768xf32>
    %cst_17 = arith.constant 0.000000e+00 : f32
    %23 = vector.broadcast %cst_17 : f32 to vector<8x768xf32>
    %24 = arith.maximumf %22, %23 : vector<8x768xf32>
    %25 = arith.truncf %24 : vector<8x768xf32> to vector<8x768xbf16>
    %c0_18 = arith.constant 0 : index
    %c0_19 = arith.constant 0 : index
    %26 = vector.load %arg8[%c0_18, %c0_19] : memref<768x256xbf16, #tpu.memory_space<vmem>>, vector<768x256xbf16>
    %cst_20 = arith.constant dense<0.000000e+00> : vector<8x256xf32>
    %27 = tpu.matmul %25, %26, %cst_20 {dimension_numbers = #tpu.dot_dimension_numbers<[1], [0], [0], [1], [0, 0, 1, 1], [], []>} : vector<8x768xbf16>, vector<768x256xbf16>, vector<8x256xf32> -> vector<8x256xf32>
    %c0_21 = arith.constant 0 : index
    %c0_22 = arith.constant 0 : index
    %28 = vector.load %arg9[%c0_21, %c0_22] : memref<1x256xf32, #tpu.memory_space<vmem>>, vector<1x256xf32>
    %29 = vector.broadcast %28 : vector<1x256xf32> to vector<8x256xf32>
    %30 = arith.addf %27, %29 : vector<8x256xf32>
    %cst_23 = arith.constant 0.000000e+00 : f32
    %31 = vector.broadcast %cst_23 : f32 to vector<8x256xf32>
    %32 = arith.maximumf %30, %31 : vector<8x256xf32>
    %33 = arith.truncf %32 : vector<8x256xf32> to vector<8x256xbf16>
    %c0_24 = arith.constant 0 : index
    %c0_25 = arith.constant 0 : index
    %34 = vector.load %arg10[%c0_24, %c0_25] : memref<256x128xbf16, #tpu.memory_space<vmem>>, vector<256x128xbf16>
    %cst_26 = arith.constant dense<0.000000e+00> : vector<8x128xf32>
    %35 = tpu.matmul %33, %34, %cst_26 {dimension_numbers = #tpu.dot_dimension_numbers<[1], [0], [0], [1], [0, 0, 1, 1], [], []>} : vector<8x256xbf16>, vector<256x128xbf16>, vector<8x128xf32> -> vector<8x128xf32>
    %c0_27 = arith.constant 0 : index
    %c0_28 = arith.constant 0 : index
    %36 = vector.load %arg11[%c0_27, %c0_28] : memref<1x128xf32, #tpu.memory_space<vmem>>, vector<1x128xf32>
    %37 = vector.broadcast %36 : vector<1x128xf32> to vector<8x128xf32>
    %38 = arith.addf %35, %37 : vector<8x128xf32>
    %cst_29 = arith.constant 0.000000e+00 : f32
    %39 = vector.broadcast %cst_29 : f32 to vector<8x128xf32>
    %40 = arith.maximumf %38, %39 : vector<8x128xf32>
    %41 = arith.truncf %40 : vector<8x128xf32> to vector<8x128xbf16>
    %c0_30 = arith.constant 0 : index
    %c0_31 = arith.constant 0 : index
    %42 = vector.load %arg12[%c0_30, %c0_31] : memref<1x128xbf16, #tpu.memory_space<vmem>>, vector<1x128xbf16>
    %cst_32 = arith.constant dense<0.000000e+00> : vector<1x8xf32>
    %43 = tpu.matmul %42, %41, %cst_32 {dimension_numbers = #tpu.dot_dimension_numbers<[1], [1], [0], [0], [0, 0, 1, 0], [], []>} : vector<1x128xbf16>, vector<8x128xbf16>, vector<1x8xf32> -> vector<1x8xf32>
    %c0_33 = arith.constant 0 : index
    %c0_34 = arith.constant 0 : index
    %44 = vector.load %arg13[%c0_33, %c0_34] : memref<1x1xf32, #tpu.memory_space<vmem>>, vector<1x1xf32>
    %45 = vector.broadcast %44 : vector<1x1xf32> to vector<1x8xf32>
    %46 = arith.addf %43, %45 : vector<1x8xf32>
    %cst_35 = arith.constant 0.000000e+00 : f32
    %47 = vector.broadcast %cst_35 : f32 to vector<1x8xf32>
    %48 = arith.maximumf %46, %47 : vector<1x8xf32>
    %49 = vector.shape_cast %48 : vector<1x8xf32> to vector<1x1x8xf32>
    %c0_36 = arith.constant 0 : index
    %c0_37 = arith.constant 0 : index
    %c0_38 = arith.constant 0 : index
    %50 = vector.load %arg14[%c0_36, %c0_37, %c0_38] : memref<1x1x8xf32, #tpu.memory_space<vmem>>, vector<1x1x8xf32>
    tpu.vector_store %arg14[%c0_36, %c0_37, %c0_38], %49 {strides = array<i32>} : memref<1x1x8xf32, #tpu.memory_space<vmem>>, vector<1x1x8xf32>,
    return
  }
  func.func @transform_0(%arg0: i32) -> (i32, i32) {
    %c0_i32 = arith.constant 0 : i32
    %c0_i32_0 = arith.constant 0 : i32
    return %arg0, %c0_i32 : i32, i32
  }
  func.func @transform_1(%arg0: i32) -> (i32, i32) {
    %c0_i32 = arith.constant 0 : i32
    %c0_i32_0 = arith.constant 0 : i32
    %c0_i32_1 = arith.constant 0 : i32
    return %c0_i32, %c0_i32_0 : i32, i32
  }
  func.func @transform_2(%arg0: i32) -> (i32, i32) {
    %c0_i32 = arith.constant 0 : i32
    %c0_i32_0 = arith.constant 0 : i32
    %c0_i32_1 = arith.constant 0 : i32
    return %c0_i32, %c0_i32_0 : i32, i32
  }
  func.func @transform_3(%arg0: i32) -> (i32, i32) {
    %c0_i32 = arith.constant 0 : i32
    %c0_i32_0 = arith.constant 0 : i32
    %c0_i32_1 = arith.constant 0 : i32
    return %c0_i32, %c0_i32_0 : i32, i32
  }
  func.func @transform_4(%arg0: i32) -> (i32, i32) {
    %c0_i32 = arith.constant 0 : i32
    %c0_i32_0 = arith.constant 0 : i32
    %c0_i32_1 = arith.constant 0 : i32
    return %c0_i32, %c0_i32_0 : i32, i32
  }
  func.func @transform_5(%arg0: i32) -> (i32, i32) {
    %c0_i32 = arith.constant 0 : i32
    %c0_i32_0 = arith.constant 0 : i32
    %c0_i32_1 = arith.constant 0 : i32
    return %c0_i32, %c0_i32_0 : i32, i32
  }
  func.func @transform_6(%arg0: i32) -> (i32, i32) {
    %c0_i32 = arith.constant 0 : i32
    %c0_i32_0 = arith.constant 0 : i32
    %c0_i32_1 = arith.constant 0 : i32
    return %c0_i32, %c0_i32_0 : i32, i32
  }
  func.func @transform_7(%arg0: i32) -> (i32, i32) {
    %c0_i32 = arith.constant 0 : i32
    %c0_i32_0 = arith.constant 0 : i32
    %c0_i32_1 = arith.constant 0 : i32
    return %c0_i32, %c0_i32_0 : i32, i32
  }
  func.func @transform_8(%arg0: i32) -> (i32, i32) {
    %c0_i32 = arith.constant 0 : i32
    %c0_i32_0 = arith.constant 0 : i32
    %c0_i32_1 = arith.constant 0 : i32
    return %c0_i32, %c0_i32_0 : i32, i32
  }
  func.func @transform_9(%arg0: i32) -> (i32, i32) {
    %c0_i32 = arith.constant 0 : i32
    %c0_i32_0 = arith.constant 0 : i32
    %c0_i32_1 = arith.constant 0 : i32
    return %c0_i32, %c0_i32_0 : i32, i32
  }
  func.func @transform_10(%arg0: i32) -> (i32, i32) {
    %c0_i32 = arith.constant 0 : i32
    %c0_i32_0 = arith.constant 0 : i32
    %c0_i32_1 = arith.constant 0 : i32
    return %c0_i32, %c0_i32_0 : i32, i32
  }
  func.func @transform_11(%arg0: i32) -> (i32, i32) {
    %c0_i32 = arith.constant 0 : i32
    %c0_i32_0 = arith.constant 0 : i32
    %c0_i32_1 = arith.constant 0 : i32
    return %c0_i32, %c0_i32_0 : i32, i32
  }
  func.func @transform_12(%arg0: i32) -> (i32, i32) {
    %c0_i32 = arith.constant 0 : i32
    %c0_i32_0 = arith.constant 0 : i32
    %c0_i32_1 = arith.constant 0 : i32
    return %c0_i32, %c0_i32_0 : i32, i32
  }
  func.func @transform_13(%arg0: i32) -> (i32, i32, i32) {
    %c0_i32 = arith.constant 0 : i32
    %c0_i32_0 = arith.constant 0 : i32
    %c0_i32_1 = arith.constant 0 : i32
    return %arg0, %c0_i32, %c0_i32_0 : i32, i32, i32
  }
}

</mosaic_0001>

<llo_original>
// kernel: uv_model_forward.1
$region0: #{uv_model_forward.1}
  #allocation0 [shape = 'u32[]', space=smem, size = 0x4, offset = 0x4, fixed_abs, tag = 'smem constant byte address 0x4 - core index']
  #allocation1 [shape = 'u32[144,128]{1,0:T(1,128)}', space=vmem, size = 0x12000, scoped, tag = 'internal scratch']
  #allocation2 [shape = 'f32[1,1]{1,0:T(1,128)S(1)}', space=vmem, size = 0x200, scoped, tag = 'scoped memory for uv_model_forward.1']
  %s0 = inlined_call_operand.hbm [shape: f32[8,180], index: 0, kind: input, shape index: {}]
  %s1 = inlined_call_operand.hbm [shape: bf16[180,384], index: 1, kind: input, shape index: {}]
  %s2 = inlined_call_operand.hbm [shape: f32[1,384], index: 2, kind: input, shape index: {}]
  %s3 = inlined_call_operand.hbm [shape: bf16[384,768], index: 3, kind: input, shape index: {}]
  %s4 = inlined_call_operand.hbm [shape: f32[1,768], index: 4, kind: input, shape index: {}]
  %s5 = inlined_call_operand.hbm [shape: bf16[768,768], index: 5, kind: input, shape index: {}]
  %s6 = inlined_call_operand.hbm [shape: f32[1,768], index: 6, kind: input, shape index: {}]
  %s7 = inlined_call_operand.hbm [shape: bf16[768,256], index: 7, kind: input, shape index: {}]
  %s8 = inlined_call_operand.hbm [shape: f32[1,256], index: 8, kind: input, shape index: {}]
  %s9 = inlined_call_operand.hbm [shape: bf16[256,128], index: 9, kind: input, shape index: {}]
  %s10 = inlined_call_operand.hbm [shape: f32[1,128], index: 10, kind: input, shape index: {}]
  %s11 = inlined_call_operand.hbm [shape: bf16[1,128], index: 11, kind: input, shape index: {}]
  %s12 = inlined_call_operand.<no memory space> [shape: f32[1,1], index: 12, kind: input, shape index: {}]
  %s13 = inlined_call_operand.hbm [shape: f32[1,1,8], index: 13, kind: output, shape index: {}]
  %s14 = sld [smem:[#allocation0]]
  $region110: #{uv_model_forward.1} parent=0
    _
  %s16 = ssub.s32 1, %s14
  %s17 = scalar_select 0, %s16, %s14
  %v18 = vstv %s12
  %19 = vst [vmem:[#allocation2] sm:$0x1] %v18
  $region1: #{uv_model_forward.1} parent=0
    #allocation3 [shape = 'u8[8192]{0}', space=vmem, size = 0x2000, scoped, tag = 'input window, operand 0, single buffered']
    #allocation4 [shape = 's32[1]{0}', space=sflag, size = 0x4, scoped, tag = 'scoped memory for uv_model_forward.1']
    #allocation5 [shape = 's32[1]{0}', space=sflag, size = 0x4, scoped, tag = 'scoped memory for uv_model_forward.1']
    #allocation6 [shape = 'u8[141312]{0}', space=vmem, size = 0x22800, scoped, tag = 'input window, operand 1, single buffered']
    #allocation7 [shape = 's32[1]{0}', space=sflag, size = 0x4, scoped, tag = 'scoped memory for uv_model_forward.1']
    #allocation8 [shape = 'u8[1536]{0}', space=vmem, size = 0x800, scoped, tag = 'input window, operand 2, single buffered']
    #allocation9 [shape = 'u8[589824]{0}', space=vmem, size = 0x90000, scoped, tag = 'input window, operand 3, single buffered']
    #allocation10 [shape = 's32[1]{0}', space=sflag, size = 0x4, scoped, tag = 'scoped memory for uv_model_forward.1']
    #allocation11 [shape = 'u8[3072]{0}', space=vmem, size = 0xc00, scoped, tag = 'input window, operand 4, single buffered']
    #allocation12 [shape = 'u8[1179648]{0}', space=vmem, size = 0x120000, scoped, tag = 'input window, operand 5, single buffered']
    #allocation13 [shape = 's32[1]{0}', space=sflag, size = 0x4, scoped, tag = 'scoped memory for uv_model_forward.1']
    #allocation14 [shape = 'u8[3072]{0}', space=vmem, size = 0xc00, scoped, tag = 'input window, operand 6, single buffered']
    #allocation15 [shape = 'u8[393216]{0}', space=vmem, size = 0x60000, scoped, tag = 'input window, operand 7, single buffered']
    #allocation16 [shape = 's32[1]{0}', space=sflag, size = 0x4, scoped, tag = 'scoped memory for uv_model_forward.1']
    #allocation17 [shape = 'u8[1024]{0}', space=vmem, size = 0x400, scoped, tag = 'input window, operand 8, single buffered']
    #allocation18 [shape = 'u8[65536]{0}', space=vmem, size = 0x10000, scoped, tag = 'input window, operand 9, single buffered']
    #allocation19 [shape = 's32[1]{0}', space=sflag, size = 0x4, scoped, tag = 'scoped memory for uv_model_forward.1']
    #allocation20 [shape = 'u8[512]{0}', space=vmem, size = 0x400, scoped, tag = 'input window, operand 10, single buffered']
    #allocation21 [shape = 'u8[512]{0}', space=vmem, size = 0x400, scoped, tag = 'input window, operand 11, single buffered']
    #allocation22 [shape = 's32[1]{0}', space=sflag, size = 0x4, scoped, tag = 'scoped memory for uv_model_forward.1']
    #allocation23 [shape = 'u8[512]{0}', space=vmem, size = 0x400, scoped, tag = 'output window, operand 0, single buffered']
    %20 = vsyncpa [#allocation4], 0
    %21 = vsyncpa [#allocation7], 0
    %22 = vsyncpa [#allocation10], 0
    %23 = vsyncpa [#allocation13], 0
    %24 = vsyncpa [#allocation16], 0
    %25 = vsyncpa [#allocation19], 0
    %26 = vsyncpa [#allocation22], 0
    %27 = vsyncpa [#allocation5], 0
    // Predicated region
    $region2: #{uv_model_forward.1} parent=1 // pred_check
      _
    $region3: #{uv_model_forward.1} parent=1 // pred_check_branch
      %29 = sbr.rel (0) target = $region5
    $region4: #{uv_model_forward.1} parent=1 // pred_region
      %s31 = ssub.s32 256, 256
      %32 = vsyncadd [#allocation4], %s31
      %s34 = sshll.u32 [#allocation3], 4
      %s35 = int_to_ptr.vmem [resolvable:$true] %s34
      %37 = dma.hbm_to_vmem [thread:$0]  %s0, 256, %s35, [#allocation4]
    $region5: #{uv_model_forward.1} parent=1 // pred_fallthru
      _
    // Predicated region
    $region6: #{uv_model_forward.1} parent=1 // pred_check
      _
    $region7: #{uv_model_forward.1} parent=1 // pred_check_branch
      %39 = sbr.rel (0) target = $region9
    $region8: #{uv_model_forward.1} parent=1 // pred_region
      %s41 = ssub.s32 4416, 4416
      %42 = vsyncadd [#allocation7], %s41
      %s43 = sshll.u32 [#allocation6], 4
      %s44 = int_to_ptr.vmem [resolvable:$true] %s43
      %49 = dma.hbm_to_vmem [thread:$0]  %s1, 4416, %s44, [#allocation7], 192, 192, 12
    $region9: #{uv_model_forward.1} parent=1 // pred_fallthru
      _
    // Predicated region
    $region10: #{uv_model_forward.1} parent=1 // pred_check
      _
    $region11: #{uv_model_forward.1} parent=1 // pred_check_branch
      %51 = sbr.rel (0) target = $region13
    $region12: #{uv_model_forward.1} parent=1 // pred_region
      %s53 = ssub.s32 48, 48
      %54 = vsyncadd [#allocation7], %s53
      %s56 = sshll.u32 [#allocation8], 4
      %s57 = int_to_ptr.vmem [resolvable:$true] %s56
      %59 = dma.hbm_to_vmem [thread:$0]  %s2, 48, %s57, [#allocation7]
    $region13: #{uv_model_forward.1} parent=1 // pred_fallthru
      _
    // Predicated region
    $region14: #{uv_model_forward.1} parent=1 // pred_check
      _
    $region15: #{uv_model_forward.1} parent=1 // pred_check_branch
      %61 = sbr.rel (0) target = $region17
    $region16: #{uv_model_forward.1} parent=1 // pred_region
      %s63 = ssub.s32 18432, 18432
      %64 = vsyncadd [#allocation10], %s63
      %s65 = sshll.u32 [#allocation9], 4
      %s66 = int_to_ptr.vmem [resolvable:$true] %s65
      %71 = dma.hbm_to_vmem [thread:$0]  %s3, 18432, %s66, [#allocation10], 384, 384, 24
    $region17: #{uv_model_forward.1} parent=1 // pred_fallthru
      _
    // Predicated region
    $region18: #{uv_model_forward.1} parent=1 // pred_check
      _
    $region19: #{uv_model_forward.1} parent=1 // pred_check_branch
      %73 = sbr.rel (0) target = $region21
    $region20: #{uv_model_forward.1} parent=1 // pred_region
      %s75 = ssub.s32 96, 96
      %76 = vsyncadd [#allocation10], %s75
      %s78 = sshll.u32 [#allocation11], 4
      %s79 = int_to_ptr.vmem [resolvable:$true] %s78
      %81 = dma.hbm_to_vmem [thread:$0]  %s4, 96, %s79, [#allocation10]
    $region21: #{uv_model_forward.1} parent=1 // pred_fallthru
      _
    // Predicated region
    $region22: #{uv_model_forward.1} parent=1 // pred_check
      _
    $region23: #{uv_model_forward.1} parent=1 // pred_check_branch
      %83 = sbr.rel (0) target = $region25
    $region24: #{uv_model_forward.1} parent=1 // pred_region
      %s85 = ssub.s32 36864, 36864
      %86 = vsyncadd [#allocation13], %s85
      %s87 = sshll.u32 [#allocation12], 4
      %s88 = int_to_ptr.vmem [resolvable:$true] %s87
      %93 = dma.hbm_to_vmem [thread:$0]  %s5, 36864, %s88, [#allocation13], 384, 384, 24
    $region25: #{uv_model_forward.1} parent=1 // pred_fallthru
      _
    // Predicated region
    $region26: #{uv_model_forward.1} parent=1 // pred_check
      _
    $region27: #{uv_model_forward.1} parent=1 // pred_check_branch
      %95 = sbr.rel (0) target = $region29
    $region28: #{uv_model_forward.1} parent=1 // pred_region
      %s97 = ssub.s32 96, 96
      %98 = vsyncadd [#allocation13], %s97
      %s100 = sshll.u32 [#allocation14], 4
      %s101 = int_to_ptr.vmem [resolvable:$true] %s100
      %103 = dma.hbm_to_vmem [thread:$0]  %s6, 96, %s101, [#allocation13]
    $region29: #{uv_model_forward.1} parent=1 // pred_fallthru
      _
    // Predicated region
    $region30: #{uv_model_forward.1} parent=1 // pred_check
      _
    $region31: #{uv_model_forward.1} parent=1 // pred_check_branch
      %105 = sbr.rel (0) target = $region33
    $region32: #{uv_model_forward.1} parent=1 // pred_region
      %s107 = ssub.s32 12288, 12288
      %108 = vsyncadd [#allocation16], %s107
      %s109 = sshll.u32 [#allocation15], 4
      %s110 = int_to_ptr.vmem [resolvable:$true] %s109
      %115 = dma.hbm_to_vmem [thread:$0]  %s7, 12288, %s110, [#allocation16], 128, 128, 8
    $region33: #{uv_model_forward.1} parent=1 // pred_fallthru
      _
    // Predicated region
    $region34: #{uv_model_forward.1} parent=1 // pred_check
      _
    $region35: #{uv_model_forward.1} parent=1 // pred_check_branch
      %117 = sbr.rel (0) target = $region37
    $region36: #{uv_model_forward.1} parent=1 // pred_region
      %s119 = ssub.s32 32, 32
      %120 = vsyncadd [#allocation16], %s119
      %s122 = sshll.u32 [#allocation17], 4
      %s123 = int_to_ptr.vmem [resolvable:$true] %s122
      %125 = dma.hbm_to_vmem [thread:$0]  %s8, 32, %s123, [#allocation16]
    $region37: #{uv_model_forward.1} parent=1 // pred_fallthru
      _
    // Predicated region
    $region38: #{uv_model_forward.1} parent=1 // pred_check
      _
    $region39: #{uv_model_forward.1} parent=1 // pred_check_branch
      %127 = sbr.rel (0) target = $region41
    $region40: #{uv_model_forward.1} parent=1 // pred_region
      %s129 = ssub.s32 2048, 2048
      %130 = vsyncadd [#allocation19], %s129
      %s131 = sshll.u32 [#allocation18], 4
      %s132 = int_to_ptr.vmem [resolvable:$true] %s131
      %137 = dma.hbm_to_vmem [thread:$0]  %s9, 2048, %s132, [#allocation19], 64, 64, 4
    $region41: #{uv_model_forward.1} parent=1 // pred_fallthru
      _
    // Predicated region
    $region42: #{uv_model_forward.1} parent=1 // pred_check
      _
    $region43: #{uv_model_forward.1} parent=1 // pred_check_branch
      %139 = sbr.rel (0) target = $region45
    $region44: #{uv_model_forward.1} parent=1 // pred_region
      %s141 = ssub.s32 16, 16
      %142 = vsyncadd [#allocation19], %s141
      %s144 = sshll.u32 [#allocation20], 4
      %s145 = int_to_ptr.vmem [resolvable:$true] %s144
      %147 = dma.hbm_to_vmem [thread:$0]  %s10, 16, %s145, [#allocation19]
    $region45: #{uv_model_forward.1} parent=1 // pred_fallthru
      _
    // Predicated region
    $region46: #{uv_model_forward.1} parent=1 // pred_check
      _
    $region47: #{uv_model_forward.1} parent=1 // pred_check_branch
      %149 = sbr.rel (0) target = $region49
    $region48: #{uv_model_forward.1} parent=1 // pred_region
      %s151 = ssub.s32 16, 16
      %152 = vsyncadd [#allocation22], %s151
      %s154 = sshll.u32 [#allocation21], 4
      %s155 = int_to_ptr.vmem [resolvable:$true] %s154
      %157 = dma.hbm_to_vmem [thread:$0]  %s11, 16, %s155, [#allocation22]
    $region49: #{uv_model_forward.1} parent=1 // pred_fallthru
      _
    // Predicated region
    $region50: #{uv_model_forward.1} parent=1 // pred_check
      _
    $region51: #{uv_model_forward.1} parent=1 // pred_check_branch
      %159 = sbr.rel (0) target = $region53
    $region52: #{uv_model_forward.1} parent=1 // pred_region
      _
    $region53: #{uv_model_forward.1} parent=1 // pred_fallthru
      _
    // Predicated region
    $region54: #{uv_model_forward.1} parent=1 // pred_check
      _
    $region55: #{uv_model_forward.1} parent=1 // pred_check_branch
      %161 = sbr.rel (0) target = $region57
    $region56: #{uv_model_forward.1} parent=1 // pred_region
      %162 = dma.done [#allocation4], 256
    $region57: #{uv_model_forward.1} parent=1 // pred_fallthru
      _
    // Predicated region
    $region58: #{uv_model_forward.1} parent=1 // pred_check
      _
    $region59: #{uv_model_forward.1} parent=1 // pred_check_branch
      %164 = sbr.rel (0) target = $region61
    $region60: #{uv_model_forward.1} parent=1 // pred_region
      %165 = dma.done [#allocation7], 4416
    $region61: #{uv_model_forward.1} parent=1 // pred_fallthru
      _
    // Predicated region
    $region62: #{uv_model_forward.1} parent=1 // pred_check
      _
    $region63: #{uv_model_forward.1} parent=1 // pred_check_branch
      %167 = sbr.rel (0) target = $region65
    $region64: #{uv_model_forward.1} parent=1 // pred_region
      %168 = dma.done [#allocation7], 48
    $region65: #{uv_model_forward.1} parent=1 // pred_fallthru
      _
    // Predicated region
    $region66: #{uv_model_forward.1} parent=1 // pred_check
      _
    $region67: #{uv_model_forward.1} parent=1 // pred_check_branch
      %170 = sbr.rel (0) target = $region69
    $region68: #{uv_model_forward.1} parent=1 // pred_region
      %171 = dma.done [#allocation10], 18432
    $region69: #{uv_model_forward.1} parent=1 // pred_fallthru
      _
    // Predicated region
    $region70: #{uv_model_forward.1} parent=1 // pred_check
      _
    $region71: #{uv_model_forward.1} parent=1 // pred_check_branch
      %173 = sbr.rel (0) target = $region73
    $region72: #{uv_model_forward.1} parent=1 // pred_region
      %174 = dma.done [#allocation10], 96
    $region73: #{uv_model_forward.1} parent=1 // pred_fallthru
      _
    // Predicated region
    $region74: #{uv_model_forward.1} parent=1 // pred_check
      _
    $region75: #{uv_model_forward.1} parent=1 // pred_check_branch
      %176 = sbr.rel (0) target = $region77
    $region76: #{uv_model_forward.1} parent=1 // pred_region
      %177 = dma.done [#allocation13], 36864
    $region77: #{uv_model_forward.1} parent=1 // pred_fallthru
      _
    // Predicated region
    $region78: #{uv_model_forward.1} parent=1 // pred_check
      _
    $region79: #{uv_model_forward.1} parent=1 // pred_check_branch
      %179 = sbr.rel (0) target = $region81
    $region80: #{uv_model_forward.1} parent=1 // pred_region
      %180 = dma.done [#allocation13], 96
    $region81: #{uv_model_forward.1} parent=1 // pred_fallthru
      _
    // Predicated region
    $region82: #{uv_model_forward.1} parent=1 // pred_check
      _
    $region83: #{uv_model_forward.1} parent=1 // pred_check_branch
      %182 = sbr.rel (0) target = $region85
    $region84: #{uv_model_forward.1} parent=1 // pred_region
      %183 = dma.done [#allocation16], 12288
    $region85: #{uv_model_forward.1} parent=1 // pred_fallthru
      _
    // Predicated region
    $region86: #{uv_model_forward.1} parent=1 // pred_check
      _
    $region87: #{uv_model_forward.1} parent=1 // pred_check_branch
      %185 = sbr.rel (0) target = $region89
    $region88: #{uv_model_forward.1} parent=1 // pred_region
      %186 = dma.done [#allocation16], 32
    $region89: #{uv_model_forward.1} parent=1 // pred_fallthru
      _
    // Predicated region
    $region90: #{uv_model_forward.1} parent=1 // pred_check
      _
    $region91: #{uv_model_forward.1} parent=1 // pred_check_branch
      %188 = sbr.rel (0) target = $region93
    $region92: #{uv_model_forward.1} parent=1 // pred_region
      %189 = dma.done [#allocation19], 2048
    $region93: #{uv_model_forward.1} parent=1 // pred_fallthru
      _
    // Predicated region
    $region94: #{uv_model_forward.1} parent=1 // pred_check
      _
    $region95: #{uv_model_forward.1} parent=1 // pred_check_branch
      %191 = sbr.rel (0) target = $region97
    $region96: #{uv_model_forward.1} parent=1 // pred_region
      %192 = dma.done [#allocation19], 16
    $region97: #{uv_model_forward.1} parent=1 // pred_fallthru
      _
    // Predicated region
    $region98: #{uv_model_forward.1} parent=1 // pred_check
      _
    $region99: #{uv_model_forward.1} parent=1 // pred_check_branch
      %194 = sbr.rel (0) target = $region101
    $region100: #{uv_model_forward.1} parent=1 // pred_region
      %195 = dma.done [#allocation22], 16
    $region101: #{uv_model_forward.1} parent=1 // pred_fallthru
      _
    %v197 = vld [vmem:[#allocation3] sm:$0xff]
    %v198 = vld [vmem:[#allocation3 + $0x8] sm:$0xff]
    %v199 = vpack.c.bf16 %v197, %v197
    %v200 = vpack.c.bf16 %v198, %v198
    %v201 = vld [vmem:[#allocation6] sm:$0xff]
    %v202 = vld [vmem:[#allocation6 + $0x8] sm:$0xf]
    %v203 = vld [vmem:[#allocation6 + $0xc] sm:$0xff]
    %v204 = vld [vmem:[#allocation6 + $0x14] sm:$0xf]
    %v205 = vld [vmem:[#allocation6 + $0x18] sm:$0xff]
    %v206 = vld [vmem:[#allocation6 + $0x20] sm:$0xf]
    %v207 = vld [vmem:[#allocation6 + $0x24] sm:$0xff]
    %v208 = vld [vmem:[#allocation6 + $0x2c] sm:$0xf]
    %v209 = vld [vmem:[#allocation6 + $0x30] sm:$0xff]
    %v210 = vld [vmem:[#allocation6 + $0x38] sm:$0xf]
    %v211 = vld [vmem:[#allocation6 + $0x3c] sm:$0xff]
    %v212 = vld [vmem:[#allocation6 + $0x44] sm:$0xf]
    %v213 = vld [vmem:[#allocation6 + $0x48] sm:$0xff]
    %v214 = vld [vmem:[#allocation6 + $0x50] sm:$0xf]
    %v215 = vld [vmem:[#allocation6 + $0x54] sm:$0xff]
    %v216 = vld [vmem:[#allocation6 + $0x5c] sm:$0xf]
    %v217 = vld [vmem:[#allocation6 + $0x60] sm:$0xff]
    %v218 = vld [vmem:[#allocation6 + $0x68] sm:$0xf]
    %v219 = vld [vmem:[#allocation6 + $0x6c] sm:$0xff]
    %v220 = vld [vmem:[#allocation6 + $0x74] sm:$0xf]
    %v221 = vld [vmem:[#allocation6 + $0x78] sm:$0xff]
    %v222 = vld [vmem:[#allocation6 + $0x80] sm:$0xf]
    %v223 = vld [vmem:[#allocation6 + $0x84] sm:$0xff]
    %v224 = vld [vmem:[#allocation6 + $0x8c] sm:$0xf]
    %v225 = vld [vmem:[#allocation6 + $0x90] sm:$0xff]
    %v226 = vld [vmem:[#allocation6 + $0x98] sm:$0xf]
    %v227 = vld [vmem:[#allocation6 + $0x9c] sm:$0xff]
    %v228 = vld [vmem:[#allocation6 + $0xa4] sm:$0xf]
    %v229 = vld [vmem:[#allocation6 + $0xa8] sm:$0xff]
    %v230 = vld [vmem:[#allocation6 + $0xb0] sm:$0xf]
    %v231 = vld [vmem:[#allocation6 + $0xb4] sm:$0xff]
    %v232 = vld [vmem:[#allocation6 + $0xbc] sm:$0xf]
    %v233 = vld [vmem:[#allocation6 + $0xc0] sm:$0xff]
    %v234 = vld [vmem:[#allocation6 + $0xc8] sm:$0xf]
    %v235 = vld [vmem:[#allocation6 + $0xcc] sm:$0xff]
    %v236 = vld [vmem:[#allocation6 + $0xd4] sm:$0xf]
    %v237 = vld [vmem:[#allocation6 + $0xd8] sm:$0xff]
    %v238 = vld [vmem:[#allocation6 + $0xe0] sm:$0xf]
    %v239 = vld [vmem:[#allocation6 + $0xe4] sm:$0xff]
    %v240 = vld [vmem:[#allocation6 + $0xec] sm:$0xf]
    %v241 = vld [vmem:[#allocation6 + $0xf0] sm:$0xff]
    %v242 = vld [vmem:[#allocation6 + $0xf8] sm:$0xf]
    %v243 = vld [vmem:[#allocation6 + $0xfc] sm:$0xff]
    %v244 = vld [vmem:[#allocation6 + $0x104] sm:$0xf]
    %v245 = vld [vmem:[#allocation6 + $0x108] sm:$0x33]
    %v246 = vld [vmem:[#allocation6 + $0x110] sm:$0x3]
    %v247 = vld [vmem:[#allocation8] sm:$0x7]
    %v249 = vlaneseq
    %v250 = vshrl.u32 %v249, 7
    %v251 = vsub.s32 0, %v250
    %v252 = vrot.slane %v247, %v251
    %v253 = vlaneseq
    %v254 = vshrl.u32 %v253, 7
    %v255 = vsub.s32 1, %v254
    %v256 = vrot.slane %v247, %v255
    %v257 = vlaneseq
    %v258 = vshrl.u32 %v257, 7
    %v259 = vsub.s32 2, %v258
    %v260 = vrot.slane %v247, %v259
    %v310 = vunpack.c.l.b16 %v201
    %v311 = vunpack.c.h.b16 %v201
    %v312 = vunpack.c.l.b16 %v202
    %v313 = vunpack.c.l.b16 %v203
    %v314 = vunpack.c.h.b16 %v203
    %v315 = vunpack.c.l.b16 %v204
    %v316 = vunpack.c.l.b16 %v205
    %v317 = vunpack.c.h.b16 %v205
    %v318 = vunpack.c.l.b16 %v206
    %v319 = vunpack.c.l.b16 %v207
    %v320 = vunpack.c.h.b16 %v207
    %v321 = vunpack.c.l.b16 %v208
    %v322 = vunpack.c.l.b16 %v209
    %v323 = vunpack.c.h.b16 %v209
    %v324 = vunpack.c.l.b16 %v210
    %v325 = vunpack.c.l.b16 %v211
    %v326 = vunpack.c.h.b16 %v211
    %v327 = vunpack.c.l.b16 %v212
    %v328 = vunpack.c.l.b16 %v213
    %v329 = vunpack.c.h.b16 %v213
    %v330 = vunpack.c.l.b16 %v214
    %v331 = vunpack.c.l.b16 %v215
    %v332 = vunpack.c.h.b16 %v215
    %v333 = vunpack.c.l.b16 %v216
    %v334 = vunpack.c.l.b16 %v217
    %v335 = vunpack.c.h.b16 %v217
    %v336 = vunpack.c.l.b16 %v218
    %v337 = vunpack.c.l.b16 %v219
    %v338 = vunpack.c.h.b16 %v219
    %v339 = vunpack.c.l.b16 %v220
    %v340 = vunpack.c.l.b16 %v221
    %v341 = vunpack.c.h.b16 %v221
    %v342 = vunpack.c.l.b16 %v222
    %v343 = vunpack.c.l.b16 %v223
    %v344 = vunpack.c.h.b16 %v223
    %v345 = vunpack.c.l.b16 %v224
    %v346 = vunpack.c.l.b16 %v225
    %v347 = vunpack.c.h.b16 %v225
    %v348 = vunpack.c.l.b16 %v226
    %v349 = vunpack.c.l.b16 %v227
    %v350 = vunpack.c.h.b16 %v227
    %v351 = vunpack.c.l.b16 %v228
    %v352 = vunpack.c.l.b16 %v229
    %v353 = vunpack.c.h.b16 %v229
    %v354 = vunpack.c.l.b16 %v230
    %v355 = vunpack.c.l.b16 %v231
    %v356 = vunpack.c.h.b16 %v231
    %v357 = vunpack.c.l.b16 %v232
    %v358 = vunpack.c.l.b16 %v233
    %v359 = vunpack.c.h.b16 %v233
    %v360 = vunpack.c.l.b16 %v234
    %v361 = vunpack.c.l.b16 %v235
    %v362 = vunpack.c.h.b16 %v235
    %v363 = vunpack.c.l.b16 %v236
    %v364 = vunpack.c.l.b16 %v237
    %v365 = vunpack.c.h.b16 %v237
    %v366 = vunpack.c.l.b16 %v238
    %v367 = vunpack.c.l.b16 %v239
    %v368 = vunpack.c.h.b16 %v239
    %v369 = vunpack.c.l.b16 %v240
    %v370 = vunpack.c.l.b16 %v241
    %v371 = vunpack.c.h.b16 %v241
    %v372 = vunpack.c.l.b16 %v242
    %v373 = vunpack.c.l.b16 %v243
    %v374 = vunpack.c.h.b16 %v243
    %v375 = vunpack.c.l.b16 %v244
    %v376 = vunpack.c.l.b16 %v245
    %v377 = vunpack.c.h.b16 %v245
    %v378 = vunpack.c.l.b16 %v246
    %v379 = vpack.c.b16 %v313, %v310
    %v380 = vpack.c.b16 %v314, %v311
    %v381 = vpack.c.b16 %v315, %v312
    %v382 = vpack.c.b16 %v319, %v316
    %v383 = vpack.c.b16 %v320, %v317
    %v384 = vpack.c.b16 %v321, %v318
    %v385 = vpack.c.b16 %v325, %v322
    %v386 = vpack.c.b16 %v326, %v323
    %v387 = vpack.c.b16 %v327, %v324
    %v388 = vpack.c.b16 %v331, %v328
    %v389 = vpack.c.b16 %v332, %v329
    %v390 = vpack.c.b16 %v333, %v330
    %v391 = vpack.c.b16 %v337, %v334
    %v392 = vpack.c.b16 %v338, %v335
    %v393 = vpack.c.b16 %v339, %v336
    %v394 = vpack.c.b16 %v343, %v340
    %v395 = vpack.c.b16 %v344, %v341
    %v396 = vpack.c.b16 %v345, %v342
    %v397 = vpack.c.b16 %v349, %v346
    %v398 = vpack.c.b16 %v350, %v347
    %v399 = vpack.c.b16 %v351, %v348
    %v400 = vpack.c.b16 %v355, %v352
    %v401 = vpack.c.b16 %v356, %v353
    %v402 = vpack.c.b16 %v357, %v354
    %v403 = vpack.c.b16 %v361, %v358
    %v404 = vpack.c.b16 %v362, %v359
    %v405 = vpack.c.b16 %v363, %v360
    %v406 = vpack.c.b16 %v367, %v364
    %v407 = vpack.c.b16 %v368, %v365
    %v408 = vpack.c.b16 %v369, %v366
    %v409 = vpack.c.b16 %v373, %v370
    %v410 = vpack.c.b16 %v374, %v371
    %v411 = vpack.c.b16 %v375, %v372
    %v412 = vpack.c.b16 %v376, %v376
    %v413 = vpack.c.b16 %v377, %v377
    %v414 = vpack.c.b16 %v378, %v378
    %vm448 = vcmask 424960
    %v450 = vsel %vm448, %v200, 0
    %vm452 = vcmask 1041408
    %v454 = vsel %vm452, %v412, 0
    %v457 = vsel %vm452, %v413, 0
    %v460 = vsel %vm452, %v414, 0
    %462 = vmatprep.subr.bf16.mxu0 %v380
    %463 = vmatpush1.bf16.msra.mxu0 %v379
    %464 = vmatprep.subr.bf16.mxu0 %v383
    %465 = vmatpush1.bf16.msra.mxu0 %v382
    %466 = vmatprep.subr.bf16.mxu0 %v386
    %467 = vmatpush1.bf16.msra.mxu0 %v385
    %468 = vmatprep.subr.bf16.mxu0 %v389
    %469 = vmatpush1.bf16.msra.mxu0 %v388
    %470 = vmatprep.subr.bf16.mxu0 %v392
    %471 = vmatpush1.bf16.msra.mxu0 %v391
    %472 = vmatprep.subr.bf16.mxu0 %v395
    %473 = vmatpush1.bf16.msra.mxu0 %v394
    %474 = vmatprep.subr.bf16.mxu0 %v398
    %475 = vmatpush1.bf16.msra.mxu0 %v397
    %476 = vmatprep.subr.bf16.mxu0 %v401
    %477 = vmatpush1.bf16.msra.mxu0 %v400
    %478 = vmatprep.subr.bf16.mxu0 %v404
    %479 = vmatpush1.bf16.msra.mxu0 %v403
    %480 = vmatprep.subr.bf16.mxu0 %v407
    %481 = vmatpush1.bf16.msra.mxu0 %v406
    %482 = vmatprep.subr.bf16.mxu0 %v410
    %483 = vmatpush1.bf16.msra.mxu0 %v409
    %484 = vmatprep.subr.bf16.mxu0 %v457
    %485 = vmatpush1.bf16.msra.mxu0 %v454
    %486 = vmatprep.subr.bf16.mxu0 0
    %487 = vmatpush1.bf16.msra.mxu0 0
    %488 = vmatprep.subr.bf16.mxu0 0
    %489 = vmatpush1.bf16.msra.mxu0 0
    %490 = vmatprep.subr.bf16.mxu0 0
    %491 = vmatpush1.bf16.msra.mxu0 0
    %492 = vmatprep.subr.bf16.mxu0 0
    %493 = vmatpush1.bf16.msra.mxu0 0
    %494 = vmatprep.mubr.bf16.mxu0 %v450
    %495 = vmatmul.mubr.bf16.gmra.mrb[0].mxu0 %v199
    %v496 = vpop.f32.mrb[0].mxu0
    %v497 = vadd.f32 %v252, %v496
    %v498 = vpop.f32.mrb[0].mxu0
    %v499 = vadd.f32 %v256, %v498
    %v500 = vpop.f32.mrb[0].mxu0
    %v501 = vpop.f32.mrb[0].mxu0
    %502 = vdwg.mxu0
    %503 = vmatprep.subr.bf16.mxu0 0
    %504 = vmatpush1.bf16.msra.mxu0 %v381
    %505 = vmatprep.subr.bf16.mxu0 0
    %506 = vmatpush1.bf16.msra.mxu0 %v384
    %507 = vmatprep.subr.bf16.mxu0 0
    %508 = vmatpush1.bf16.msra.mxu0 %v387
    %509 = vmatprep.subr.bf16.mxu0 0
    %510 = vmatpush1.bf16.msra.mxu0 %v390
    %511 = vmatprep.subr.bf16.mxu0 0
    %512 = vmatpush1.bf16.msra.mxu0 %v393
    %513 = vmatprep.subr.bf16.mxu0 0
    %514 = vmatpush1.bf16.msra.mxu0 %v396
    %515 = vmatprep.subr.bf16.mxu0 0
    %516 = vmatpush1.bf16.msra.mxu0 %v399
    %517 = vmatprep.subr.bf16.mxu0 0
    %518 = vmatpush1.bf16.msra.mxu0 %v402
    %519 = vmatprep.subr.bf16.mxu0 0
    %520 = vmatpush1.bf16.msra.mxu0 %v405
    %521 = vmatprep.subr.bf16.mxu0 0
    %522 = vmatpush1.bf16.msra.mxu0 %v408
    %523 = vmatprep.subr.bf16.mxu0 0
    %524 = vmatpush1.bf16.msra.mxu0 %v411
    %525 = vmatprep.subr.bf16.mxu0 0
    %526 = vmatpush1.bf16.msra.mxu0 %v460
    %527 = vmatprep.subr.bf16.mxu0 0
    %528 = vmatpush1.bf16.msra.mxu0 0
    %529 = vmatprep.subr.bf16.mxu0 0
    %530 = vmatpush1.bf16.msra.mxu0 0
    %531 = vmatprep.subr.bf16.mxu0 0
    %532 = vmatpush1.bf16.msra.mxu0 0
    %533 = vmatprep.subr.bf16.mxu0 0
    %534 = vmatpush1.bf16.msra.mxu0 0
    %535 = vmatprep.mubr.bf16.mxu0 %v450
    %536 = vmatmul.mubr.bf16.gmra.mrb[0].mxu0 %v199
    %v537 = vpop.f32.mrb[0].mxu0
    %v538 = vadd.f32 %v260, %v537
    %v539 = vpop.f32.mrb[0].mxu0
    %v540 = vpop.f32.mrb[0].mxu0
    %v541 = vpop.f32.mrb[0].mxu0
    %542 = vdwg.mxu0
    %v543 = vmax.f32 %v497, 0.0
    %v544 = vmax.f32 %v499, 0.0
    %v545 = vmax.f32 %v538, 0.0
    %v546 = vpack.c.bf16 %v543, %v543
    %v547 = vpack.c.bf16 %v544, %v544
    %v548 = vpack.c.bf16 %v545, %v545
    %v549 = vld [vmem:[#allocation9] sm:$0xff]
    %v550 = vld [vmem:[#allocation9 + $0x8] sm:$0xff]
    %v551 = vld [vmem:[#allocation9 + $0x10] sm:$0xff]
    %v552 = vld [vmem:[#allocation9 + $0x18] sm:$0xff]
    %v553 = vld [vmem:[#allocation9 + $0x20] sm:$0xff]
    %v554 = vld [vmem:[#allocation9 + $0x28] sm:$0xff]
    %v555 = vld [vmem:[#allocation9 + $0x30] sm:$0xff]
    %v556 = vld [vmem:[#allocation9 + $0x38] sm:$0xff]
    %v557 = vld [vmem:[#allocation9 + $0x40] sm:$0xff]
    %v558 = vld [vmem:[#allocation9 + $0x48] sm:$0xff]
    %v559 = vld [vmem:[#allocation9 + $0x50] sm:$0xff]
    %v560 = vld [vmem:[#allocation9 + $0x58] sm:$0xff]
    %v561 = vld [vmem:[#allocation9 + $0x60] sm:$0xff]
    %v562 = vld [vmem:[#allocation9 + $0x68] sm:$0xff]
    %v563 = vld [vmem:[#allocation9 + $0x70] sm:$0xff]
    %v564 = vld [vmem:[#allocation9 + $0x78] sm:$0xff]
    %v565 = vld [vmem:[#allocation9 + $0x80] sm:$0xff]
    %v566 = vld [vmem:[#allocation9 + $0x88] sm:$0xff]
    %v567 = vld [vmem:[#allocation9 + $0x90] sm:$0xff]
    %v568 = vld [vmem:[#allocation9 + $0x98] sm:$0xff]
    %v569 = vld [vmem:[#allocation9 + $0xa0] sm:$0xff]
    %v570 = vld [vmem:[#allocation9 + $0xa8] sm:$0xff]
    %v571 = vld [vmem:[#allocation9 + $0xb0] sm:$0xff]
    %v572 = vld [vmem:[#allocation9 + $0xb8] sm:$0xff]
    %v573 = vld [vmem:[#allocation9 + $0xc0] sm:$0xff]
    %v574 = vld [vmem:[#allocation9 + $0xc8] sm:$0xff]
    %v575 = vld [vmem:[#allocation9 + $0xd0] sm:$0xff]
    %v576 = vld [vmem:[#allocation9 + $0xd8] sm:$0xff]
    %v577 = vld [vmem:[#allocation9 + $0xe0] sm:$0xff]
    %v578 = vld [vmem:[#allocation9 + $0xe8] sm:$0xff]
    %v579 = vld [vmem:[#allocation9 + $0xf0] sm:$0xff]
    %v580 = vld [vmem:[#allocation9 + $0xf8] sm:$0xff]
    %v581 = vld [vmem:[#allocation9 + $0x100] sm:$0xff]
    %v582 = vld [vmem:[#allocation9 + $0x108] sm:$0xff]
    %v583 = vld [vmem:[#allocation9 + $0x110] sm:$0xff]
    %v584 = vld [vmem:[#allocation9 + $0x118] sm:$0xff]
    %v585 = vld [vmem:[#allocation9 + $0x120] sm:$0xff]
    %v586 = vld [vmem:[#allocation9 + $0x128] sm:$0xff]
    %v587 = vld [vmem:[#allocation9 + $0x130] sm:$0xff]
    %v588 = vld [vmem:[#allocation9 + $0x138] sm:$0xff]
    %v589 = vld [vmem:[#allocation9 + $0x140] sm:$0xff]
    %v590 = vld [vmem:[#allocation9 + $0x148] sm:$0xff]
    %v591 = vld [vmem:[#allocation9 + $0x150] sm:$0xff]
    %v592 = vld [vmem:[#allocation9 + $0x158] sm:$0xff]
    %v593 = vld [vmem:[#allocation9 + $0x160] sm:$0xff]
    %v594 = vld [vmem:[#allocation9 + $0x168] sm:$0xff]
    %v595 = vld [vmem:[#allocation9 + $0x170] sm:$0xff]
    %v596 = vld [vmem:[#allocation9 + $0x178] sm:$0xff]
    %v597 = vld [vmem:[#allocation9 + $0x180] sm:$0xff]
    %v598 = vld [vmem:[#allocation9 + $0x188] sm:$0xff]
    %v599 = vld [vmem:[#allocation9 + $0x190] sm:$0xff]
    %v600 = vld [vmem:[#allocation9 + $0x198] sm:$0xff]
    %v601 = vld [vmem:[#allocation9 + $0x1a0] sm:$0xff]
    %v602 = vld [vmem:[#allocation9 + $0x1a8] sm:$0xff]
    %v603 = vld [vmem:[#allocation9 + $0x1b0] sm:$0xff]
    %v604 = vld [vmem:[#allocation9 + $0x1b8] sm:$0xff]
    %v605 = vld [vmem:[#allocation9 + $0x1c0] sm:$0xff]
    %v606 = vld [vmem:[#allocation9 + $0x1c8] sm:$0xff]
    %v607 = vld [vmem:[#allocation9 + $0x1d0] sm:$0xff]
    %v608 = vld [vmem:[#allocation9 + $0x1d8] sm:$0xff]
    %v609 = vld [vmem:[#allocation9 + $0x1e0] sm:$0xff]
    %v610 = vld [vmem:[#allocation9 + $0x1e8] sm:$0xff]
    %v611 = vld [vmem:[#allocation9 + $0x1f0] sm:$0xff]
    %v612 = vld [vmem:[#allocation9 + $0x1f8] sm:$0xff]
    %v613 = vld [vmem:[#allocation9 + $0x200] sm:$0xff]
    %v614 = vld [vmem:[#allocation9 + $0x208] sm:$0xff]
    %v615 = vld [vmem:[#allocation9 + $0x210] sm:$0xff]
    %v616 = vld [vmem:[#allocation9 + $0x218] sm:$0xff]
    %v617 = vld [vmem:[#allocation9 + $0x220] sm:$0xff]
    %v618 = vld [vmem:[#allocation9 + $0x228] sm:$0xff]
    %v619 = vld [vmem:[#allocation9 + $0x230] sm:$0xff]
    %v620 = vld [vmem:[#allocation9 + $0x238] sm:$0xff]
    %v621 = vld [vmem:[#allocation9 + $0x240] sm:$0xff]
    %v622 = vld [vmem:[#allocation9 + $0x248] sm:$0xff]
    %v623 = vld [vmem:[#allocation9 + $0x250] sm:$0xff]
    %v624 = vld [vmem:[#allocation9 + $0x258] sm:$0xff]
    %v625 = vld [vmem:[#allocation9 + $0x260] sm:$0xff]
    %v626 = vld [vmem:[#allocation9 + $0x268] sm:$0xff]
    %v627 = vld [vmem:[#allocation9 + $0x270] sm:$0xff]
    %v628 = vld [vmem:[#allocation9 + $0x278] sm:$0xff]
    %v629 = vld [vmem:[#allocation9 + $0x280] sm:$0xff]
    %v630 = vld [vmem:[#allocation9 + $0x288] sm:$0xff]
    %v631 = vld [vmem:[#allocation9 + $0x290] sm:$0xff]
    %v632 = vld [vmem:[#allocation9 + $0x298] sm:$0xff]
    %v633 = vld [vmem:[#allocation9 + $0x2a0] sm:$0xff]
    %v634 = vld [vmem:[#allocation9 + $0x2a8] sm:$0xff]
    %v635 = vld [vmem:[#allocation9 + $0x2b0] sm:$0xff]
    %v636 = vld [vmem:[#allocation9 + $0x2b8] sm:$0xff]
    %v637 = vld [vmem:[#allocation9 + $0x2c0] sm:$0xff]
    %v638 = vld [vmem:[#allocation9 + $0x2c8] sm:$0xff]
    %v639 = vld [vmem:[#allocation9 + $0x2d0] sm:$0xff]
    %v640 = vld [vmem:[#allocation9 + $0x2d8] sm:$0xff]
    %v641 = vld [vmem:[#allocation9 + $0x2e0] sm:$0xff]
    %v642 = vld [vmem:[#allocation9 + $0x2e8] sm:$0xff]
    %v643 = vld [vmem:[#allocation9 + $0x2f0] sm:$0xff]
    %v644 = vld [vmem:[#allocation9 + $0x2f8] sm:$0xff]
    %v645 = vld [vmem:[#allocation9 + $0x300] sm:$0xff]
    %v646 = vld [vmem:[#allocation9 + $0x308] sm:$0xff]
    %v647 = vld [vmem:[#allocation9 + $0x310] sm:$0xff]
    %v648 = vld [vmem:[#allocation9 + $0x318] sm:$0xff]
    %v649 = vld [vmem:[#allocation9 + $0x320] sm:$0xff]
    %v650 = vld [vmem:[#allocation9 + $0x328] sm:$0xff]
    %v651 = vld [vmem:[#allocation9 + $0x330] sm:$0xff]
    %v652 = vld [vmem:[#allocation9 + $0x338] sm:$0xff]
    %v653 = vld [vmem:[#allocation9 + $0x340] sm:$0xff]
    %v654 = vld [vmem:[#allocation9 + $0x348] sm:$0xff]
    %v655 = vld [vmem:[#allocation9 + $0x350] sm:$0xff]
    %v656 = vld [vmem:[#allocation9 + $0x358] sm:$0xff]
    %v657 = vld [vmem:[#allocation9 + $0x360] sm:$0xff]
    %v658 = vld [vmem:[#allocation9 + $0x368] sm:$0xff]
    %v659 = vld [vmem:[#allocation9 + $0x370] sm:$0xff]
    %v660 = vld [vmem:[#allocation9 + $0x378] sm:$0xff]
    %v661 = vld [vmem:[#allocation9 + $0x380] sm:$0xff]
    %v662 = vld [vmem:[#allocation9 + $0x388] sm:$0xff]
    %v663 = vld [vmem:[#allocation9 + $0x390] sm:$0xff]
    %v664 = vld [vmem:[#allocation9 + $0x398] sm:$0xff]
    %v665 = vld [vmem:[#allocation9 + $0x3a0] sm:$0xff]
    %v666 = vld [vmem:[#allocation9 + $0x3a8] sm:$0xff]
    %v667 = vld [vmem:[#allocation9 + $0x3b0] sm:$0xff]
    %v668 = vld [vmem:[#allocation9 + $0x3b8] sm:$0xff]
    %v669 = vld [vmem:[#allocation9 + $0x3c0] sm:$0xff]
    %v670 = vld [vmem:[#allocation9 + $0x3c8] sm:$0xff]
    %v671 = vld [vmem:[#allocation9 + $0x3d0] sm:$0xff]
    %v672 = vld [vmem:[#allocation9 + $0x3d8] sm:$0xff]
    %v673 = vld [vmem:[#allocation9 + $0x3e0] sm:$0xff]
    %v674 = vld [vmem:[#allocation9 + $0x3e8] sm:$0xff]
    %v675 = vld [vmem:[#allocation9 + $0x3f0] sm:$0xff]
    %v676 = vld [vmem:[#allocation9 + $0x3f8] sm:$0xff]
    %v677 = vld [vmem:[#allocation9 + $0x400] sm:$0xff]
    %v678 = vld [vmem:[#allocation9 + $0x408] sm:$0xff]
    %v679 = vld [vmem:[#allocation9 + $0x410] sm:$0xff]
    %v680 = vld [vmem:[#allocation9 + $0x418] sm:$0xff]
    %v681 = vld [vmem:[#allocation9 + $0x420] sm:$0xff]
    %v682 = vld [vmem:[#allocation9 + $0x428] sm:$0xff]
    %v683 = vld [vmem:[#allocation9 + $0x430] sm:$0xff]
    %v684 = vld [vmem:[#allocation9 + $0x438] sm:$0xff]
    %v685 = vld [vmem:[#allocation9 + $0x440] sm:$0xff]
    %v686 = vld [vmem:[#allocation9 + $0x448] sm:$0xff]
    %v687 = vld [vmem:[#allocation9 + $0x450] sm:$0xff]
    %v688 = vld [vmem:[#allocation9 + $0x458] sm:$0xff]
    %v689 = vld [vmem:[#allocation9 + $0x460] sm:$0xff]
    %v690 = vld [vmem:[#allocation9 + $0x468] sm:$0xff]
    %v691 = vld [vmem:[#allocation9 + $0x470] sm:$0xff]
    %v692 = vld [vmem:[#allocation9 + $0x478] sm:$0xff]
    %v693 = vld [vmem:[#allocation11] sm:$0x3f]
    %v695 = vlaneseq
    %v696 = vshrl.u32 %v695, 7
    %v697 = vsub.s32 0, %v696
    %v698 = vrot.slane %v693, %v697
    %v699 = vlaneseq
    %v700 = vshrl.u32 %v699, 7
    %v701 = vsub.s32 1, %v700
    %v702 = vrot.slane %v693, %v701
    %v703 = vlaneseq
    %v704 = vshrl.u32 %v703, 7
    %v705 = vsub.s32 2, %v704
    %v706 = vrot.slane %v693, %v705
    %v707 = vlaneseq
    %v708 = vshrl.u32 %v707, 7
    %v709 = vsub.s32 3, %v708
    %v710 = vrot.slane %v693, %v709
    %v711 = vlaneseq
    %v712 = vshrl.u32 %v711, 7
    %v713 = vsub.s32 4, %v712
    %v714 = vrot.slane %v693, %v713
    %v715 = vlaneseq
    %v716 = vshrl.u32 %v715, 7
    %v717 = vsub.s32 5, %v716
    %v718 = vrot.slane %v693, %v717
    %v869 = vunpack.c.l.b16 %v549
    %v870 = vunpack.c.h.b16 %v549
    %v871 = vunpack.c.l.b16 %v550
    %v872 = vunpack.c.h.b16 %v550
    %v873 = vunpack.c.l.b16 %v551
    %v874 = vunpack.c.h.b16 %v551
    %v875 = vunpack.c.l.b16 %v552
    %v876 = vunpack.c.h.b16 %v552
    %v877 = vunpack.c.l.b16 %v553
    %v878 = vunpack.c.h.b16 %v553
    %v879 = vunpack.c.l.b16 %v554
    %v880 = vunpack.c.h.b16 %v554
    %v881 = vunpack.c.l.b16 %v555
    %v882 = vunpack.c.h.b16 %v555
    %v883 = vunpack.c.l.b16 %v556
    %v884 = vunpack.c.h.b16 %v556
    %v885 = vunpack.c.l.b16 %v557
    %v886 = vunpack.c.h.b16 %v557
    %v887 = vunpack.c.l.b16 %v558
    %v888 = vunpack.c.h.b16 %v558
    %v889 = vunpack.c.l.b16 %v559
    %v890 = vunpack.c.h.b16 %v559
    %v891 = vunpack.c.l.b16 %v560
    %v892 = vunpack.c.h.b16 %v560
    %v893 = vunpack.c.l.b16 %v561
    %v894 = vunpack.c.h.b16 %v561
    %v895 = vunpack.c.l.b16 %v562
    %v896 = vunpack.c.h.b16 %v562
    %v897 = vunpack.c.l.b16 %v563
    %v898 = vunpack.c.h.b16 %v563
    %v899 = vunpack.c.l.b16 %v564
    %v900 = vunpack.c.h.b16 %v564
    %v901 = vunpack.c.l.b16 %v565
    %v902 = vunpack.c.h.b16 %v565
    %v903 = vunpack.c.l.b16 %v566
    %v904 = vunpack.c.h.b16 %v566
    %v905 = vunpack.c.l.b16 %v567
    %v906 = vunpack.c.h.b16 %v567
    %v907 = vunpack.c.l.b16 %v568
    %v908 = vunpack.c.h.b16 %v568
    %v909 = vunpack.c.l.b16 %v569
    %v910 = vunpack.c.h.b16 %v569
    %v911 = vunpack.c.l.b16 %v570
    %v912 = vunpack.c.h.b16 %v570
    %v913 = vunpack.c.l.b16 %v571
    %v914 = vunpack.c.h.b16 %v571
    %v915 = vunpack.c.l.b16 %v572
    %v916 = vunpack.c.h.b16 %v572
    %v917 = vunpack.c.l.b16 %v573
    %v918 = vunpack.c.h.b16 %v573
    %v919 = vunpack.c.l.b16 %v574
    %v920 = vunpack.c.h.b16 %v574
    %v921 = vunpack.c.l.b16 %v575
    %v922 = vunpack.c.h.b16 %v575
    %v923 = vunpack.c.l.b16 %v576
    %v924 = vunpack.c.h.b16 %v576
    %v925 = vunpack.c.l.b16 %v577
    %v926 = vunpack.c.h.b16 %v577
    %v927 = vunpack.c.l.b16 %v578
    %v928 = vunpack.c.h.b16 %v578
    %v929 = vunpack.c.l.b16 %v579
    %v930 = vunpack.c.h.b16 %v579
    %v931 = vunpack.c.l.b16 %v580
    %v932 = vunpack.c.h.b16 %v580
    %v933 = vunpack.c.l.b16 %v581
    %v934 = vunpack.c.h.b16 %v581
    %v935 = vunpack.c.l.b16 %v582
    %v936 = vunpack.c.h.b16 %v582
    %v937 = vunpack.c.l.b16 %v583
    %v938 = vunpack.c.h.b16 %v583
    %v939 = vunpack.c.l.b16 %v584
    %v940 = vunpack.c.h.b16 %v584
    %v941 = vunpack.c.l.b16 %v585
    %v942 = vunpack.c.h.b16 %v585
    %v943 = vunpack.c.l.b16 %v586
    %v944 = vunpack.c.h.b16 %v586
    %v945 = vunpack.c.l.b16 %v587
    %v946 = vunpack.c.h.b16 %v587
    %v947 = vunpack.c.l.b16 %v588
    %v948 = vunpack.c.h.b16 %v588
    %v949 = vunpack.c.l.b16 %v589
    %v950 = vunpack.c.h.b16 %v589
    %v951 = vunpack.c.l.b16 %v590
    %v952 = vunpack.c.h.b16 %v590
    %v953 = vunpack.c.l.b16 %v591
    %v954 = vunpack.c.h.b16 %v591
    %v955 = vunpack.c.l.b16 %v592
    %v956 = vunpack.c.h.b16 %v592
    %v957 = vunpack.c.l.b16 %v593
    %v958 = vunpack.c.h.b16 %v593
    %v959 = vunpack.c.l.b16 %v594
    %v960 = vunpack.c.h.b16 %v594
    %v961 = vunpack.c.l.b16 %v595
    %v962 = vunpack.c.h.b16 %v595
    %v963 = vunpack.c.l.b16 %v596
    %v964 = vunpack.c.h.b16 %v596
    %v965 = vunpack.c.l.b16 %v597
    %v966 = vunpack.c.h.b16 %v597
    %v967 = vunpack.c.l.b16 %v598
    %v968 = vunpack.c.h.b16 %v598
    %v969 = vunpack.c.l.b16 %v599
    %v970 = vunpack.c.h.b16 %v599
    %v971 = vunpack.c.l.b16 %v600
    %v972 = vunpack.c.h.b16 %v600
    %v973 = vunpack.c.l.b16 %v601
    %v974 = vunpack.c.h.b16 %v601
    %v975 = vunpack.c.l.b16 %v602
    %v976 = vunpack.c.h.b16 %v602
    %v977 = vunpack.c.l.b16 %v603
    %v978 = vunpack.c.h.b16 %v603
    %v979 = vunpack.c.l.b16 %v604
    %v980 = vunpack.c.h.b16 %v604
    %v981 = vunpack.c.l.b16 %v605
    %v982 = vunpack.c.h.b16 %v605
    %v983 = vunpack.c.l.b16 %v606
    %v984 = vunpack.c.h.b16 %v606
    %v985 = vunpack.c.l.b16 %v607
    %v986 = vunpack.c.h.b16 %v607
    %v987 = vunpack.c.l.b16 %v608
    %v988 = vunpack.c.h.b16 %v608
    %v989 = vunpack.c.l.b16 %v609
    %v990 = vunpack.c.h.b16 %v609
    %v991 = vunpack.c.l.b16 %v610
    %v992 = vunpack.c.h.b16 %v610
    %v993 = vunpack.c.l.b16 %v611
    %v994 = vunpack.c.h.b16 %v611
    %v995 = vunpack.c.l.b16 %v612
    %v996 = vunpack.c.h.b16 %v612
    %v997 = vunpack.c.l.b16 %v613
    %v998 = vunpack.c.h.b16 %v613
    %v999 = vunpack.c.l.b16 %v614
    %v1000 = vunpack.c.h.b16 %v614
    %v1001 = vunpack.c.l.b16 %v615
    %v1002 = vunpack.c.h.b16 %v615
    %v1003 = vunpack.c.l.b16 %v616
    %v1004 = vunpack.c.h.b16 %v616
    %v1005 = vunpack.c.l.b16 %v617
    %v1006 = vunpack.c.h.b16 %v617
    %v1007 = vunpack.c.l.b16 %v618
    %v1008 = vunpack.c.h.b16 %v618
    %v1009 = vunpack.c.l.b16 %v619
    %v1010 = vunpack.c.h.b16 %v619
    %v1011 = vunpack.c.l.b16 %v620
    %v1012 = vunpack.c.h.b16 %v620
    %v1013 = vunpack.c.l.b16 %v621
    %v1014 = vunpack.c.h.b16 %v621
    %v1015 = vunpack.c.l.b16 %v622
    %v1016 = vunpack.c.h.b16 %v622
    %v1017 = vunpack.c.l.b16 %v623
    %v1018 = vunpack.c.h.b16 %v623
    %v1019 = vunpack.c.l.b16 %v624
    %v1020 = vunpack.c.h.b16 %v624
    %v1021 = vunpack.c.l.b16 %v625
    %v1022 = vunpack.c.h.b16 %v625
    %v1023 = vunpack.c.l.b16 %v626
    %v1024 = vunpack.c.h.b16 %v626
    %v1025 = vunpack.c.l.b16 %v627
    %v1026 = vunpack.c.h.b16 %v627
    %v1027 = vunpack.c.l.b16 %v628
    %v1028 = vunpack.c.h.b16 %v628
    %v1029 = vunpack.c.l.b16 %v629
    %v1030 = vunpack.c.h.b16 %v629
    %v1031 = vunpack.c.l.b16 %v630
    %v1032 = vunpack.c.h.b16 %v630
    %v1033 = vunpack.c.l.b16 %v631
    %v1034 = vunpack.c.h.b16 %v631
    %v1035 = vunpack.c.l.b16 %v632
    %v1036 = vunpack.c.h.b16 %v632
    %v1037 = vunpack.c.l.b16 %v633
    %v1038 = vunpack.c.h.b16 %v633
    %v1039 = vunpack.c.l.b16 %v634
    %v1040 = vunpack.c.h.b16 %v634
    %v1041 = vunpack.c.l.b16 %v635
    %v1042 = vunpack.c.h.b16 %v635
    %v1043 = vunpack.c.l.b16 %v636
    %v1044 = vunpack.c.h.b16 %v636
    %v1045 = vunpack.c.l.b16 %v637
    %v1046 = vunpack.c.h.b16 %v637
    %v1047 = vunpack.c.l.b16 %v638
    %v1048 = vunpack.c.h.b16 %v638
    %v1049 = vunpack.c.l.b16 %v639
    %v1050 = vunpack.c.h.b16 %v639
    %v1051 = vunpack.c.l.b16 %v640
    %v1052 = vunpack.c.h.b16 %v640
    %v1053 = vunpack.c.l.b16 %v641
    %v1054 = vunpack.c.h.b16 %v641
    %v1055 = vunpack.c.l.b16 %v642
    %v1056 = vunpack.c.h.b16 %v642
    %v1057 = vunpack.c.l.b16 %v643
    %v1058 = vunpack.c.h.b16 %v643
    %v1059 = vunpack.c.l.b16 %v644
    %v1060 = vunpack.c.h.b16 %v644
    %v1061 = vunpack.c.l.b16 %v645
    %v1062 = vunpack.c.h.b16 %v645
    %v1063 = vunpack.c.l.b16 %v646
    %v1064 = vunpack.c.h.b16 %v646
    %v1065 = vunpack.c.l.b16 %v647
    %v1066 = vunpack.c.h.b16 %v647
    %v1067 = vunpack.c.l.b16 %v648
    %v1068 = vunpack.c.h.b16 %v648
    %v1069 = vunpack.c.l.b16 %v649
    %v1070 = vunpack.c.h.b16 %v649
    %v1071 = vunpack.c.l.b16 %v650
    %v1072 = vunpack.c.h.b16 %v650
    %v1073 = vunpack.c.l.b16 %v651
    %v1074 = vunpack.c.h.b16 %v651
    %v1075 = vunpack.c.l.b16 %v652
    %v1076 = vunpack.c.h.b16 %v652
    %v1077 = vunpack.c.l.b16 %v653
    %v1078 = vunpack.c.h.b16 %v653
    %v1079 = vunpack.c.l.b16 %v654
    %v1080 = vunpack.c.h.b16 %v654
    %v1081 = vunpack.c.l.b16 %v655
    %v1082 = vunpack.c.h.b16 %v655
    %v1083 = vunpack.c.l.b16 %v656
    %v1084 = vunpack.c.h.b16 %v656
    %v1085 = vunpack.c.l.b16 %v657
    %v1086 = vunpack.c.h.b16 %v657
    %v1087 = vunpack.c.l.b16 %v658
    %v1088 = vunpack.c.h.b16 %v658
    %v1089 = vunpack.c.l.b16 %v659
    %v1090 = vunpack.c.h.b16 %v659
    %v1091 = vunpack.c.l.b16 %v660
    %v1092 = vunpack.c.h.b16 %v660
    %v1093 = vunpack.c.l.b16 %v661
    %v1094 = vunpack.c.h.b16 %v661
    %v1095 = vunpack.c.l.b16 %v662
    %v1096 = vunpack.c.h.b16 %v662
    %v1097 = vunpack.c.l.b16 %v663
    %v1098 = vunpack.c.h.b16 %v663
    %v1099 = vunpack.c.l.b16 %v664
    %v1100 = vunpack.c.h.b16 %v664
    %v1101 = vunpack.c.l.b16 %v665
    %v1102 = vunpack.c.h.b16 %v665
    %v1103 = vunpack.c.l.b16 %v666
    %v1104 = vunpack.c.h.b16 %v666
    %v1105 = vunpack.c.l.b16 %v667
    %v1106 = vunpack.c.h.b16 %v667
    %v1107 = vunpack.c.l.b16 %v668
    %v1108 = vunpack.c.h.b16 %v668
    %v1109 = vunpack.c.l.b16 %v669
    %v1110 = vunpack.c.h.b16 %v669
    %v1111 = vunpack.c.l.b16 %v670
    %v1112 = vunpack.c.h.b16 %v670
    %v1113 = vunpack.c.l.b16 %v671
    %v1114 = vunpack.c.h.b16 %v671
    %v1115 = vunpack.c.l.b16 %v672
    %v1116 = vunpack.c.h.b16 %v672
    %v1117 = vunpack.c.l.b16 %v673
    %v1118 = vunpack.c.h.b16 %v673
    %v1119 = vunpack.c.l.b16 %v674
    %v1120 = vunpack.c.h.b16 %v674
    %v1121 = vunpack.c.l.b16 %v675
    %v1122 = vunpack.c.h.b16 %v675
    %v1123 = vunpack.c.l.b16 %v676
    %v1124 = vunpack.c.h.b16 %v676
    %v1125 = vunpack.c.l.b16 %v677
    %v1126 = vunpack.c.h.b16 %v677
    %v1127 = vunpack.c.l.b16 %v678
    %v1128 = vunpack.c.h.b16 %v678
    %v1129 = vunpack.c.l.b16 %v679
    %v1130 = vunpack.c.h.b16 %v679
    %v1131 = vunpack.c.l.b16 %v680
    %v1132 = vunpack.c.h.b16 %v680
    %v1133 = vunpack.c.l.b16 %v681
    %v1134 = vunpack.c.h.b16 %v681
    %v1135 = vunpack.c.l.b16 %v682
    %v1136 = vunpack.c.h.b16 %v682
    %v1137 = vunpack.c.l.b16 %v683
    %v1138 = vunpack.c.h.b16 %v683
    %v1139 = vunpack.c.l.b16 %v684
    %v1140 = vunpack.c.h.b16 %v684
    %v1141 = vunpack.c.l.b16 %v685
    %v1142 = vunpack.c.h.b16 %v685
    %v1143 = vunpack.c.l.b16 %v686
    %v1144 = vunpack.c.h.b16 %v686
    %v1145 = vunpack.c.l.b16 %v687
    %v1146 = vunpack.c.h.b16 %v687
    %v1147 = vunpack.c.l.b16 %v688
    %v1148 = vunpack.c.h.b16 %v688
    %v1149 = vunpack.c.l.b16 %v689
    %v1150 = vunpack.c.h.b16 %v689
    %v1151 = vunpack.c.l.b16 %v690
    %v1152 = vunpack.c.h.b16 %v690
    %v1153 = vunpack.c.l.b16 %v691
    %v1154 = vunpack.c.h.b16 %v691
    %v1155 = vunpack.c.l.b16 %v692
    %v1156 = vunpack.c.h.b16 %v692
    %v1157 = vpack.c.b16 %v875, %v869
    %v1158 = vpack.c.b16 %v876, %v870
    %v1159 = vpack.c.b16 %v877, %v871
    %v1160 = vpack.c.b16 %v878, %v872
    %v1161 = vpack.c.b16 %v879, %v873
    %v1162 = vpack.c.b16 %v880, %v874
    %v1163 = vpack.c.b16 %v887, %v881
    %v1164 = vpack.c.b16 %v888, %v882
    %v1165 = vpack.c.b16 %v889, %v883
    %v1166 = vpack.c.b16 %v890, %v884
    %v1167 = vpack.c.b16 %v891, %v885
    %v1168 = vpack.c.b16 %v892, %v886
    %v1169 = vpack.c.b16 %v899, %v893
    %v1170 = vpack.c.b16 %v900, %v894
    %v1171 = vpack.c.b16 %v901, %v895
    %v1172 = vpack.c.b16 %v902, %v896
    %v1173 = vpack.c.b16 %v903, %v897
    %v1174 = vpack.c.b16 %v904, %v898
    %v1175 = vpack.c.b16 %v911, %v905
    %v1176 = vpack.c.b16 %v912, %v906
    %v1177 = vpack.c.b16 %v913, %v907
    %v1178 = vpack.c.b16 %v914, %v908
    %v1179 = vpack.c.b16 %v915, %v909
    %v1180 = vpack.c.b16 %v916, %v910
    %v1181 = vpack.c.b16 %v923, %v917
    %v1182 = vpack.c.b16 %v924, %v918
    %v1183 = vpack.c.b16 %v925, %v919
    %v1184 = vpack.c.b16 %v926, %v920
    %v1185 = vpack.c.b16 %v927, %v921
    %v1186 = vpack.c.b16 %v928, %v922
    %v1187 = vpack.c.b16 %v935, %v929
    %v1188 = vpack.c.b16 %v936, %v930
    %v1189 = vpack.c.b16 %v937, %v931
    %v1190 = vpack.c.b16 %v938, %v932
    %v1191 = vpack.c.b16 %v939, %v933
    %v1192 = vpack.c.b16 %v940, %v934
    %v1193 = vpack.c.b16 %v947, %v941
    %v1194 = vpack.c.b16 %v948, %v942
    %v1195 = vpack.c.b16 %v949, %v943
    %v1196 = vpack.c.b16 %v950, %v944
    %v1197 = vpack.c.b16 %v951, %v945
    %v1198 = vpack.c.b16 %v952, %v946
    %v1199 = vpack.c.b16 %v959, %v953
    %v1200 = vpack.c.b16 %v960, %v954
    %v1201 = vpack.c.b16 %v961, %v955
    %v1202 = vpack.c.b16 %v962, %v956
    %v1203 = vpack.c.b16 %v963, %v957
    %v1204 = vpack.c.b16 %v964, %v958
    %v1205 = vpack.c.b16 %v971, %v965
    %v1206 = vpack.c.b16 %v972, %v966
    %v1207 = vpack.c.b16 %v973, %v967
    %v1208 = vpack.c.b16 %v974, %v968
    %v1209 = vpack.c.b16 %v975, %v969
    %v1210 = vpack.c.b16 %v976, %v970
    %v1211 = vpack.c.b16 %v983, %v977
    %v1212 = vpack.c.b16 %v984, %v978
    %v1213 = vpack.c.b16 %v985, %v979
    %v1214 = vpack.c.b16 %v986, %v980
    %v1215 = vpack.c.b16 %v987, %v981
    %v1216 = vpack.c.b16 %v988, %v982
    %v1217 = vpack.c.b16 %v995, %v989
    %v1218 = vpack.c.b16 %v996, %v990
    %v1219 = vpack.c.b16 %v997, %v991
    %v1220 = vpack.c.b16 %v998, %v992
    %v1221 = vpack.c.b16 %v999, %v993
    %v1222 = vpack.c.b16 %v1000, %v994
    %v1223 = vpack.c.b16 %v1007, %v1001
    %v1224 = vpack.c.b16 %v1008, %v1002
    %v1225 = vpack.c.b16 %v1009, %v1003
    %v1226 = vpack.c.b16 %v1010, %v1004
    %v1227 = vpack.c.b16 %v1011, %v1005
    %v1228 = vpack.c.b16 %v1012, %v1006
    %v1229 = vpack.c.b16 %v1019, %v1013
    %v1230 = vpack.c.b16 %v1020, %v1014
    %v1231 = vpack.c.b16 %v1021, %v1015
    %v1232 = vpack.c.b16 %v1022, %v1016
    %v1233 = vpack.c.b16 %v1023, %v1017
    %v1234 = vpack.c.b16 %v1024, %v1018
    %v1235 = vpack.c.b16 %v1031, %v1025
    %v1236 = vpack.c.b16 %v1032, %v1026
    %v1237 = vpack.c.b16 %v1033, %v1027
    %v1238 = vpack.c.b16 %v1034, %v1028
    %v1239 = vpack.c.b16 %v1035, %v1029
    %v1240 = vpack.c.b16 %v1036, %v1030
    %v1241 = vpack.c.b16 %v1043, %v1037
    %v1242 = vpack.c.b16 %v1044, %v1038
    %v1243 = vpack.c.b16 %v1045, %v1039
    %v1244 = vpack.c.b16 %v1046, %v1040
    %v1245 = vpack.c.b16 %v1047, %v1041
    %v1246 = vpack.c.b16 %v1048, %v1042
    %v1247 = vpack.c.b16 %v1055, %v1049
    %v1248 = vpack.c.b16 %v1056, %v1050
    %v1249 = vpack.c.b16 %v1057, %v1051
    %v1250 = vpack.c.b16 %v1058, %v1052
    %v1251 = vpack.c.b16 %v1059, %v1053
    %v1252 = vpack.c.b16 %v1060, %v1054
    %v1253 = vpack.c.b16 %v1067, %v1061
    %v1254 = vpack.c.b16 %v1068, %v1062
    %v1255 = vpack.c.b16 %v1069, %v1063
    %v1256 = vpack.c.b16 %v1070, %v1064
    %v1257 = vpack.c.b16 %v1071, %v1065
    %v1258 = vpack.c.b16 %v1072, %v1066
    %v1259 = vpack.c.b16 %v1079, %v1073
    %v1260 = vpack.c.b16 %v1080, %v1074
    %v1261 = vpack.c.b16 %v1081, %v1075
    %v1262 = vpack.c.b16 %v1082, %v1076
    %v1263 = vpack.c.b16 %v1083, %v1077
    %v1264 = vpack.c.b16 %v1084, %v1078
    %v1265 = vpack.c.b16 %v1091, %v1085
    %v1266 = vpack.c.b16 %v1092, %v1086
    %v1267 = vpack.c.b16 %v1093, %v1087
    %v1268 = vpack.c.b16 %v1094, %v1088
    %v1269 = vpack.c.b16 %v1095, %v1089
    %v1270 = vpack.c.b16 %v1096, %v1090
    %v1271 = vpack.c.b16 %v1103, %v1097
    %v1272 = vpack.c.b16 %v1104, %v1098
    %v1273 = vpack.c.b16 %v1105, %v1099
    %v1274 = vpack.c.b16 %v1106, %v1100
    %v1275 = vpack.c.b16 %v1107, %v1101
    %v1276 = vpack.c.b16 %v1108, %v1102
    %v1277 = vpack.c.b16 %v1115, %v1109
    %v1278 = vpack.c.b16 %v1116, %v1110
    %v1279 = vpack.c.b16 %v1117, %v1111
    %v1280 = vpack.c.b16 %v1118, %v1112
    %v1281 = vpack.c.b16 %v1119, %v1113
    %v1282 = vpack.c.b16 %v1120, %v1114
    %v1283 = vpack.c.b16 %v1127, %v1121
    %v1284 = vpack.c.b16 %v1128, %v1122
    %v1285 = vpack.c.b16 %v1129, %v1123
    %v1286 = vpack.c.b16 %v1130, %v1124
    %v1287 = vpack.c.b16 %v1131, %v1125
    %v1288 = vpack.c.b16 %v1132, %v1126
    %v1289 = vpack.c.b16 %v1139, %v1133
    %v1290 = vpack.c.b16 %v1140, %v1134
    %v1291 = vpack.c.b16 %v1141, %v1135
    %v1292 = vpack.c.b16 %v1142, %v1136
    %v1293 = vpack.c.b16 %v1143, %v1137
    %v1294 = vpack.c.b16 %v1144, %v1138
    %v1295 = vpack.c.b16 %v1151, %v1145
    %v1296 = vpack.c.b16 %v1152, %v1146
    %v1297 = vpack.c.b16 %v1153, %v1147
    %v1298 = vpack.c.b16 %v1154, %v1148
    %v1299 = vpack.c.b16 %v1155, %v1149
    %v1300 = vpack.c.b16 %v1156, %v1150
    %1445 = vmatprep.subr.bf16.mxu0 %v1158
    %1446 = vmatpush1.bf16.msra.mxu0 %v1157
    %1447 = vmatprep.subr.bf16.mxu0 %v1164
    %1448 = vmatpush1.bf16.msra.mxu0 %v1163
    %1449 = vmatprep.subr.bf16.mxu0 %v1170
    %1450 = vmatpush1.bf16.msra.mxu0 %v1169
    %1451 = vmatprep.subr.bf16.mxu0 %v1176
    %1452 = vmatpush1.bf16.msra.mxu0 %v1175
    %1453 = vmatprep.subr.bf16.mxu0 %v1182
    %1454 = vmatpush1.bf16.msra.mxu0 %v1181
    %1455 = vmatprep.subr.bf16.mxu0 %v1188
    %1456 = vmatpush1.bf16.msra.mxu0 %v1187
    %1457 = vmatprep.subr.bf16.mxu0 %v1194
    %1458 = vmatpush1.bf16.msra.mxu0 %v1193
    %1459 = vmatprep.subr.bf16.mxu0 %v1200
    %1460 = vmatpush1.bf16.msra.mxu0 %v1199
    %1461 = vmatprep.subr.bf16.mxu0 %v1206
    %1462 = vmatpush1.bf16.msra.mxu0 %v1205
    %1463 = vmatprep.subr.bf16.mxu0 %v1212
    %1464 = vmatpush1.bf16.msra.mxu0 %v1211
    %1465 = vmatprep.subr.bf16.mxu0 %v1218
    %1466 = vmatpush1.bf16.msra.mxu0 %v1217
    %1467 = vmatprep.subr.bf16.mxu0 %v1224
    %1468 = vmatpush1.bf16.msra.mxu0 %v1223
    %1469 = vmatprep.subr.bf16.mxu0 %v1230
    %1470 = vmatpush1.bf16.msra.mxu0 %v1229
    %1471 = vmatprep.subr.bf16.mxu0 %v1236
    %1472 = vmatpush1.bf16.msra.mxu0 %v1235
    %1473 = vmatprep.subr.bf16.mxu0 %v1242
    %1474 = vmatpush1.bf16.msra.mxu0 %v1241
    %1475 = vmatprep.subr.bf16.mxu0 %v1248
    %1476 = vmatpush1.bf16.msra.mxu0 %v1247
    %1477 = vmatprep.mubr.bf16.mxu0 %v547
    %1478 = vmatmul.mubr.bf16.gmra.mrb[0].mxu0 %v546
    %v1479 = vpop.f32.mrb[0].mxu0
    %v1480 = vadd.f32 %v698, %v1479
    %v1481 = vpop.f32.mrb[0].mxu0
    %v1482 = vadd.f32 %v702, %v1481
    %v1483 = vpop.f32.mrb[0].mxu0
    %v1484 = vpop.f32.mrb[0].mxu0
    %1485 = vdwg.mxu0
    %1486 = vmatprep.subr.bf16.mxu0 %v1254
    %1487 = vmatpush1.bf16.msra.mxu0 %v1253
    %1488 = vmatprep.subr.bf16.mxu0 %v1260
    %1489 = vmatpush1.bf16.msra.mxu0 %v1259
    %1490 = vmatprep.subr.bf16.mxu0 %v1266
    %1491 = vmatpush1.bf16.msra.mxu0 %v1265
    %1492 = vmatprep.subr.bf16.mxu0 %v1272
    %1493 = vmatpush1.bf16.msra.mxu0 %v1271
    %1494 = vmatprep.subr.bf16.mxu0 %v1278
    %1495 = vmatpush1.bf16.msra.mxu0 %v1277
    %1496 = vmatprep.subr.bf16.mxu0 %v1284
    %1497 = vmatpush1.bf16.msra.mxu0 %v1283
    %1498 = vmatprep.subr.bf16.mxu0 %v1290
    %1499 = vmatpush1.bf16.msra.mxu0 %v1289
    %1500 = vmatprep.subr.bf16.mxu0 %v1296
    %1501 = vmatpush1.bf16.msra.mxu0 %v1295
    %1502 = vmatprep.subr.bf16.mxu0 0
    %1503 = vmatpush1.bf16.msra.mxu0 0
    %1504 = vmatprep.subr.bf16.mxu0 0
    %1505 = vmatpush1.bf16.msra.mxu0 0
    %1506 = vmatprep.subr.bf16.mxu0 0
    %1507 = vmatpush1.bf16.msra.mxu0 0
    %1508 = vmatprep.subr.bf16.mxu0 0
    %1509 = vmatpush1.bf16.msra.mxu0 0
    %1510 = vmatprep.subr.bf16.mxu0 0
    %1511 = vmatpush1.bf16.msra.mxu0 0
    %1512 = vmatprep.subr.bf16.mxu0 0
    %1513 = vmatpush1.bf16.msra.mxu0 0
    %1514 = vmatprep.subr.bf16.mxu0 0
    %1515 = vmatpush1.bf16.msra.mxu0 0
    %1516 = vmatprep.subr.bf16.mxu0 0
    %1517 = vmatpush1.bf16.msra.mxu0 0
    %1518 = vmatprep.mubr.bf16.mxu0 0
    %1519 = vmatmul.mubr.bf16.gmra.mrb[0].mxu0 %v548
    %v1520 = vpop.f32.mrb[0].mxu0
    %v1521 = vadd.f32 %v1480, %v1520
    %v1522 = vpop.f32.mrb[0].mxu0
    %v1523 = vadd.f32 %v1482, %v1522
    %v1524 = vpop.f32.mrb[0].mxu0
    %v1525 = vpop.f32.mrb[0].mxu0
    %1526 = vdwg.mxu0
    %1527 = vmatprep.subr.bf16.mxu0 %v1160
    %1528 = vmatpush1.bf16.msra.mxu0 %v1159
    %1529 = vmatprep.subr.bf16.mxu0 %v1166
    %1530 = vmatpush1.bf16.msra.mxu0 %v1165
    %1531 = vmatprep.subr.bf16.mxu0 %v1172
    %1532 = vmatpush1.bf16.msra.mxu0 %v1171
    %1533 = vmatprep.subr.bf16.mxu0 %v1178
    %1534 = vmatpush1.bf16.msra.mxu0 %v1177
    %1535 = vmatprep.subr.bf16.mxu0 %v1184
    %1536 = vmatpush1.bf16.msra.mxu0 %v1183
    %1537 = vmatprep.subr.bf16.mxu0 %v1190
    %1538 = vmatpush1.bf16.msra.mxu0 %v1189
    %1539 = vmatprep.subr.bf16.mxu0 %v1196
    %1540 = vmatpush1.bf16.msra.mxu0 %v1195
    %1541 = vmatprep.subr.bf16.mxu0 %v1202
    %1542 = vmatpush1.bf16.msra.mxu0 %v1201
    %1543 = vmatprep.subr.bf16.mxu0 %v1208
    %1544 = vmatpush1.bf16.msra.mxu0 %v1207
    %1545 = vmatprep.subr.bf16.mxu0 %v1214
    %1546 = vmatpush1.bf16.msra.mxu0 %v1213
    %1547 = vmatprep.subr.bf16.mxu0 %v1220
    %1548 = vmatpush1.bf16.msra.mxu0 %v1219
    %1549 = vmatprep.subr.bf16.mxu0 %v1226
    %1550 = vmatpush1.bf16.msra.mxu0 %v1225
    %1551 = vmatprep.subr.bf16.mxu0 %v1232
    %1552 = vmatpush1.bf16.msra.mxu0 %v1231
    %1553 = vmatprep.subr.bf16.mxu0 %v1238
    %1554 = vmatpush1.bf16.msra.mxu0 %v1237
    %1555 = vmatprep.subr.bf16.mxu0 %v1244
    %1556 = vmatpush1.bf16.msra.mxu0 %v1243
    %1557 = vmatprep.subr.bf16.mxu0 %v1250
    %1558 = vmatpush1.bf16.msra.mxu0 %v1249
    %1559 = vmatprep.mubr.bf16.mxu0 %v547
    %1560 = vmatmul.mubr.bf16.gmra.mrb[0].mxu0 %v546
    %v1561 = vpop.f32.mrb[0].mxu0
    %v1562 = vadd.f32 %v706, %v1561
    %v1563 = vpop.f32.mrb[0].mxu0
    %v1564 = vadd.f32 %v710, %v1563
    %v1565 = vpop.f32.mrb[0].mxu0
    %v1566 = vpop.f32.mrb[0].mxu0
    %1567 = vdwg.mxu0
    %1568 = vmatprep.subr.bf16.mxu0 %v1256
    %1569 = vmatpush1.bf16.msra.mxu0 %v1255
    %1570 = vmatprep.subr.bf16.mxu0 %v1262
    %1571 = vmatpush1.bf16.msra.mxu0 %v1261
    %1572 = vmatprep.subr.bf16.mxu0 %v1268
    %1573 = vmatpush1.bf16.msra.mxu0 %v1267
    %1574 = vmatprep.subr.bf16.mxu0 %v1274
    %1575 = vmatpush1.bf16.msra.mxu0 %v1273
    %1576 = vmatprep.subr.bf16.mxu0 %v1280
    %1577 = vmatpush1.bf16.msra.mxu0 %v1279
    %1578 = vmatprep.subr.bf16.mxu0 %v1286
    %1579 = vmatpush1.bf16.msra.mxu0 %v1285
    %1580 = vmatprep.subr.bf16.mxu0 %v1292
    %1581 = vmatpush1.bf16.msra.mxu0 %v1291
    %1582 = vmatprep.subr.bf16.mxu0 %v1298
    %1583 = vmatpush1.bf16.msra.mxu0 %v1297
    %1584 = vmatprep.subr.bf16.mxu0 0
    %1585 = vmatpush1.bf16.msra.mxu0 0
    %1586 = vmatprep.subr.bf16.mxu0 0
    %1587 = vmatpush1.bf16.msra.mxu0 0
    %1588 = vmatprep.subr.bf16.mxu0 0
    %1589 = vmatpush1.bf16.msra.mxu0 0
    %1590 = vmatprep.subr.bf16.mxu0 0
    %1591 = vmatpush1.bf16.msra.mxu0 0
    %1592 = vmatprep.subr.bf16.mxu0 0
    %1593 = vmatpush1.bf16.msra.mxu0 0
    %1594 = vmatprep.subr.bf16.mxu0 0
    %1595 = vmatpush1.bf16.msra.mxu0 0
    %1596 = vmatprep.subr.bf16.mxu0 0
    %1597 = vmatpush1.bf16.msra.mxu0 0
    %1598 = vmatprep.subr.bf16.mxu0 0
    %1599 = vmatpush1.bf16.msra.mxu0 0
    %1600 = vmatprep.mubr.bf16.mxu0 0
    %1601 = vmatmul.mubr.bf16.gmra.mrb[0].mxu0 %v548
    %v1602 = vpop.f32.mrb[0].mxu0
    %v1603 = vadd.f32 %v1562, %v1602
    %v1604 = vpop.f32.mrb[0].mxu0
    %v1605 = vadd.f32 %v1564, %v1604
    %v1606 = vpop.f32.mrb[0].mxu0
    %v1607 = vpop.f32.mrb[0].mxu0
    %1608 = vdwg.mxu0
    %1609 = vmatprep.subr.bf16.mxu0 %v1162
    %1610 = vmatpush1.bf16.msra.mxu0 %v1161
    %1611 = vmatprep.subr.bf16.mxu0 %v1168
    %1612 = vmatpush1.bf16.msra.mxu0 %v1167
    %1613 = vmatprep.subr.bf16.mxu0 %v1174
    %1614 = vmatpush1.bf16.msra.mxu0 %v1173
    %1615 = vmatprep.subr.bf16.mxu0 %v1180
    %1616 = vmatpush1.bf16.msra.mxu0 %v1179
    %1617 = vmatprep.subr.bf16.mxu0 %v1186
    %1618 = vmatpush1.bf16.msra.mxu0 %v1185
    %1619 = vmatprep.subr.bf16.mxu0 %v1192
    %1620 = vmatpush1.bf16.msra.mxu0 %v1191
    %1621 = vmatprep.subr.bf16.mxu0 %v1198
    %1622 = vmatpush1.bf16.msra.mxu0 %v1197
    %1623 = vmatprep.subr.bf16.mxu0 %v1204
    %1624 = vmatpush1.bf16.msra.mxu0 %v1203
    %1625 = vmatprep.subr.bf16.mxu0 %v1210
    %1626 = vmatpush1.bf16.msra.mxu0 %v1209
    %1627 = vmatprep.subr.bf16.mxu0 %v1216
    %1628 = vmatpush1.bf16.msra.mxu0 %v1215
    %1629 = vmatprep.subr.bf16.mxu0 %v1222
    %1630 = vmatpush1.bf16.msra.mxu0 %v1221
    %1631 = vmatprep.subr.bf16.mxu0 %v1228
    %1632 = vmatpush1.bf16.msra.mxu0 %v1227
    %1633 = vmatprep.subr.bf16.mxu0 %v1234
    %1634 = vmatpush1.bf16.msra.mxu0 %v1233
    %1635 = vmatprep.subr.bf16.mxu0 %v1240
    %1636 = vmatpush1.bf16.msra.mxu0 %v1239
    %1637 = vmatprep.subr.bf16.mxu0 %v1246
    %1638 = vmatpush1.bf16.msra.mxu0 %v1245
    %1639 = vmatprep.subr.bf16.mxu0 %v1252
    %1640 = vmatpush1.bf16.msra.mxu0 %v1251
    %1641 = vmatprep.mubr.bf16.mxu0 %v547
    %1642 = vmatmul.mubr.bf16.gmra.mrb[0].mxu0 %v546
    %v1643 = vpop.f32.mrb[0].mxu0
    %v1644 = vadd.f32 %v714, %v1643
    %v1645 = vpop.f32.mrb[0].mxu0
    %v1646 = vadd.f32 %v718, %v1645
    %v1647 = vpop.f32.mrb[0].mxu0
    %v1648 = vpop.f32.mrb[0].mxu0
    %1649 = vdwg.mxu0
    %1650 = vmatprep.subr.bf16.mxu0 %v1258
    %1651 = vmatpush1.bf16.msra.mxu0 %v1257
    %1652 = vmatprep.subr.bf16.mxu0 %v1264
    %1653 = vmatpush1.bf16.msra.mxu0 %v1263
    %1654 = vmatprep.subr.bf16.mxu0 %v1270
    %1655 = vmatpush1.bf16.msra.mxu0 %v1269
    %1656 = vmatprep.subr.bf16.mxu0 %v1276
    %1657 = vmatpush1.bf16.msra.mxu0 %v1275
    %1658 = vmatprep.subr.bf16.mxu0 %v1282
    %1659 = vmatpush1.bf16.msra.mxu0 %v1281
    %1660 = vmatprep.subr.bf16.mxu0 %v1288
    %1661 = vmatpush1.bf16.msra.mxu0 %v1287
    %1662 = vmatprep.subr.bf16.mxu0 %v1294
    %1663 = vmatpush1.bf16.msra.mxu0 %v1293
    %1664 = vmatprep.subr.bf16.mxu0 %v1300
    %1665 = vmatpush1.bf16.msra.mxu0 %v1299
    %1666 = vmatprep.subr.bf16.mxu0 0
    %1667 = vmatpush1.bf16.msra.mxu0 0
    %1668 = vmatprep.subr.bf16.mxu0 0
    %1669 = vmatpush1.bf16.msra.mxu0 0
    %1670 = vmatprep.subr.bf16.mxu0 0
    %1671 = vmatpush1.bf16.msra.mxu0 0
    %1672 = vmatprep.subr.bf16.mxu0 0
    %1673 = vmatpush1.bf16.msra.mxu0 0
    %1674 = vmatprep.subr.bf16.mxu0 0
    %1675 = vmatpush1.bf16.msra.mxu0 0
    %1676 = vmatprep.subr.bf16.mxu0 0
    %1677 = vmatpush1.bf16.msra.mxu0 0
    %1678 = vmatprep.subr.bf16.mxu0 0
    %1679 = vmatpush1.bf16.msra.mxu0 0
    %1680 = vmatprep.subr.bf16.mxu0 0
    %1681 = vmatpush1.bf16.msra.mxu0 0
    %1682 = vmatprep.mubr.bf16.mxu0 0
    %1683 = vmatmul.mubr.bf16.gmra.mrb[0].mxu0 %v548
    %v1684 = vpop.f32.mrb[0].mxu0
    %v1685 = vadd.f32 %v1644, %v1684
    %v1686 = vpop.f32.mrb[0].mxu0
    %v1687 = vadd.f32 %v1646, %v1686
    %v1688 = vpop.f32.mrb[0].mxu0
    %v1689 = vpop.f32.mrb[0].mxu0
    %1690 = vdwg.mxu0
    %v1691 = vmax.f32 %v1521, 0.0
    %v1692 = vmax.f32 %v1523, 0.0
    %v1693 = vmax.f32 %v1603, 0.0
    %v1694 = vmax.f32 %v1605, 0.0
    %v1695 = vmax.f32 %v1685, 0.0
    %v1696 = vmax.f32 %v1687, 0.0
    %v1697 = vpack.c.bf16 %v1691, %v1691
    %v1698 = vpack.c.bf16 %v1692, %v1692
    %v1699 = vpack.c.bf16 %v1693, %v1693
    %v1700 = vpack.c.bf16 %v1694, %v1694
    %v1701 = vpack.c.bf16 %v1695, %v1695
    %v1702 = vpack.c.bf16 %v1696, %v1696
    %v1703 = vld [vmem:[#allocation12] sm:$0xff]
    %v1704 = vld [vmem:[#allocation12 + $0x8] sm:$0xff]
    %v1705 = vld [vmem:[#allocation12 + $0x10] sm:$0xff]
    %v1706 = vld [vmem:[#allocation12 + $0x18] sm:$0xff]
    %v1707 = vld [vmem:[#allocation12 + $0x20] sm:$0xff]
    %v1708 = vld [vmem:[#allocation12 + $0x28] sm:$0xff]
    %v1709 = vld [vmem:[#allocation12 + $0x30] sm:$0xff]
    %v1710 = vld [vmem:[#allocation12 + $0x38] sm:$0xff]
    %v1711 = vld [vmem:[#allocation12 + $0x40] sm:$0xff]
    %v1712 = vld [vmem:[#allocation12 + $0x48] sm:$0xff]
    %v1713 = vld [vmem:[#allocation12 + $0x50] sm:$0xff]
    %v1714 = vld [vmem:[#allocation12 + $0x58] sm:$0xff]
    %v1715 = vld [vmem:[#allocation12 + $0x60] sm:$0xff]
    %v1716 = vld [vmem:[#allocation12 + $0x68] sm:$0xff]
    %v1717 = vld [vmem:[#allocation12 + $0x70] sm:$0xff]
    %v1718 = vld [vmem:[#allocation12 + $0x78] sm:$0xff]
    %v1719 = vld [vmem:[#allocation12 + $0x80] sm:$0xff]
    %v1720 = vld [vmem:[#allocation12 + $0x88] sm:$0xff]
    %v1721 = vld [vmem:[#allocation12 + $0x90] sm:$0xff]
    %v1722 = vld [vmem:[#allocation12 + $0x98] sm:$0xff]
    %v1723 = vld [vmem:[#allocation12 + $0xa0] sm:$0xff]
    %v1724 = vld [vmem:[#allocation12 + $0xa8] sm:$0xff]
    %v1725 = vld [vmem:[#allocation12 + $0xb0] sm:$0xff]
    %v1726 = vld [vmem:[#allocation12 + $0xb8] sm:$0xff]
    %v1727 = vld [vmem:[#allocation12 + $0xc0] sm:$0xff]
    %v1728 = vld [vmem:[#allocation12 + $0xc8] sm:$0xff]
    %v1729 = vld [vmem:[#allocation12 + $0xd0] sm:$0xff]
    %v1730 = vld [vmem:[#allocation12 + $0xd8] sm:$0xff]
    %v1731 = vld [vmem:[#allocation12 + $0xe0] sm:$0xff]
    %v1732 = vld [vmem:[#allocation12 + $0xe8] sm:$0xff]
    %v1733 = vld [vmem:[#allocation12 + $0xf0] sm:$0xff]
    %v1734 = vld [vmem:[#allocation12 + $0xf8] sm:$0xff]
    %v1735 = vld [vmem:[#allocation12 + $0x100] sm:$0xff]
    %v1736 = vld [vmem:[#allocation12 + $0x108] sm:$0xff]
    %v1737 = vld [vmem:[#allocation12 + $0x110] sm:$0xff]
    %v1738 = vld [vmem:[#allocation12 + $0x118] sm:$0xff]
    %v1739 = vld [vmem:[#allocation12 + $0x120] sm:$0xff]
    %v1740 = vld [vmem:[#allocation12 + $0x128] sm:$0xff]
    %v1741 = vld [vmem:[#allocation12 + $0x130] sm:$0xff]
    %v1742 = vld [vmem:[#allocation12 + $0x138] sm:$0xff]
    %v1743 = vld [vmem:[#allocation12 + $0x140] sm:$0xff]
    %v1744 = vld [vmem:[#allocation12 + $0x148] sm:$0xff]
    %v1745 = vld [vmem:[#allocation12 + $0x150] sm:$0xff]
    %v1746 = vld [vmem:[#allocation12 + $0x158] sm:$0xff]
    %v1747 = vld [vmem:[#allocation12 + $0x160] sm:$0xff]
    %v1748 = vld [vmem:[#allocation12 + $0x168] sm:$0xff]
    %v1749 = vld [vmem:[#allocation12 + $0x170] sm:$0xff]
    %v1750 = vld [vmem:[#allocation12 + $0x178] sm:$0xff]
    %v1751 = vld [vmem:[#allocation12 + $0x180] sm:$0xff]
    %v1752 = vld [vmem:[#allocation12 + $0x188] sm:$0xff]
    %v1753 = vld [vmem:[#allocation12 + $0x190] sm:$0xff]
    %v1754 = vld [vmem:[#allocation12 + $0x198] sm:$0xff]
    %v1755 = vld [vmem:[#allocation12 + $0x1a0] sm:$0xff]
    %v1756 = vld [vmem:[#allocation12 + $0x1a8] sm:$0xff]
    %v1757 = vld [vmem:[#allocation12 + $0x1b0] sm:$0xff]
    %v1758 = vld [vmem:[#allocation12 + $0x1b8] sm:$0xff]
    %v1759 = vld [vmem:[#allocation12 + $0x1c0] sm:$0xff]
    %v1760 = vld [vmem:[#allocation12 + $0x1c8] sm:$0xff]
    %v1761 = vld [vmem:[#allocation12 + $0x1d0] sm:$0xff]
    %v1762 = vld [vmem:[#allocation12 + $0x1d8] sm:$0xff]
    %v1763 = vld [vmem:[#allocation12 + $0x1e0] sm:$0xff]
    %v1764 = vld [vmem:[#allocation12 + $0x1e8] sm:$0xff]
    %v1765 = vld [vmem:[#allocation12 + $0x1f0] sm:$0xff]
    %v1766 = vld [vmem:[#allocation12 + $0x1f8] sm:$0xff]
    %v1767 = vld [vmem:[#allocation12 + $0x200] sm:$0xff]
    %v1768 = vld [vmem:[#allocation12 + $0x208] sm:$0xff]
    %v1769 = vld [vmem:[#allocation12 + $0x210] sm:$0xff]
    %v1770 = vld [vmem:[#allocation12 + $0x218] sm:$0xff]
    %v1771 = vld [vmem:[#allocation12 + $0x220] sm:$0xff]
    %v1772 = vld [vmem:[#allocation12 + $0x228] sm:$0xff]
    %v1773 = vld [vmem:[#allocation12 + $0x230] sm:$0xff]
    %v1774 = vld [vmem:[#allocation12 + $0x238] sm:$0xff]
    %v1775 = vld [vmem:[#allocation12 + $0x240] sm:$0xff]
    %v1776 = vld [vmem:[#allocation12 + $0x248] sm:$0xff]
    %v1777 = vld [vmem:[#allocation12 + $0x250] sm:$0xff]
    %v1778 = vld [vmem:[#allocation12 + $0x258] sm:$0xff]
    %v1779 = vld [vmem:[#allocation12 + $0x260] sm:$0xff]
    %v1780 = vld [vmem:[#allocation12 + $0x268] sm:$0xff]
    %v1781 = vld [vmem:[#allocation12 + $0x270] sm:$0xff]
    %v1782 = vld [vmem:[#allocation12 + $0x278] sm:$0xff]
    %v1783 = vld [vmem:[#allocation12 + $0x280] sm:$0xff]
    %v1784 = vld [vmem:[#allocation12 + $0x288] sm:$0xff]
    %v1785 = vld [vmem:[#allocation12 + $0x290] sm:$0xff]
    %v1786 = vld [vmem:[#allocation12 + $0x298] sm:$0xff]
    %v1787 = vld [vmem:[#allocation12 + $0x2a0] sm:$0xff]
    %v1788 = vld [vmem:[#allocation12 + $0x2a8] sm:$0xff]
    %v1789 = vld [vmem:[#allocation12 + $0x2b0] sm:$0xff]
    %v1790 = vld [vmem:[#allocation12 + $0x2b8] sm:$0xff]
    %v1791 = vld [vmem:[#allocation12 + $0x2c0] sm:$0xff]
    %v1792 = vld [vmem:[#allocation12 + $0x2c8] sm:$0xff]
    %v1793 = vld [vmem:[#allocation12 + $0x2d0] sm:$0xff]
    %v1794 = vld [vmem:[#allocation12 + $0x2d8] sm:$0xff]
    %v1795 = vld [vmem:[#allocation12 + $0x2e0] sm:$0xff]
    %v1796 = vld [vmem:[#allocation12 + $0x2e8] sm:$0xff]
    %v1797 = vld [vmem:[#allocation12 + $0x2f0] sm:$0xff]
    %v1798 = vld [vmem:[#allocation12 + $0x2f8] sm:$0xff]
    %v1799 = vld [vmem:[#allocation12 + $0x300] sm:$0xff]
    %v1800 = vld [vmem:[#allocation12 + $0x308] sm:$0xff]
    %v1801 = vld [vmem:[#allocation12 + $0x310] sm:$0xff]
    %v1802 = vld [vmem:[#allocation12 + $0x318] sm:$0xff]
    %v1803 = vld [vmem:[#allocation12 + $0x320] sm:$0xff]
    %v1804 = vld [vmem:[#allocation12 + $0x328] sm:$0xff]
    %v1805 = vld [vmem:[#allocation12 + $0x330] sm:$0xff]
    %v1806 = vld [vmem:[#allocation12 + $0x338] sm:$0xff]
    %v1807 = vld [vmem:[#allocation12 + $0x340] sm:$0xff]
    %v1808 = vld [vmem:[#allocation12 + $0x348] sm:$0xff]
    %v1809 = vld [vmem:[#allocation12 + $0x350] sm:$0xff]
    %v1810 = vld [vmem:[#allocation12 + $0x358] sm:$0xff]
    %v1811 = vld [vmem:[#allocation12 + $0x360] sm:$0xff]
    %v1812 = vld [vmem:[#allocation12 + $0x368] sm:$0xff]
    %v1813 = vld [vmem:[#allocation12 + $0x370] sm:$0xff]
    %v1814 = vld [vmem:[#allocation12 + $0x378] sm:$0xff]
    %v1815 = vld [vmem:[#allocation12 + $0x380] sm:$0xff]
    %v1816 = vld [vmem:[#allocation12 + $0x388] sm:$0xff]
    %v1817 = vld [vmem:[#allocation12 + $0x390] sm:$0xff]
    %v1818 = vld [vmem:[#allocation12 + $0x398] sm:$0xff]
    %v1819 = vld [vmem:[#allocation12 + $0x3a0] sm:$0xff]
    %v1820 = vld [vmem:[#allocation12 + $0x3a8] sm:$0xff]
    %v1821 = vld [vmem:[#allocation12 + $0x3b0] sm:$0xff]
    %v1822 = vld [vmem:[#allocation12 + $0x3b8] sm:$0xff]
    %v1823 = vld [vmem:[#allocation12 + $0x3c0] sm:$0xff]
    %v1824 = vld [vmem:[#allocation12 + $0x3c8] sm:$0xff]
    %v1825 = vld [vmem:[#allocation12 + $0x3d0] sm:$0xff]
    %v1826 = vld [vmem:[#allocation12 + $0x3d8] sm:$0xff]
    %v1827 = vld [vmem:[#allocation12 + $0x3e0] sm:$0xff]
    %v1828 = vld [vmem:[#allocation12 + $0x3e8] sm:$0xff]
    %v1829 = vld [vmem:[#allocation12 + $0x3f0] sm:$0xff]
    %v1830 = vld [vmem:[#allocation12 + $0x3f8] sm:$0xff]
    %v1831 = vld [vmem:[#allocation12 + $0x400] sm:$0xff]
    %v1832 = vld [vmem:[#allocation12 + $0x408] sm:$0xff]
    %v1833 = vld [vmem:[#allocation12 + $0x410] sm:$0xff]
    %v1834 = vld [vmem:[#allocation12 + $0x418] sm:$0xff]
    %v1835 = vld [vmem:[#allocation12 + $0x420] sm:$0xff]
    %v1836 = vld [vmem:[#allocation12 + $0x428] sm:$0xff]
    %v1837 = vld [vmem:[#allocation12 + $0x430] sm:$0xff]
    %v1838 = vld [vmem:[#allocation12 + $0x438] sm:$0xff]
    %v1839 = vld [vmem:[#allocation12 + $0x440] sm:$0xff]
    %v1840 = vld [vmem:[#allocation12 + $0x448] sm:$0xff]
    %v1841 = vld [vmem:[#allocation12 + $0x450] sm:$0xff]
    %v1842 = vld [vmem:[#allocation12 + $0x458] sm:$0xff]
    %v1843 = vld [vmem:[#allocation12 + $0x460] sm:$0xff]
    %v1844 = vld [vmem:[#allocation12 + $0x468] sm:$0xff]
    %v1845 = vld [vmem:[#allocation12 + $0x470] sm:$0xff]
    %v1846 = vld [vmem:[#allocation12 + $0x478] sm:$0xff]
    %v1847 = vld [vmem:[#allocation12 + $0x480] sm:$0xff]
    %v1848 = vld [vmem:[#allocation12 + $0x488] sm:$0xff]
    %v1849 = vld [vmem:[#allocation12 + $0x490] sm:$0xff]
    %v1850 = vld [vmem:[#allocation12 + $0x498] sm:$0xff]
    %v1851 = vld [vmem:[#allocation12 + $0x4a0] sm:$0xff]
    %v1852 = vld [vmem:[#allocation12 + $0x4a8] sm:$0xff]
    %v1853 = vld [vmem:[#allocation12 + $0x4b0] sm:$0xff]
    %v1854 = vld [vmem:[#allocation12 + $0x4b8] sm:$0xff]
    %v1855 = vld [vmem:[#allocation12 + $0x4c0] sm:$0xff]
    %v1856 = vld [vmem:[#allocation12 + $0x4c8] sm:$0xff]
    %v1857 = vld [vmem:[#allocation12 + $0x4d0] sm:$0xff]
    %v1858 = vld [vmem:[#allocation12 + $0x4d8] sm:$0xff]
    %v1859 = vld [vmem:[#allocation12 + $0x4e0] sm:$0xff]
    %v1860 = vld [vmem:[#allocation12 + $0x4e8] sm:$0xff]
    %v1861 = vld [vmem:[#allocation12 + $0x4f0] sm:$0xff]
    %v1862 = vld [vmem:[#allocation12 + $0x4f8] sm:$0xff]
    %v1863 = vld [vmem:[#allocation12 + $0x500] sm:$0xff]
    %v1864 = vld [vmem:[#allocation12 + $0x508] sm:$0xff]
    %v1865 = vld [vmem:[#allocation12 + $0x510] sm:$0xff]
    %v1866 = vld [vmem:[#allocation12 + $0x518] sm:$0xff]
    %v1867 = vld [vmem:[#allocation12 + $0x520] sm:$0xff]
    %v1868 = vld [vmem:[#allocation12 + $0x528] sm:$0xff]
    %v1869 = vld [vmem:[#allocation12 + $0x530] sm:$0xff]
    %v1870 = vld [vmem:[#allocation12 + $0x538] sm:$0xff]
    %v1871 = vld [vmem:[#allocation12 + $0x540] sm:$0xff]
    %v1872 = vld [vmem:[#allocation12 + $0x548] sm:$0xff]
    %v1873 = vld [vmem:[#allocation12 + $0x550] sm:$0xff]
    %v1874 = vld [vmem:[#allocation12 + $0x558] sm:$0xff]
    %v1875 = vld [vmem:[#allocation12 + $0x560] sm:$0xff]
    %v1876 = vld [vmem:[#allocation12 + $0x568] sm:$0xff]
    %v1877 = vld [vmem:[#allocation12 + $0x570] sm:$0xff]
    %v1878 = vld [vmem:[#allocation12 + $0x578] sm:$0xff]
    %v1879 = vld [vmem:[#allocation12 + $0x580] sm:$0xff]
    %v1880 = vld [vmem:[#allocation12 + $0x588] sm:$0xff]
    %v1881 = vld [vmem:[#allocation12 + $0x590] sm:$0xff]
    %v1882 = vld [vmem:[#allocation12 + $0x598] sm:$0xff]
    %v1883 = vld [vmem:[#allocation12 + $0x5a0] sm:$0xff]
    %v1884 = vld [vmem:[#allocation12 + $0x5a8] sm:$0xff]
    %v1885 = vld [vmem:[#allocation12 + $0x5b0] sm:$0xff]
    %v1886 = vld [vmem:[#allocation12 + $0x5b8] sm:$0xff]
    %v1887 = vld [vmem:[#allocation12 + $0x5c0] sm:$0xff]
    %v1888 = vld [vmem:[#allocation12 + $0x5c8] sm:$0xff]
    %v1889 = vld [vmem:[#allocation12 + $0x5d0] sm:$0xff]
    %v1890 = vld [vmem:[#allocation12 + $0x5d8] sm:$0xff]
    %v1891 = vld [vmem:[#allocation12 + $0x5e0] sm:$0xff]
    %v1892 = vld [vmem:[#allocation12 + $0x5e8] sm:$0xff]
    %v1893 = vld [vmem:[#allocation12 + $0x5f0] sm:$0xff]
    %v1894 = vld [vmem:[#allocation12 + $0x5f8] sm:$0xff]
    %v1895 = vld [vmem:[#allocation12 + $0x600] sm:$0xff]
    %v1896 = vld [vmem:[#allocation12 + $0x608] sm:$0xff]
    %v1897 = vld [vmem:[#allocation12 + $0x610] sm:$0xff]
    %v1898 = vld [vmem:[#allocation12 + $0x618] sm:$0xff]
    %v1899 = vld [vmem:[#allocation12 + $0x620] sm:$0xff]
    %v1900 = vld [vmem:[#allocation12 + $0x628] sm:$0xff]
    %v1901 = vld [vmem:[#allocation12 + $0x630] sm:$0xff]
    %v1902 = vld [vmem:[#allocation12 + $0x638] sm:$0xff]
    %v1903 = vld [vmem:[#allocation12 + $0x640] sm:$0xff]
    %v1904 = vld [vmem:[#allocation12 + $0x648] sm:$0xff]
    %v1905 = vld [vmem:[#allocation12 + $0x650] sm:$0xff]
    %v1906 = vld [vmem:[#allocation12 + $0x658] sm:$0xff]
    %v1907 = vld [vmem:[#allocation12 + $0x660] sm:$0xff]
    %v1908 = vld [vmem:[#allocation12 + $0x668] sm:$0xff]
    %v1909 = vld [vmem:[#allocation12 + $0x670] sm:$0xff]
    %v1910 = vld [vmem:[#allocation12 + $0x678] sm:$0xff]
    %v1911 = vld [vmem:[#allocation12 + $0x680] sm:$0xff]
    %v1912 = vld [vmem:[#allocation12 + $0x688] sm:$0xff]
    %v1913 = vld [vmem:[#allocation12 + $0x690] sm:$0xff]
    %v1914 = vld [vmem:[#allocation12 + $0x698] sm:$0xff]
    %v1915 = vld [vmem:[#allocation12 + $0x6a0] sm:$0xff]
    %v1916 = vld [vmem:[#allocation12 + $0x6a8] sm:$0xff]
    %v1917 = vld [vmem:[#allocation12 + $0x6b0] sm:$0xff]
    %v1918 = vld [vmem:[#allocation12 + $0x6b8] sm:$0xff]
    %v1919 = vld [vmem:[#allocation12 + $0x6c0] sm:$0xff]
    %v1920 = vld [vmem:[#allocation12 + $0x6c8] sm:$0xff]
    %v1921 = vld [vmem:[#allocation12 + $0x6d0] sm:$0xff]
    %v1922 = vld [vmem:[#allocation12 + $0x6d8] sm:$0xff]
    %v1923 = vld [vmem:[#allocation12 + $0x6e0] sm:$0xff]
    %v1924 = vld [vmem:[#allocation12 + $0x6e8] sm:$0xff]
    %v1925 = vld [vmem:[#allocation12 + $0x6f0] sm:$0xff]
    %v1926 = vld [vmem:[#allocation12 + $0x6f8] sm:$0xff]
    %v1927 = vld [vmem:[#allocation12 + $0x700] sm:$0xff]
    %v1928 = vld [vmem:[#allocation12 + $0x708] sm:$0xff]
    %v1929 = vld [vmem:[#allocation12 + $0x710] sm:$0xff]
    %v1930 = vld [vmem:[#allocation12 + $0x718] sm:$0xff]
    %v1931 = vld [vmem:[#allocation12 + $0x720] sm:$0xff]
    %v1932 = vld [vmem:[#allocation12 + $0x728] sm:$0xff]
    %v1933 = vld [vmem:[#allocation12 + $0x730] sm:$0xff]
    %v1934 = vld [vmem:[#allocation12 + $0x738] sm:$0xff]
    %v1935 = vld [vmem:[#allocation12 + $0x740] sm:$0xff]
    %v1936 = vld [vmem:[#allocation12 + $0x748] sm:$0xff]
    %v1937 = vld [vmem:[#allocation12 + $0x750] sm:$0xff]
    %v1938 = vld [vmem:[#allocation12 + $0x758] sm:$0xff]
    %v1939 = vld [vmem:[#allocation12 + $0x760] sm:$0xff]
    %v1940 = vld [vmem:[#allocation12 + $0x768] sm:$0xff]
    %v1941 = vld [vmem:[#allocation12 + $0x770] sm:$0xff]
    %v1942 = vld [vmem:[#allocation12 + $0x778] sm:$0xff]
    %v1943 = vld [vmem:[#allocation12 + $0x780] sm:$0xff]
    %v1944 = vld [vmem:[#allocation12 + $0x788] sm:$0xff]
    %v1945 = vld [vmem:[#allocation12 + $0x790] sm:$0xff]
    %v1946 = vld [vmem:[#allocation12 + $0x798] sm:$0xff]
    %v1947 = vld [vmem:[#allocation12 + $0x7a0] sm:$0xff]
    %v1948 = vld [vmem:[#allocation12 + $0x7a8] sm:$0xff]
    %v1949 = vld [vmem:[#allocation12 + $0x7b0] sm:$0xff]
    %v1950 = vld [vmem:[#allocation12 + $0x7b8] sm:$0xff]
    %v1951 = vld [vmem:[#allocation12 + $0x7c0] sm:$0xff]
    %v1952 = vld [vmem:[#allocation12 + $0x7c8] sm:$0xff]
    %v1953 = vld [vmem:[#allocation12 + $0x7d0] sm:$0xff]
    %v1954 = vld [vmem:[#allocation12 + $0x7d8] sm:$0xff]
    %v1955 = vld [vmem:[#allocation12 + $0x7e0] sm:$0xff]
    %v1956 = vld [vmem:[#allocation12 + $0x7e8] sm:$0xff]
    %v1957 = vld [vmem:[#allocation12 + $0x7f0] sm:$0xff]
    %v1958 = vld [vmem:[#allocation12 + $0x7f8] sm:$0xff]
    %v1959 = vld [vmem:[#allocation12 + $0x800] sm:$0xff]
    %v1960 = vld [vmem:[#allocation12 + $0x808] sm:$0xff]
    %v1961 = vld [vmem:[#allocation12 + $0x810] sm:$0xff]
    %v1962 = vld [vmem:[#allocation12 + $0x818] sm:$0xff]
    %v1963 = vld [vmem:[#allocation12 + $0x820] sm:$0xff]
    %v1964 = vld [vmem:[#allocation12 + $0x828] sm:$0xff]
    %v1965 = vld [vmem:[#allocation12 + $0x830] sm:$0xff]
    %v1966 = vld [vmem:[#allocation12 + $0x838] sm:$0xff]
    %v1967 = vld [vmem:[#allocation12 + $0x840] sm:$0xff]
    %v1968 = vld [vmem:[#allocation12 + $0x848] sm:$0xff]
    %v1969 = vld [vmem:[#allocation12 + $0x850] sm:$0xff]
    %v1970 = vld [vmem:[#allocation12 + $0x858] sm:$0xff]
    %v1971 = vld [vmem:[#allocation12 + $0x860] sm:$0xff]
    %v1972 = vld [vmem:[#allocation12 + $0x868] sm:$0xff]
    %v1973 = vld [vmem:[#allocation12 + $0x870] sm:$0xff]
    %v1974 = vld [vmem:[#allocation12 + $0x878] sm:$0xff]
    %v1975 = vld [vmem:[#allocation12 + $0x880] sm:$0xff]
    %v1976 = vld [vmem:[#allocation12 + $0x888] sm:$0xff]
    %v1977 = vld [vmem:[#allocation12 + $0x890] sm:$0xff]
    %v1978 = vld [vmem:[#allocation12 + $0x898] sm:$0xff]
    %v1979 = vld [vmem:[#allocation12 + $0x8a0] sm:$0xff]
    %v1980 = vld [vmem:[#allocation12 + $0x8a8] sm:$0xff]
    %v1981 = vld [vmem:[#allocation12 + $0x8b0] sm:$0xff]
    %v1982 = vld [vmem:[#allocation12 + $0x8b8] sm:$0xff]
    %v1983 = vld [vmem:[#allocation12 + $0x8c0] sm:$0xff]
    %v1984 = vld [vmem:[#allocation12 + $0x8c8] sm:$0xff]
    %v1985 = vld [vmem:[#allocation12 + $0x8d0] sm:$0xff]
    %v1986 = vld [vmem:[#allocation12 + $0x8d8] sm:$0xff]
    %v1987 = vld [vmem:[#allocation12 + $0x8e0] sm:$0xff]
    %v1988 = vld [vmem:[#allocation12 + $0x8e8] sm:$0xff]
    %v1989 = vld [vmem:[#allocation12 + $0x8f0] sm:$0xff]
    %v1990 = vld [vmem:[#allocation12 + $0x8f8] sm:$0xff]
    %v1991 = vld [vmem:[#allocation14] sm:$0x3f]
    %v1993 = vlaneseq
    %v1994 = vshrl.u32 %v1993, 7
    %v1995 = vsub.s32 0, %v1994
    %v1996 = vrot.slane %v1991, %v1995
    %v1997 = vlaneseq
    %v1998 = vshrl.u32 %v1997, 7
    %v1999 = vsub.s32 1, %v1998
    %v2000 = vrot.slane %v1991, %v1999
    %v2001 = vlaneseq
    %v2002 = vshrl.u32 %v2001, 7
    %v2003 = vsub.s32 2, %v2002
    %v2004 = vrot.slane %v1991, %v2003
    %v2005 = vlaneseq
    %v2006 = vshrl.u32 %v2005, 7
    %v2007 = vsub.s32 3, %v2006
    %v2008 = vrot.slane %v1991, %v2007
    %v2009 = vlaneseq
    %v2010 = vshrl.u32 %v2009, 7
    %v2011 = vsub.s32 4, %v2010
    %v2012 = vrot.slane %v1991, %v2011
    %v2013 = vlaneseq
    %v2014 = vshrl.u32 %v2013, 7
    %v2015 = vsub.s32 5, %v2014
    %v2016 = vrot.slane %v1991, %v2015
    %v2311 = vunpack.c.l.b16 %v1703
    %v2312 = vunpack.c.h.b16 %v1703
    %v2313 = vunpack.c.l.b16 %v1704
    %v2314 = vunpack.c.h.b16 %v1704
    %v2315 = vunpack.c.l.b16 %v1705
    %v2316 = vunpack.c.h.b16 %v1705
    %v2317 = vunpack.c.l.b16 %v1706
    %v2318 = vunpack.c.h.b16 %v1706
    %v2319 = vunpack.c.l.b16 %v1707
    %v2320 = vunpack.c.h.b16 %v1707
    %v2321 = vunpack.c.l.b16 %v1708
    %v2322 = vunpack.c.h.b16 %v1708
    %v2323 = vunpack.c.l.b16 %v1709
    %v2324 = vunpack.c.h.b16 %v1709
    %v2325 = vunpack.c.l.b16 %v1710
    %v2326 = vunpack.c.h.b16 %v1710
    %v2327 = vunpack.c.l.b16 %v1711
    %v2328 = vunpack.c.h.b16 %v1711
    %v2329 = vunpack.c.l.b16 %v1712
    %v2330 = vunpack.c.h.b16 %v1712
    %v2331 = vunpack.c.l.b16 %v1713
    %v2332 = vunpack.c.h.b16 %v1713
    %v2333 = vunpack.c.l.b16 %v1714
    %v2334 = vunpack.c.h.b16 %v1714
    %v2335 = vunpack.c.l.b16 %v1715
    %v2336 = vunpack.c.h.b16 %v1715
    %v2337 = vunpack.c.l.b16 %v1716
    %v2338 = vunpack.c.h.b16 %v1716
    %v2339 = vunpack.c.l.b16 %v1717
    %v2340 = vunpack.c.h.b16 %v1717
    %v2341 = vunpack.c.l.b16 %v1718
    %v2342 = vunpack.c.h.b16 %v1718
    %v2343 = vunpack.c.l.b16 %v1719
    %v2344 = vunpack.c.h.b16 %v1719
    %v2345 = vunpack.c.l.b16 %v1720
    %v2346 = vunpack.c.h.b16 %v1720
    %v2347 = vunpack.c.l.b16 %v1721
    %v2348 = vunpack.c.h.b16 %v1721
    %v2349 = vunpack.c.l.b16 %v1722
    %v2350 = vunpack.c.h.b16 %v1722
    %v2351 = vunpack.c.l.b16 %v1723
    %v2352 = vunpack.c.h.b16 %v1723
    %v2353 = vunpack.c.l.b16 %v1724
    %v2354 = vunpack.c.h.b16 %v1724
    %v2355 = vunpack.c.l.b16 %v1725
    %v2356 = vunpack.c.h.b16 %v1725
    %v2357 = vunpack.c.l.b16 %v1726
    %v2358 = vunpack.c.h.b16 %v1726
    %v2359 = vunpack.c.l.b16 %v1727
    %v2360 = vunpack.c.h.b16 %v1727
    %v2361 = vunpack.c.l.b16 %v1728
    %v2362 = vunpack.c.h.b16 %v1728
    %v2363 = vunpack.c.l.b16 %v1729
    %v2364 = vunpack.c.h.b16 %v1729
    %v2365 = vunpack.c.l.b16 %v1730
    %v2366 = vunpack.c.h.b16 %v1730
    %v2367 = vunpack.c.l.b16 %v1731
    %v2368 = vunpack.c.h.b16 %v1731
    %v2369 = vunpack.c.l.b16 %v1732
    %v2370 = vunpack.c.h.b16 %v1732
    %v2371 = vunpack.c.l.b16 %v1733
    %v2372 = vunpack.c.h.b16 %v1733
    %v2373 = vunpack.c.l.b16 %v1734
    %v2374 = vunpack.c.h.b16 %v1734
    %v2375 = vunpack.c.l.b16 %v1735
    %v2376 = vunpack.c.h.b16 %v1735
    %v2377 = vunpack.c.l.b16 %v1736
    %v2378 = vunpack.c.h.b16 %v1736
    %v2379 = vunpack.c.l.b16 %v1737
    %v2380 = vunpack.c.h.b16 %v1737
    %v2381 = vunpack.c.l.b16 %v1738
    %v2382 = vunpack.c.h.b16 %v1738
    %v2383 = vunpack.c.l.b16 %v1739
    %v2384 = vunpack.c.h.b16 %v1739
    %v2385 = vunpack.c.l.b16 %v1740
    %v2386 = vunpack.c.h.b16 %v1740
    %v2387 = vunpack.c.l.b16 %v1741
    %v2388 = vunpack.c.h.b16 %v1741
    %v2389 = vunpack.c.l.b16 %v1742
    %v2390 = vunpack.c.h.b16 %v1742
    %v2391 = vunpack.c.l.b16 %v1743
    %v2392 = vunpack.c.h.b16 %v1743
    %v2393 = vunpack.c.l.b16 %v1744
    %v2394 = vunpack.c.h.b16 %v1744
    %v2395 = vunpack.c.l.b16 %v1745
    %v2396 = vunpack.c.h.b16 %v1745
    %v2397 = vunpack.c.l.b16 %v1746
    %v2398 = vunpack.c.h.b16 %v1746
    %v2399 = vunpack.c.l.b16 %v1747
    %v2400 = vunpack.c.h.b16 %v1747
    %v2401 = vunpack.c.l.b16 %v1748
    %v2402 = vunpack.c.h.b16 %v1748
    %v2403 = vunpack.c.l.b16 %v1749
    %v2404 = vunpack.c.h.b16 %v1749
    %v2405 = vunpack.c.l.b16 %v1750
    %v2406 = vunpack.c.h.b16 %v1750
    %v2407 = vunpack.c.l.b16 %v1751
    %v2408 = vunpack.c.h.b16 %v1751
    %v2409 = vunpack.c.l.b16 %v1752
    %v2410 = vunpack.c.h.b16 %v1752
    %v2411 = vunpack.c.l.b16 %v1753
    %v2412 = vunpack.c.h.b16 %v1753
    %v2413 = vunpack.c.l.b16 %v1754
    %v2414 = vunpack.c.h.b16 %v1754
    %v2415 = vunpack.c.l.b16 %v1755
    %v2416 = vunpack.c.h.b16 %v1755
    %v2417 = vunpack.c.l.b16 %v1756
    %v2418 = vunpack.c.h.b16 %v1756
    %v2419 = vunpack.c.l.b16 %v1757
    %v2420 = vunpack.c.h.b16 %v1757
    %v2421 = vunpack.c.l.b16 %v1758
    %v2422 = vunpack.c.h.b16 %v1758
    %v2423 = vunpack.c.l.b16 %v1759
    %v2424 = vunpack.c.h.b16 %v1759
    %v2425 = vunpack.c.l.b16 %v1760
    %v2426 = vunpack.c.h.b16 %v1760
    %v2427 = vunpack.c.l.b16 %v1761
    %v2428 = vunpack.c.h.b16 %v1761
    %v2429 = vunpack.c.l.b16 %v1762
    %v2430 = vunpack.c.h.b16 %v1762
    %v2431 = vunpack.c.l.b16 %v1763
    %v2432 = vunpack.c.h.b16 %v1763
    %v2433 = vunpack.c.l.b16 %v1764
    %v2434 = vunpack.c.h.b16 %v1764
    %v2435 = vunpack.c.l.b16 %v1765
    %v2436 = vunpack.c.h.b16 %v1765
    %v2437 = vunpack.c.l.b16 %v1766
    %v2438 = vunpack.c.h.b16 %v1766
    %v2439 = vunpack.c.l.b16 %v1767
    %v2440 = vunpack.c.h.b16 %v1767
    %v2441 = vunpack.c.l.b16 %v1768
    %v2442 = vunpack.c.h.b16 %v1768
    %v2443 = vunpack.c.l.b16 %v1769
    %v2444 = vunpack.c.h.b16 %v1769
    %v2445 = vunpack.c.l.b16 %v1770
    %v2446 = vunpack.c.h.b16 %v1770
    %v2447 = vunpack.c.l.b16 %v1771
    %v2448 = vunpack.c.h.b16 %v1771
    %v2449 = vunpack.c.l.b16 %v1772
    %v2450 = vunpack.c.h.b16 %v1772
    %v2451 = vunpack.c.l.b16 %v1773
    %v2452 = vunpack.c.h.b16 %v1773
    %v2453 = vunpack.c.l.b16 %v1774
    %v2454 = vunpack.c.h.b16 %v1774
    %v2455 = vunpack.c.l.b16 %v1775
    %v2456 = vunpack.c.h.b16 %v1775
    %v2457 = vunpack.c.l.b16 %v1776
    %v2458 = vunpack.c.h.b16 %v1776
    %v2459 = vunpack.c.l.b16 %v1777
    %v2460 = vunpack.c.h.b16 %v1777
    %v2461 = vunpack.c.l.b16 %v1778
    %v2462 = vunpack.c.h.b16 %v1778
    %v2463 = vunpack.c.l.b16 %v1779
    %v2464 = vunpack.c.h.b16 %v1779
    %v2465 = vunpack.c.l.b16 %v1780
    %v2466 = vunpack.c.h.b16 %v1780
    %v2467 = vunpack.c.l.b16 %v1781
    %v2468 = vunpack.c.h.b16 %v1781
    %v2469 = vunpack.c.l.b16 %v1782
    %v2470 = vunpack.c.h.b16 %v1782
    %v2471 = vunpack.c.l.b16 %v1783
    %v2472 = vunpack.c.h.b16 %v1783
    %v2473 = vunpack.c.l.b16 %v1784
    %v2474 = vunpack.c.h.b16 %v1784
    %v2475 = vunpack.c.l.b16 %v1785
    %v2476 = vunpack.c.h.b16 %v1785
    %v2477 = vunpack.c.l.b16 %v1786
    %v2478 = vunpack.c.h.b16 %v1786
    %v2479 = vunpack.c.l.b16 %v1787
    %v2480 = vunpack.c.h.b16 %v1787
    %v2481 = vunpack.c.l.b16 %v1788
    %v2482 = vunpack.c.h.b16 %v1788
    %v2483 = vunpack.c.l.b16 %v1789
    %v2484 = vunpack.c.h.b16 %v1789
    %v2485 = vunpack.c.l.b16 %v1790
    %v2486 = vunpack.c.h.b16 %v1790
    %v2487 = vunpack.c.l.b16 %v1791
    %v2488 = vunpack.c.h.b16 %v1791
    %v2489 = vunpack.c.l.b16 %v1792
    %v2490 = vunpack.c.h.b16 %v1792
    %v2491 = vunpack.c.l.b16 %v1793
    %v2492 = vunpack.c.h.b16 %v1793
    %v2493 = vunpack.c.l.b16 %v1794
    %v2494 = vunpack.c.h.b16 %v1794
    %v2495 = vunpack.c.l.b16 %v1795
    %v2496 = vunpack.c.h.b16 %v1795
    %v2497 = vunpack.c.l.b16 %v1796
    %v2498 = vunpack.c.h.b16 %v1796
    %v2499 = vunpack.c.l.b16 %v1797
    %v2500 = vunpack.c.h.b16 %v1797
    %v2501 = vunpack.c.l.b16 %v1798
    %v2502 = vunpack.c.h.b16 %v1798
    %v2503 = vunpack.c.l.b16 %v1799
    %v2504 = vunpack.c.h.b16 %v1799
    %v2505 = vunpack.c.l.b16 %v1800
    %v2506 = vunpack.c.h.b16 %v1800
    %v2507 = vunpack.c.l.b16 %v1801
    %v2508 = vunpack.c.h.b16 %v1801
    %v2509 = vunpack.c.l.b16 %v1802
    %v2510 = vunpack.c.h.b16 %v1802
    %v2511 = vunpack.c.l.b16 %v1803
    %v2512 = vunpack.c.h.b16 %v1803
    %v2513 = vunpack.c.l.b16 %v1804
    %v2514 = vunpack.c.h.b16 %v1804
    %v2515 = vunpack.c.l.b16 %v1805
    %v2516 = vunpack.c.h.b16 %v1805
    %v2517 = vunpack.c.l.b16 %v1806
    %v2518 = vunpack.c.h.b16 %v1806
    %v2519 = vunpack.c.l.b16 %v1807
    %v2520 = vunpack.c.h.b16 %v1807
    %v2521 = vunpack.c.l.b16 %v1808
    %v2522 = vunpack.c.h.b16 %v1808
    %v2523 = vunpack.c.l.b16 %v1809
    %v2524 = vunpack.c.h.b16 %v1809
    %v2525 = vunpack.c.l.b16 %v1810
    %v2526 = vunpack.c.h.b16 %v1810
    %v2527 = vunpack.c.l.b16 %v1811
    %v2528 = vunpack.c.h.b16 %v1811
    %v2529 = vunpack.c.l.b16 %v1812
    %v2530 = vunpack.c.h.b16 %v1812
    %v2531 = vunpack.c.l.b16 %v1813
    %v2532 = vunpack.c.h.b16 %v1813
    %v2533 = vunpack.c.l.b16 %v1814
    %v2534 = vunpack.c.h.b16 %v1814
    %v2535 = vunpack.c.l.b16 %v1815
    %v2536 = vunpack.c.h.b16 %v1815
    %v2537 = vunpack.c.l.b16 %v1816
    %v2538 = vunpack.c.h.b16 %v1816
    %v2539 = vunpack.c.l.b16 %v1817
    %v2540 = vunpack.c.h.b16 %v1817
    %v2541 = vunpack.c.l.b16 %v1818
    %v2542 = vunpack.c.h.b16 %v1818
    %v2543 = vunpack.c.l.b16 %v1819
    %v2544 = vunpack.c.h.b16 %v1819
    %v2545 = vunpack.c.l.b16 %v1820
    %v2546 = vunpack.c.h.b16 %v1820
    %v2547 = vunpack.c.l.b16 %v1821
    %v2548 = vunpack.c.h.b16 %v1821
    %v2549 = vunpack.c.l.b16 %v1822
    %v2550 = vunpack.c.h.b16 %v1822
    %v2551 = vunpack.c.l.b16 %v1823
    %v2552 = vunpack.c.h.b16 %v1823
    %v2553 = vunpack.c.l.b16 %v1824
    %v2554 = vunpack.c.h.b16 %v1824
    %v2555 = vunpack.c.l.b16 %v1825
    %v2556 = vunpack.c.h.b16 %v1825
    %v2557 = vunpack.c.l.b16 %v1826
    %v2558 = vunpack.c.h.b16 %v1826
    %v2559 = vunpack.c.l.b16 %v1827
    %v2560 = vunpack.c.h.b16 %v1827
    %v2561 = vunpack.c.l.b16 %v1828
    %v2562 = vunpack.c.h.b16 %v1828
    %v2563 = vunpack.c.l.b16 %v1829
    %v2564 = vunpack.c.h.b16 %v1829
    %v2565 = vunpack.c.l.b16 %v1830
    %v2566 = vunpack.c.h.b16 %v1830
    %v2567 = vunpack.c.l.b16 %v1831
    %v2568 = vunpack.c.h.b16 %v1831
    %v2569 = vunpack.c.l.b16 %v1832
    %v2570 = vunpack.c.h.b16 %v1832
    %v2571 = vunpack.c.l.b16 %v1833
    %v2572 = vunpack.c.h.b16 %v1833
    %v2573 = vunpack.c.l.b16 %v1834
    %v2574 = vunpack.c.h.b16 %v1834
    %v2575 = vunpack.c.l.b16 %v1835
    %v2576 = vunpack.c.h.b16 %v1835
    %v2577 = vunpack.c.l.b16 %v1836
    %v2578 = vunpack.c.h.b16 %v1836
    %v2579 = vunpack.c.l.b16 %v1837
    %v2580 = vunpack.c.h.b16 %v1837
    %v2581 = vunpack.c.l.b16 %v1838
    %v2582 = vunpack.c.h.b16 %v1838
    %v2583 = vunpack.c.l.b16 %v1839
    %v2584 = vunpack.c.h.b16 %v1839
    %v2585 = vunpack.c.l.b16 %v1840
    %v2586 = vunpack.c.h.b16 %v1840
    %v2587 = vunpack.c.l.b16 %v1841
    %v2588 = vunpack.c.h.b16 %v1841
    %v2589 = vunpack.c.l.b16 %v1842
    %v2590 = vunpack.c.h.b16 %v1842
    %v2591 = vunpack.c.l.b16 %v1843
    %v2592 = vunpack.c.h.b16 %v1843
    %v2593 = vunpack.c.l.b16 %v1844
    %v2594 = vunpack.c.h.b16 %v1844
    %v2595 = vunpack.c.l.b16 %v1845
    %v2596 = vunpack.c.h.b16 %v1845
    %v2597 = vunpack.c.l.b16 %v1846
    %v2598 = vunpack.c.h.b16 %v1846
    %v2599 = vunpack.c.l.b16 %v1847
    %v2600 = vunpack.c.h.b16 %v1847
    %v2601 = vunpack.c.l.b16 %v1848
    %v2602 = vunpack.c.h.b16 %v1848
    %v2603 = vunpack.c.l.b16 %v1849
    %v2604 = vunpack.c.h.b16 %v1849
    %v2605 = vunpack.c.l.b16 %v1850
    %v2606 = vunpack.c.h.b16 %v1850
    %v2607 = vunpack.c.l.b16 %v1851
    %v2608 = vunpack.c.h.b16 %v1851
    %v2609 = vunpack.c.l.b16 %v1852
    %v2610 = vunpack.c.h.b16 %v1852
    %v2611 = vunpack.c.l.b16 %v1853
    %v2612 = vunpack.c.h.b16 %v1853
    %v2613 = vunpack.c.l.b16 %v1854
    %v2614 = vunpack.c.h.b16 %v1854
    %v2615 = vunpack.c.l.b16 %v1855
    %v2616 = vunpack.c.h.b16 %v1855
    %v2617 = vunpack.c.l.b16 %v1856
    %v2618 = vunpack.c.h.b16 %v1856
    %v2619 = vunpack.c.l.b16 %v1857
    %v2620 = vunpack.c.h.b16 %v1857
    %v2621 = vunpack.c.l.b16 %v1858
    %v2622 = vunpack.c.h.b16 %v1858
    %v2623 = vunpack.c.l.b16 %v1859
    %v2624 = vunpack.c.h.b16 %v1859
    %v2625 = vunpack.c.l.b16 %v1860
    %v2626 = vunpack.c.h.b16 %v1860
    %v2627 = vunpack.c.l.b16 %v1861
    %v2628 = vunpack.c.h.b16 %v1861
    %v2629 = vunpack.c.l.b16 %v1862
    %v2630 = vunpack.c.h.b16 %v1862
    %v2631 = vunpack.c.l.b16 %v1863
    %v2632 = vunpack.c.h.b16 %v1863
    %v2633 = vunpack.c.l.b16 %v1864
    %v2634 = vunpack.c.h.b16 %v1864
    %v2635 = vunpack.c.l.b16 %v1865
    %v2636 = vunpack.c.h.b16 %v1865
    %v2637 = vunpack.c.l.b16 %v1866
    %v2638 = vunpack.c.h.b16 %v1866
    %v2639 = vunpack.c.l.b16 %v1867
    %v2640 = vunpack.c.h.b16 %v1867
    %v2641 = vunpack.c.l.b16 %v1868
    %v2642 = vunpack.c.h.b16 %v1868
    %v2643 = vunpack.c.l.b16 %v1869
    %v2644 = vunpack.c.h.b16 %v1869
    %v2645 = vunpack.c.l.b16 %v1870
    %v2646 = vunpack.c.h.b16 %v1870
    %v2647 = vunpack.c.l.b16 %v1871
    %v2648 = vunpack.c.h.b16 %v1871
    %v2649 = vunpack.c.l.b16 %v1872
    %v2650 = vunpack.c.h.b16 %v1872
    %v2651 = vunpack.c.l.b16 %v1873
    %v2652 = vunpack.c.h.b16 %v1873
    %v2653 = vunpack.c.l.b16 %v1874
    %v2654 = vunpack.c.h.b16 %v1874
    %v2655 = vunpack.c.l.b16 %v1875
    %v2656 = vunpack.c.h.b16 %v1875
    %v2657 = vunpack.c.l.b16 %v1876
    %v2658 = vunpack.c.h.b16 %v1876
    %v2659 = vunpack.c.l.b16 %v1877
    %v2660 = vunpack.c.h.b16 %v1877
    %v2661 = vunpack.c.l.b16 %v1878
    %v2662 = vunpack.c.h.b16 %v1878
    %v2663 = vunpack.c.l.b16 %v1879
    %v2664 = vunpack.c.h.b16 %v1879
    %v2665 = vunpack.c.l.b16 %v1880
    %v2666 = vunpack.c.h.b16 %v1880
    %v2667 = vunpack.c.l.b16 %v1881
    %v2668 = vunpack.c.h.b16 %v1881
    %v2669 = vunpack.c.l.b16 %v1882
    %v2670 = vunpack.c.h.b16 %v1882
    %v2671 = vunpack.c.l.b16 %v1883
    %v2672 = vunpack.c.h.b16 %v1883
    %v2673 = vunpack.c.l.b16 %v1884
    %v2674 = vunpack.c.h.b16 %v1884
    %v2675 = vunpack.c.l.b16 %v1885
    %v2676 = vunpack.c.h.b16 %v1885
    %v2677 = vunpack.c.l.b16 %v1886
    %v2678 = vunpack.c.h.b16 %v1886
    %v2679 = vunpack.c.l.b16 %v1887
    %v2680 = vunpack.c.h.b16 %v1887
    %v2681 = vunpack.c.l.b16 %v1888
    %v2682 = vunpack.c.h.b16 %v1888
    %v2683 = vunpack.c.l.b16 %v1889
    %v2684 = vunpack.c.h.b16 %v1889
    %v2685 = vunpack.c.l.b16 %v1890
    %v2686 = vunpack.c.h.b16 %v1890
    %v2687 = vunpack.c.l.b16 %v1891
    %v2688 = vunpack.c.h.b16 %v1891
    %v2689 = vunpack.c.l.b16 %v1892
    %v2690 = vunpack.c.h.b16 %v1892
    %v2691 = vunpack.c.l.b16 %v1893
    %v2692 = vunpack.c.h.b16 %v1893
    %v2693 = vunpack.c.l.b16 %v1894
    %v2694 = vunpack.c.h.b16 %v1894
    %v2695 = vunpack.c.l.b16 %v1895
    %v2696 = vunpack.c.h.b16 %v1895
    %v2697 = vunpack.c.l.b16 %v1896
    %v2698 = vunpack.c.h.b16 %v1896
    %v2699 = vunpack.c.l.b16 %v1897
    %v2700 = vunpack.c.h.b16 %v1897
    %v2701 = vunpack.c.l.b16 %v1898
    %v2702 = vunpack.c.h.b16 %v1898
    %v2703 = vunpack.c.l.b16 %v1899
    %v2704 = vunpack.c.h.b16 %v1899
    %v2705 = vunpack.c.l.b16 %v1900
    %v2706 = vunpack.c.h.b16 %v1900
    %v2707 = vunpack.c.l.b16 %v1901
    %v2708 = vunpack.c.h.b16 %v1901
    %v2709 = vunpack.c.l.b16 %v1902
    %v2710 = vunpack.c.h.b16 %v1902
    %v2711 = vunpack.c.l.b16 %v1903
    %v2712 = vunpack.c.h.b16 %v1903
    %v2713 = vunpack.c.l.b16 %v1904
    %v2714 = vunpack.c.h.b16 %v1904
    %v2715 = vunpack.c.l.b16 %v1905
    %v2716 = vunpack.c.h.b16 %v1905
    %v2717 = vunpack.c.l.b16 %v1906
    %v2718 = vunpack.c.h.b16 %v1906
    %v2719 = vunpack.c.l.b16 %v1907
    %v2720 = vunpack.c.h.b16 %v1907
    %v2721 = vunpack.c.l.b16 %v1908
    %v2722 = vunpack.c.h.b16 %v1908
    %v2723 = vunpack.c.l.b16 %v1909
    %v2724 = vunpack.c.h.b16 %v1909
    %v2725 = vunpack.c.l.b16 %v1910
    %v2726 = vunpack.c.h.b16 %v1910
    %v2727 = vunpack.c.l.b16 %v1911
    %v2728 = vunpack.c.h.b16 %v1911
    %v2729 = vunpack.c.l.b16 %v1912
    %v2730 = vunpack.c.h.b16 %v1912
    %v2731 = vunpack.c.l.b16 %v1913
    %v2732 = vunpack.c.h.b16 %v1913
    %v2733 = vunpack.c.l.b16 %v1914
    %v2734 = vunpack.c.h.b16 %v1914
    %v2735 = vunpack.c.l.b16 %v1915
    %v2736 = vunpack.c.h.b16 %v1915
    %v2737 = vunpack.c.l.b16 %v1916
    %v2738 = vunpack.c.h.b16 %v1916
    %v2739 = vunpack.c.l.b16 %v1917
    %v2740 = vunpack.c.h.b16 %v1917
    %v2741 = vunpack.c.l.b16 %v1918
    %v2742 = vunpack.c.h.b16 %v1918
    %v2743 = vunpack.c.l.b16 %v1919
    %v2744 = vunpack.c.h.b16 %v1919
    %v2745 = vunpack.c.l.b16 %v1920
    %v2746 = vunpack.c.h.b16 %v1920
    %v2747 = vunpack.c.l.b16 %v1921
    %v2748 = vunpack.c.h.b16 %v1921
    %v2749 = vunpack.c.l.b16 %v1922
    %v2750 = vunpack.c.h.b16 %v1922
    %v2751 = vunpack.c.l.b16 %v1923
    %v2752 = vunpack.c.h.b16 %v1923
    %v2753 = vunpack.c.l.b16 %v1924
    %v2754 = vunpack.c.h.b16 %v1924
    %v2755 = vunpack.c.l.b16 %v1925
    %v2756 = vunpack.c.h.b16 %v1925
    %v2757 = vunpack.c.l.b16 %v1926
    %v2758 = vunpack.c.h.b16 %v1926
    %v2759 = vunpack.c.l.b16 %v1927
    %v2760 = vunpack.c.h.b16 %v1927
    %v2761 = vunpack.c.l.b16 %v1928
    %v2762 = vunpack.c.h.b16 %v1928
    %v2763 = vunpack.c.l.b16 %v1929
    %v2764 = vunpack.c.h.b16 %v1929
    %v2765 = vunpack.c.l.b16 %v1930
    %v2766 = vunpack.c.h.b16 %v1930
    %v2767 = vunpack.c.l.b16 %v1931
    %v2768 = vunpack.c.h.b16 %v1931
    %v2769 = vunpack.c.l.b16 %v1932
    %v2770 = vunpack.c.h.b16 %v1932
    %v2771 = vunpack.c.l.b16 %v1933
    %v2772 = vunpack.c.h.b16 %v1933
    %v2773 = vunpack.c.l.b16 %v1934
    %v2774 = vunpack.c.h.b16 %v1934
    %v2775 = vunpack.c.l.b16 %v1935
    %v2776 = vunpack.c.h.b16 %v1935
    %v2777 = vunpack.c.l.b16 %v1936
    %v2778 = vunpack.c.h.b16 %v1936
    %v2779 = vunpack.c.l.b16 %v1937
    %v2780 = vunpack.c.h.b16 %v1937
    %v2781 = vunpack.c.l.b16 %v1938
    %v2782 = vunpack.c.h.b16 %v1938
    %v2783 = vunpack.c.l.b16 %v1939
    %v2784 = vunpack.c.h.b16 %v1939
    %v2785 = vunpack.c.l.b16 %v1940
    %v2786 = vunpack.c.h.b16 %v1940
    %v2787 = vunpack.c.l.b16 %v1941
    %v2788 = vunpack.c.h.b16 %v1941
    %v2789 = vunpack.c.l.b16 %v1942
    %v2790 = vunpack.c.h.b16 %v1942
    %v2791 = vunpack.c.l.b16 %v1943
    %v2792 = vunpack.c.h.b16 %v1943
    %v2793 = vunpack.c.l.b16 %v1944
    %v2794 = vunpack.c.h.b16 %v1944
    %v2795 = vunpack.c.l.b16 %v1945
    %v2796 = vunpack.c.h.b16 %v1945
    %v2797 = vunpack.c.l.b16 %v1946
    %v2798 = vunpack.c.h.b16 %v1946
    %v2799 = vunpack.c.l.b16 %v1947
    %v2800 = vunpack.c.h.b16 %v1947
    %v2801 = vunpack.c.l.b16 %v1948
    %v2802 = vunpack.c.h.b16 %v1948
    %v2803 = vunpack.c.l.b16 %v1949
    %v2804 = vunpack.c.h.b16 %v1949
    %v2805 = vunpack.c.l.b16 %v1950
    %v2806 = vunpack.c.h.b16 %v1950
    %v2807 = vunpack.c.l.b16 %v1951
    %v2808 = vunpack.c.h.b16 %v1951
    %v2809 = vunpack.c.l.b16 %v1952
    %v2810 = vunpack.c.h.b16 %v1952
    %v2811 = vunpack.c.l.b16 %v1953
    %v2812 = vunpack.c.h.b16 %v1953
    %v2813 = vunpack.c.l.b16 %v1954
    %v2814 = vunpack.c.h.b16 %v1954
    %v2815 = vunpack.c.l.b16 %v1955
    %v2816 = vunpack.c.h.b16 %v1955
    %v2817 = vunpack.c.l.b16 %v1956
    %v2818 = vunpack.c.h.b16 %v1956
    %v2819 = vunpack.c.l.b16 %v1957
    %v2820 = vunpack.c.h.b16 %v1957
    %v2821 = vunpack.c.l.b16 %v1958
    %v2822 = vunpack.c.h.b16 %v1958
    %v2823 = vunpack.c.l.b16 %v1959
    %v2824 = vunpack.c.h.b16 %v1959
    %v2825 = vunpack.c.l.b16 %v1960
    %v2826 = vunpack.c.h.b16 %v1960
    %v2827 = vunpack.c.l.b16 %v1961
    %v2828 = vunpack.c.h.b16 %v1961
    %v2829 = vunpack.c.l.b16 %v1962
    %v2830 = vunpack.c.h.b16 %v1962
    %v2831 = vunpack.c.l.b16 %v1963
    %v2832 = vunpack.c.h.b16 %v1963
    %v2833 = vunpack.c.l.b16 %v1964
    %v2834 = vunpack.c.h.b16 %v1964
    %v2835 = vunpack.c.l.b16 %v1965
    %v2836 = vunpack.c.h.b16 %v1965
    %v2837 = vunpack.c.l.b16 %v1966
    %v2838 = vunpack.c.h.b16 %v1966
    %v2839 = vunpack.c.l.b16 %v1967
    %v2840 = vunpack.c.h.b16 %v1967
    %v2841 = vunpack.c.l.b16 %v1968
    %v2842 = vunpack.c.h.b16 %v1968
    %v2843 = vunpack.c.l.b16 %v1969
    %v2844 = vunpack.c.h.b16 %v1969
    %v2845 = vunpack.c.l.b16 %v1970
    %v2846 = vunpack.c.h.b16 %v1970
    %v2847 = vunpack.c.l.b16 %v1971
    %v2848 = vunpack.c.h.b16 %v1971
    %v2849 = vunpack.c.l.b16 %v1972
    %v2850 = vunpack.c.h.b16 %v1972
    %v2851 = vunpack.c.l.b16 %v1973
    %v2852 = vunpack.c.h.b16 %v1973
    %v2853 = vunpack.c.l.b16 %v1974
    %v2854 = vunpack.c.h.b16 %v1974
    %v2855 = vunpack.c.l.b16 %v1975
    %v2856 = vunpack.c.h.b16 %v1975
    %v2857 = vunpack.c.l.b16 %v1976
    %v2858 = vunpack.c.h.b16 %v1976
    %v2859 = vunpack.c.l.b16 %v1977
    %v2860 = vunpack.c.h.b16 %v1977
    %v2861 = vunpack.c.l.b16 %v1978
    %v2862 = vunpack.c.h.b16 %v1978
    %v2863 = vunpack.c.l.b16 %v1979
    %v2864 = vunpack.c.h.b16 %v1979
    %v2865 = vunpack.c.l.b16 %v1980
    %v2866 = vunpack.c.h.b16 %v1980
    %v2867 = vunpack.c.l.b16 %v1981
    %v2868 = vunpack.c.h.b16 %v1981
    %v2869 = vunpack.c.l.b16 %v1982
    %v2870 = vunpack.c.h.b16 %v1982
    %v2871 = vunpack.c.l.b16 %v1983
    %v2872 = vunpack.c.h.b16 %v1983
    %v2873 = vunpack.c.l.b16 %v1984
    %v2874 = vunpack.c.h.b16 %v1984
    %v2875 = vunpack.c.l.b16 %v1985
    %v2876 = vunpack.c.h.b16 %v1985
    %v2877 = vunpack.c.l.b16 %v1986
    %v2878 = vunpack.c.h.b16 %v1986
    %v2879 = vunpack.c.l.b16 %v1987
    %v2880 = vunpack.c.h.b16 %v1987
    %v2881 = vunpack.c.l.b16 %v1988
    %v2882 = vunpack.c.h.b16 %v1988
    %v2883 = vunpack.c.l.b16 %v1989
    %v2884 = vunpack.c.h.b16 %v1989
    %v2885 = vunpack.c.l.b16 %v1990
    %v2886 = vunpack.c.h.b16 %v1990
    %v2887 = vpack.c.b16 %v2317, %v2311
    %v2888 = vpack.c.b16 %v2318, %v2312
    %v2889 = vpack.c.b16 %v2319, %v2313
    %v2890 = vpack.c.b16 %v2320, %v2314
    %v2891 = vpack.c.b16 %v2321, %v2315
    %v2892 = vpack.c.b16 %v2322, %v2316
    %v2893 = vpack.c.b16 %v2329, %v2323
    %v2894 = vpack.c.b16 %v2330, %v2324
    %v2895 = vpack.c.b16 %v2331, %v2325
    %v2896 = vpack.c.b16 %v2332, %v2326
    %v2897 = vpack.c.b16 %v2333, %v2327
    %v2898 = vpack.c.b16 %v2334, %v2328
    %v2899 = vpack.c.b16 %v2341, %v2335
    %v2900 = vpack.c.b16 %v2342, %v2336
    %v2901 = vpack.c.b16 %v2343, %v2337
    %v2902 = vpack.c.b16 %v2344, %v2338
    %v2903 = vpack.c.b16 %v2345, %v2339
    %v2904 = vpack.c.b16 %v2346, %v2340
    %v2905 = vpack.c.b16 %v2353, %v2347
    %v2906 = vpack.c.b16 %v2354, %v2348
    %v2907 = vpack.c.b16 %v2355, %v2349
    %v2908 = vpack.c.b16 %v2356, %v2350
    %v2909 = vpack.c.b16 %v2357, %v2351
    %v2910 = vpack.c.b16 %v2358, %v2352
    %v2911 = vpack.c.b16 %v2365, %v2359
    %v2912 = vpack.c.b16 %v2366, %v2360
    %v2913 = vpack.c.b16 %v2367, %v2361
    %v2914 = vpack.c.b16 %v2368, %v2362
    %v2915 = vpack.c.b16 %v2369, %v2363
    %v2916 = vpack.c.b16 %v2370, %v2364
    %v2917 = vpack.c.b16 %v2377, %v2371
    %v2918 = vpack.c.b16 %v2378, %v2372
    %v2919 = vpack.c.b16 %v2379, %v2373
    %v2920 = vpack.c.b16 %v2380, %v2374
    %v2921 = vpack.c.b16 %v2381, %v2375
    %v2922 = vpack.c.b16 %v2382, %v2376
    %v2923 = vpack.c.b16 %v2389, %v2383
    %v2924 = vpack.c.b16 %v2390, %v2384
    %v2925 = vpack.c.b16 %v2391, %v2385
    %v2926 = vpack.c.b16 %v2392, %v2386
    %v2927 = vpack.c.b16 %v2393, %v2387
    %v2928 = vpack.c.b16 %v2394, %v2388
    %v2929 = vpack.c.b16 %v2401, %v2395
    %v2930 = vpack.c.b16 %v2402, %v2396
    %v2931 = vpack.c.b16 %v2403, %v2397
    %v2932 = vpack.c.b16 %v2404, %v2398
    %v2933 = vpack.c.b16 %v2405, %v2399
    %v2934 = vpack.c.b16 %v2406, %v2400
    %v2935 = vpack.c.b16 %v2413, %v2407
    %v2936 = vpack.c.b16 %v2414, %v2408
    %v2937 = vpack.c.b16 %v2415, %v2409
    %v2938 = vpack.c.b16 %v2416, %v2410
    %v2939 = vpack.c.b16 %v2417, %v2411
    %v2940 = vpack.c.b16 %v2418, %v2412
    %v2941 = vpack.c.b16 %v2425, %v2419
    %v2942 = vpack.c.b16 %v2426, %v2420
    %v2943 = vpack.c.b16 %v2427, %v2421
    %v2944 = vpack.c.b16 %v2428, %v2422
    %v2945 = vpack.c.b16 %v2429, %v2423
    %v2946 = vpack.c.b16 %v2430, %v2424
    %v2947 = vpack.c.b16 %v2437, %v2431
    %v2948 = vpack.c.b16 %v2438, %v2432
    %v2949 = vpack.c.b16 %v2439, %v2433
    %v2950 = vpack.c.b16 %v2440, %v2434
    %v2951 = vpack.c.b16 %v2441, %v2435
    %v2952 = vpack.c.b16 %v2442, %v2436
    %v2953 = vpack.c.b16 %v2449, %v2443
    %v2954 = vpack.c.b16 %v2450, %v2444
    %v2955 = vpack.c.b16 %v2451, %v2445
    %v2956 = vpack.c.b16 %v2452, %v2446
    %v2957 = vpack.c.b16 %v2453, %v2447
    %v2958 = vpack.c.b16 %v2454, %v2448
    %v2959 = vpack.c.b16 %v2461, %v2455
    %v2960 = vpack.c.b16 %v2462, %v2456
    %v2961 = vpack.c.b16 %v2463, %v2457
    %v2962 = vpack.c.b16 %v2464, %v2458
    %v2963 = vpack.c.b16 %v2465, %v2459
    %v2964 = vpack.c.b16 %v2466, %v2460
    %v2965 = vpack.c.b16 %v2473, %v2467
    %v2966 = vpack.c.b16 %v2474, %v2468
    %v2967 = vpack.c.b16 %v2475, %v2469
    %v2968 = vpack.c.b16 %v2476, %v2470
    %v2969 = vpack.c.b16 %v2477, %v2471
    %v2970 = vpack.c.b16 %v2478, %v2472
    %v2971 = vpack.c.b16 %v2485, %v2479
    %v2972 = vpack.c.b16 %v2486, %v2480
    %v2973 = vpack.c.b16 %v2487, %v2481
    %v2974 = vpack.c.b16 %v2488, %v2482
    %v2975 = vpack.c.b16 %v2489, %v2483
    %v2976 = vpack.c.b16 %v2490, %v2484
    %v2977 = vpack.c.b16 %v2497, %v2491
    %v2978 = vpack.c.b16 %v2498, %v2492
    %v2979 = vpack.c.b16 %v2499, %v2493
    %v2980 = vpack.c.b16 %v2500, %v2494
    %v2981 = vpack.c.b16 %v2501, %v2495
    %v2982 = vpack.c.b16 %v2502, %v2496
    %v2983 = vpack.c.b16 %v2509, %v2503
    %v2984 = vpack.c.b16 %v2510, %v2504
    %v2985 = vpack.c.b16 %v2511, %v2505
    %v2986 = vpack.c.b16 %v2512, %v2506
    %v2987 = vpack.c.b16 %v2513, %v2507
    %v2988 = vpack.c.b16 %v2514, %v2508
    %v2989 = vpack.c.b16 %v2521, %v2515
    %v2990 = vpack.c.b16 %v2522, %v2516
    %v2991 = vpack.c.b16 %v2523, %v2517
    %v2992 = vpack.c.b16 %v2524, %v2518
    %v2993 = vpack.c.b16 %v2525, %v2519
    %v2994 = vpack.c.b16 %v2526, %v2520
    %v2995 = vpack.c.b16 %v2533, %v2527
    %v2996 = vpack.c.b16 %v2534, %v2528
    %v2997 = vpack.c.b16 %v2535, %v2529
    %v2998 = vpack.c.b16 %v2536, %v2530
    %v2999 = vpack.c.b16 %v2537, %v2531
    %v3000 = vpack.c.b16 %v2538, %v2532
    %v3001 = vpack.c.b16 %v2545, %v2539
    %v3002 = vpack.c.b16 %v2546, %v2540
    %v3003 = vpack.c.b16 %v2547, %v2541
    %v3004 = vpack.c.b16 %v2548, %v2542
    %v3005 = vpack.c.b16 %v2549, %v2543
    %v3006 = vpack.c.b16 %v2550, %v2544
    %v3007 = vpack.c.b16 %v2557, %v2551
    %v3008 = vpack.c.b16 %v2558, %v2552
    %v3009 = vpack.c.b16 %v2559, %v2553
    %v3010 = vpack.c.b16 %v2560, %v2554
    %v3011 = vpack.c.b16 %v2561, %v2555
    %v3012 = vpack.c.b16 %v2562, %v2556
    %v3013 = vpack.c.b16 %v2569, %v2563
    %v3014 = vpack.c.b16 %v2570, %v2564
    %v3015 = vpack.c.b16 %v2571, %v2565
    %v3016 = vpack.c.b16 %v2572, %v2566
    %v3017 = vpack.c.b16 %v2573, %v2567
    %v3018 = vpack.c.b16 %v2574, %v2568
    %v3019 = vpack.c.b16 %v2581, %v2575
    %v3020 = vpack.c.b16 %v2582, %v2576
    %v3021 = vpack.c.b16 %v2583, %v2577
    %v3022 = vpack.c.b16 %v2584, %v2578
    %v3023 = vpack.c.b16 %v2585, %v2579
    %v3024 = vpack.c.b16 %v2586, %v2580
    %v3025 = vpack.c.b16 %v2593, %v2587
    %v3026 = vpack.c.b16 %v2594, %v2588
    %v3027 = vpack.c.b16 %v2595, %v2589
    %v3028 = vpack.c.b16 %v2596, %v2590
    %v3029 = vpack.c.b16 %v2597, %v2591
    %v3030 = vpack.c.b16 %v2598, %v2592
    %v3031 = vpack.c.b16 %v2605, %v2599
    %v3032 = vpack.c.b16 %v2606, %v2600
    %v3033 = vpack.c.b16 %v2607, %v2601
    %v3034 = vpack.c.b16 %v2608, %v2602
    %v3035 = vpack.c.b16 %v2609, %v2603
    %v3036 = vpack.c.b16 %v2610, %v2604
    %v3037 = vpack.c.b16 %v2617, %v2611
    %v3038 = vpack.c.b16 %v2618, %v2612
    %v3039 = vpack.c.b16 %v2619, %v2613
    %v3040 = vpack.c.b16 %v2620, %v2614
    %v3041 = vpack.c.b16 %v2621, %v2615
    %v3042 = vpack.c.b16 %v2622, %v2616
    %v3043 = vpack.c.b16 %v2629, %v2623
    %v3044 = vpack.c.b16 %v2630, %v2624
    %v3045 = vpack.c.b16 %v2631, %v2625
    %v3046 = vpack.c.b16 %v2632, %v2626
    %v3047 = vpack.c.b16 %v2633, %v2627
    %v3048 = vpack.c.b16 %v2634, %v2628
    %v3049 = vpack.c.b16 %v2641, %v2635
    %v3050 = vpack.c.b16 %v2642, %v2636
    %v3051 = vpack.c.b16 %v2643, %v2637
    %v3052 = vpack.c.b16 %v2644, %v2638
    %v3053 = vpack.c.b16 %v2645, %v2639
    %v3054 = vpack.c.b16 %v2646, %v2640
    %v3055 = vpack.c.b16 %v2653, %v2647
    %v3056 = vpack.c.b16 %v2654, %v2648
    %v3057 = vpack.c.b16 %v2655, %v2649
    %v3058 = vpack.c.b16 %v2656, %v2650
    %v3059 = vpack.c.b16 %v2657, %v2651
    %v3060 = vpack.c.b16 %v2658, %v2652
    %v3061 = vpack.c.b16 %v2665, %v2659
    %v3062 = vpack.c.b16 %v2666, %v2660
    %v3063 = vpack.c.b16 %v2667, %v2661
    %v3064 = vpack.c.b16 %v2668, %v2662
    %v3065 = vpack.c.b16 %v2669, %v2663
    %v3066 = vpack.c.b16 %v2670, %v2664
    %v3067 = vpack.c.b16 %v2677, %v2671
    %v3068 = vpack.c.b16 %v2678, %v2672
    %v3069 = vpack.c.b16 %v2679, %v2673
    %v3070 = vpack.c.b16 %v2680, %v2674
    %v3071 = vpack.c.b16 %v2681, %v2675
    %v3072 = vpack.c.b16 %v2682, %v2676
    %v3073 = vpack.c.b16 %v2689, %v2683
    %v3074 = vpack.c.b16 %v2690, %v2684
    %v3075 = vpack.c.b16 %v2691, %v2685
    %v3076 = vpack.c.b16 %v2692, %v2686
    %v3077 = vpack.c.b16 %v2693, %v2687
    %v3078 = vpack.c.b16 %v2694, %v2688
    %v3079 = vpack.c.b16 %v2701, %v2695
    %v3080 = vpack.c.b16 %v2702, %v2696
    %v3081 = vpack.c.b16 %v2703, %v2697
    %v3082 = vpack.c.b16 %v2704, %v2698
    %v3083 = vpack.c.b16 %v2705, %v2699
    %v3084 = vpack.c.b16 %v2706, %v2700
    %v3085 = vpack.c.b16 %v2713, %v2707
    %v3086 = vpack.c.b16 %v2714, %v2708
    %v3087 = vpack.c.b16 %v2715, %v2709
    %v3088 = vpack.c.b16 %v2716, %v2710
    %v3089 = vpack.c.b16 %v2717, %v2711
    %v3090 = vpack.c.b16 %v2718, %v2712
    %v3091 = vpack.c.b16 %v2725, %v2719
    %v3092 = vpack.c.b16 %v2726, %v2720
    %v3093 = vpack.c.b16 %v2727, %v2721
    %v3094 = vpack.c.b16 %v2728, %v2722
    %v3095 = vpack.c.b16 %v2729, %v2723
    %v3096 = vpack.c.b16 %v2730, %v2724
    %v3097 = vpack.c.b16 %v2737, %v2731
    %v3098 = vpack.c.b16 %v2738, %v2732
    %v3099 = vpack.c.b16 %v2739, %v2733
    %v3100 = vpack.c.b16 %v2740, %v2734
    %v3101 = vpack.c.b16 %v2741, %v2735
    %v3102 = vpack.c.b16 %v2742, %v2736
    %v3103 = vpack.c.b16 %v2749, %v2743
    %v3104 = vpack.c.b16 %v2750, %v2744
    %v3105 = vpack.c.b16 %v2751, %v2745
    %v3106 = vpack.c.b16 %v2752, %v2746
    %v3107 = vpack.c.b16 %v2753, %v2747
    %v3108 = vpack.c.b16 %v2754, %v2748
    %v3109 = vpack.c.b16 %v2761, %v2755
    %v3110 = vpack.c.b16 %v2762, %v2756
    %v3111 = vpack.c.b16 %v2763, %v2757
    %v3112 = vpack.c.b16 %v2764, %v2758
    %v3113 = vpack.c.b16 %v2765, %v2759
    %v3114 = vpack.c.b16 %v2766, %v2760
    %v3115 = vpack.c.b16 %v2773, %v2767
    %v3116 = vpack.c.b16 %v2774, %v2768
    %v3117 = vpack.c.b16 %v2775, %v2769
    %v3118 = vpack.c.b16 %v2776, %v2770
    %v3119 = vpack.c.b16 %v2777, %v2771
    %v3120 = vpack.c.b16 %v2778, %v2772
    %v3121 = vpack.c.b16 %v2785, %v2779
    %v3122 = vpack.c.b16 %v2786, %v2780
    %v3123 = vpack.c.b16 %v2787, %v2781
    %v3124 = vpack.c.b16 %v2788, %v2782
    %v3125 = vpack.c.b16 %v2789, %v2783
    %v3126 = vpack.c.b16 %v2790, %v2784
    %v3127 = vpack.c.b16 %v2797, %v2791
    %v3128 = vpack.c.b16 %v2798, %v2792
    %v3129 = vpack.c.b16 %v2799, %v2793
    %v3130 = vpack.c.b16 %v2800, %v2794
    %v3131 = vpack.c.b16 %v2801, %v2795
    %v3132 = vpack.c.b16 %v2802, %v2796
    %v3133 = vpack.c.b16 %v2809, %v2803
    %v3134 = vpack.c.b16 %v2810, %v2804
    %v3135 = vpack.c.b16 %v2811, %v2805
    %v3136 = vpack.c.b16 %v2812, %v2806
    %v3137 = vpack.c.b16 %v2813, %v2807
    %v3138 = vpack.c.b16 %v2814, %v2808
    %v3139 = vpack.c.b16 %v2821, %v2815
    %v3140 = vpack.c.b16 %v2822, %v2816
    %v3141 = vpack.c.b16 %v2823, %v2817
    %v3142 = vpack.c.b16 %v2824, %v2818
    %v3143 = vpack.c.b16 %v2825, %v2819
    %v3144 = vpack.c.b16 %v2826, %v2820
    %v3145 = vpack.c.b16 %v2833, %v2827
    %v3146 = vpack.c.b16 %v2834, %v2828
    %v3147 = vpack.c.b16 %v2835, %v2829
    %v3148 = vpack.c.b16 %v2836, %v2830
    %v3149 = vpack.c.b16 %v2837, %v2831
    %v3150 = vpack.c.b16 %v2838, %v2832
    %v3151 = vpack.c.b16 %v2845, %v2839
    %v3152 = vpack.c.b16 %v2846, %v2840
    %v3153 = vpack.c.b16 %v2847, %v2841
    %v3154 = vpack.c.b16 %v2848, %v2842
    %v3155 = vpack.c.b16 %v2849, %v2843
    %v3156 = vpack.c.b16 %v2850, %v2844
    %v3157 = vpack.c.b16 %v2857, %v2851
    %v3158 = vpack.c.b16 %v2858, %v2852
    %v3159 = vpack.c.b16 %v2859, %v2853
    %v3160 = vpack.c.b16 %v2860, %v2854
    %v3161 = vpack.c.b16 %v2861, %v2855
    %v3162 = vpack.c.b16 %v2862, %v2856
    %v3163 = vpack.c.b16 %v2869, %v2863
    %v3164 = vpack.c.b16 %v2870, %v2864
    %v3165 = vpack.c.b16 %v2871, %v2865
    %v3166 = vpack.c.b16 %v2872, %v2866
    %v3167 = vpack.c.b16 %v2873, %v2867
    %v3168 = vpack.c.b16 %v2874, %v2868
    %v3169 = vpack.c.b16 %v2881, %v2875
    %v3170 = vpack.c.b16 %v2882, %v2876
    %v3171 = vpack.c.b16 %v2883, %v2877
    %v3172 = vpack.c.b16 %v2884, %v2878
    %v3173 = vpack.c.b16 %v2885, %v2879
    %v3174 = vpack.c.b16 %v2886, %v2880
    %3463 = vmatprep.subr.bf16.mxu0 %v2888
    %3464 = vmatpush1.bf16.msra.mxu0 %v2887
    %3465 = vmatprep.subr.bf16.mxu0 %v2894
    %3466 = vmatpush1.bf16.msra.mxu0 %v2893
    %3467 = vmatprep.subr.bf16.mxu0 %v2900
    %3468 = vmatpush1.bf16.msra.mxu0 %v2899
    %3469 = vmatprep.subr.bf16.mxu0 %v2906
    %3470 = vmatpush1.bf16.msra.mxu0 %v2905
    %3471 = vmatprep.subr.bf16.mxu0 %v2912
    %3472 = vmatpush1.bf16.msra.mxu0 %v2911
    %3473 = vmatprep.subr.bf16.mxu0 %v2918
    %3474 = vmatpush1.bf16.msra.mxu0 %v2917
    %3475 = vmatprep.subr.bf16.mxu0 %v2924
    %3476 = vmatpush1.bf16.msra.mxu0 %v2923
    %3477 = vmatprep.subr.bf16.mxu0 %v2930
    %3478 = vmatpush1.bf16.msra.mxu0 %v2929
    %3479 = vmatprep.subr.bf16.mxu0 %v2936
    %3480 = vmatpush1.bf16.msra.mxu0 %v2935
    %3481 = vmatprep.subr.bf16.mxu0 %v2942
    %3482 = vmatpush1.bf16.msra.mxu0 %v2941
    %3483 = vmatprep.subr.bf16.mxu0 %v2948
    %3484 = vmatpush1.bf16.msra.mxu0 %v2947
    %3485 = vmatprep.subr.bf16.mxu0 %v2954
    %3486 = vmatpush1.bf16.msra.mxu0 %v2953
    %3487 = vmatprep.subr.bf16.mxu0 %v2960
    %3488 = vmatpush1.bf16.msra.mxu0 %v2959
    %3489 = vmatprep.subr.bf16.mxu0 %v2966
    %3490 = vmatpush1.bf16.msra.mxu0 %v2965
    %3491 = vmatprep.subr.bf16.mxu0 %v2972
    %3492 = vmatpush1.bf16.msra.mxu0 %v2971
    %3493 = vmatprep.subr.bf16.mxu0 %v2978
    %3494 = vmatpush1.bf16.msra.mxu0 %v2977
    %3495 = vmatprep.mubr.bf16.mxu0 %v1698
    %3496 = vmatmul.mubr.bf16.gmra.mrb[0].mxu0 %v1697
    %v3497 = vpop.f32.mrb[0].mxu0
    %v3498 = vadd.f32 %v1996, %v3497
    %v3499 = vpop.f32.mrb[0].mxu0
    %v3500 = vadd.f32 %v2000, %v3499
    %v3501 = vpop.f32.mrb[0].mxu0
    %v3502 = vpop.f32.mrb[0].mxu0
    %3503 = vdwg.mxu0
    %3504 = vmatprep.subr.bf16.mxu0 %v2984
    %3505 = vmatpush1.bf16.msra.mxu0 %v2983
    %3506 = vmatprep.subr.bf16.mxu0 %v2990
    %3507 = vmatpush1.bf16.msra.mxu0 %v2989
    %3508 = vmatprep.subr.bf16.mxu0 %v2996
    %3509 = vmatpush1.bf16.msra.mxu0 %v2995
    %3510 = vmatprep.subr.bf16.mxu0 %v3002
    %3511 = vmatpush1.bf16.msra.mxu0 %v3001
    %3512 = vmatprep.subr.bf16.mxu0 %v3008
    %3513 = vmatpush1.bf16.msra.mxu0 %v3007
    %3514 = vmatprep.subr.bf16.mxu0 %v3014
    %3515 = vmatpush1.bf16.msra.mxu0 %v3013
    %3516 = vmatprep.subr.bf16.mxu0 %v3020
    %3517 = vmatpush1.bf16.msra.mxu0 %v3019
    %3518 = vmatprep.subr.bf16.mxu0 %v3026
    %3519 = vmatpush1.bf16.msra.mxu0 %v3025
    %3520 = vmatprep.subr.bf16.mxu0 %v3032
    %3521 = vmatpush1.bf16.msra.mxu0 %v3031
    %3522 = vmatprep.subr.bf16.mxu0 %v3038
    %3523 = vmatpush1.bf16.msra.mxu0 %v3037
    %3524 = vmatprep.subr.bf16.mxu0 %v3044
    %3525 = vmatpush1.bf16.msra.mxu0 %v3043
    %3526 = vmatprep.subr.bf16.mxu0 %v3050
    %3527 = vmatpush1.bf16.msra.mxu0 %v3049
    %3528 = vmatprep.subr.bf16.mxu0 %v3056
    %3529 = vmatpush1.bf16.msra.mxu0 %v3055
    %3530 = vmatprep.subr.bf16.mxu0 %v3062
    %3531 = vmatpush1.bf16.msra.mxu0 %v3061
    %3532 = vmatprep.subr.bf16.mxu0 %v3068
    %3533 = vmatpush1.bf16.msra.mxu0 %v3067
    %3534 = vmatprep.subr.bf16.mxu0 %v3074
    %3535 = vmatpush1.bf16.msra.mxu0 %v3073
    %3536 = vmatprep.mubr.bf16.mxu0 %v1700
    %3537 = vmatmul.mubr.bf16.gmra.mrb[0].mxu0 %v1699
    %v3538 = vpop.f32.mrb[0].mxu0
    %v3539 = vadd.f32 %v3498, %v3538
    %v3540 = vpop.f32.mrb[0].mxu0
    %v3541 = vadd.f32 %v3500, %v3540
    %v3542 = vpop.f32.mrb[0].mxu0
    %v3543 = vpop.f32.mrb[0].mxu0
    %3544 = vdwg.mxu0
    %3545 = vmatprep.subr.bf16.mxu0 %v3080
    %3546 = vmatpush1.bf16.msra.mxu0 %v3079
    %3547 = vmatprep.subr.bf16.mxu0 %v3086
    %3548 = vmatpush1.bf16.msra.mxu0 %v3085
    %3549 = vmatprep.subr.bf16.mxu0 %v3092
    %3550 = vmatpush1.bf16.msra.mxu0 %v3091
    %3551 = vmatprep.subr.bf16.mxu0 %v3098
    %3552 = vmatpush1.bf16.msra.mxu0 %v3097
    %3553 = vmatprep.subr.bf16.mxu0 %v3104
    %3554 = vmatpush1.bf16.msra.mxu0 %v3103
    %3555 = vmatprep.subr.bf16.mxu0 %v3110
    %3556 = vmatpush1.bf16.msra.mxu0 %v3109
    %3557 = vmatprep.subr.bf16.mxu0 %v3116
    %3558 = vmatpush1.bf16.msra.mxu0 %v3115
    %3559 = vmatprep.subr.bf16.mxu0 %v3122
    %3560 = vmatpush1.bf16.msra.mxu0 %v3121
    %3561 = vmatprep.subr.bf16.mxu0 %v3128
    %3562 = vmatpush1.bf16.msra.mxu0 %v3127
    %3563 = vmatprep.subr.bf16.mxu0 %v3134
    %3564 = vmatpush1.bf16.msra.mxu0 %v3133
    %3565 = vmatprep.subr.bf16.mxu0 %v3140
    %3566 = vmatpush1.bf16.msra.mxu0 %v3139
    %3567 = vmatprep.subr.bf16.mxu0 %v3146
    %3568 = vmatpush1.bf16.msra.mxu0 %v3145
    %3569 = vmatprep.subr.bf16.mxu0 %v3152
    %3570 = vmatpush1.bf16.msra.mxu0 %v3151
    %3571 = vmatprep.subr.bf16.mxu0 %v3158
    %3572 = vmatpush1.bf16.msra.mxu0 %v3157
    %3573 = vmatprep.subr.bf16.mxu0 %v3164
    %3574 = vmatpush1.bf16.msra.mxu0 %v3163
    %3575 = vmatprep.subr.bf16.mxu0 %v3170
    %3576 = vmatpush1.bf16.msra.mxu0 %v3169
    %3577 = vmatprep.mubr.bf16.mxu0 %v1702
    %3578 = vmatmul.mubr.bf16.gmra.mrb[0].mxu0 %v1701
    %v3579 = vpop.f32.mrb[0].mxu0
    %v3580 = vadd.f32 %v3539, %v3579
    %v3581 = vpop.f32.mrb[0].mxu0
    %v3582 = vadd.f32 %v3541, %v3581
    %v3583 = vpop.f32.mrb[0].mxu0
    %v3584 = vpop.f32.mrb[0].mxu0
    %3585 = vdwg.mxu0
    %3586 = vmatprep.subr.bf16.mxu0 %v2890
    %3587 = vmatpush1.bf16.msra.mxu0 %v2889
    %3588 = vmatprep.subr.bf16.mxu0 %v2896
    %3589 = vmatpush1.bf16.msra.mxu0 %v2895
    %3590 = vmatprep.subr.bf16.mxu0 %v2902
    %3591 = vmatpush1.bf16.msra.mxu0 %v2901
    %3592 = vmatprep.subr.bf16.mxu0 %v2908
    %3593 = vmatpush1.bf16.msra.mxu0 %v2907
    %3594 = vmatprep.subr.bf16.mxu0 %v2914
    %3595 = vmatpush1.bf16.msra.mxu0 %v2913
    %3596 = vmatprep.subr.bf16.mxu0 %v2920
    %3597 = vmatpush1.bf16.msra.mxu0 %v2919
    %3598 = vmatprep.subr.bf16.mxu0 %v2926
    %3599 = vmatpush1.bf16.msra.mxu0 %v2925
    %3600 = vmatprep.subr.bf16.mxu0 %v2932
    %3601 = vmatpush1.bf16.msra.mxu0 %v2931
    %3602 = vmatprep.subr.bf16.mxu0 %v2938
    %3603 = vmatpush1.bf16.msra.mxu0 %v2937
    %3604 = vmatprep.subr.bf16.mxu0 %v2944
    %3605 = vmatpush1.bf16.msra.mxu0 %v2943
    %3606 = vmatprep.subr.bf16.mxu0 %v2950
    %3607 = vmatpush1.bf16.msra.mxu0 %v2949
    %3608 = vmatprep.subr.bf16.mxu0 %v2956
    %3609 = vmatpush1.bf16.msra.mxu0 %v2955
    %3610 = vmatprep.subr.bf16.mxu0 %v2962
    %3611 = vmatpush1.bf16.msra.mxu0 %v2961
    %3612 = vmatprep.subr.bf16.mxu0 %v2968
    %3613 = vmatpush1.bf16.msra.mxu0 %v2967
    %3614 = vmatprep.subr.bf16.mxu0 %v2974
    %3615 = vmatpush1.bf16.msra.mxu0 %v2973
    %3616 = vmatprep.subr.bf16.mxu0 %v2980
    %3617 = vmatpush1.bf16.msra.mxu0 %v2979
    %3618 = vmatprep.mubr.bf16.mxu0 %v1698
    %3619 = vmatmul.mubr.bf16.gmra.mrb[0].mxu0 %v1697
    %v3620 = vpop.f32.mrb[0].mxu0
    %v3621 = vadd.f32 %v2004, %v3620
    %v3622 = vpop.f32.mrb[0].mxu0
    %v3623 = vadd.f32 %v2008, %v3622
    %v3624 = vpop.f32.mrb[0].mxu0
    %v3625 = vpop.f32.mrb[0].mxu0
    %3626 = vdwg.mxu0
    %3627 = vmatprep.subr.bf16.mxu0 %v2986
    %3628 = vmatpush1.bf16.msra.mxu0 %v2985
    %3629 = vmatprep.subr.bf16.mxu0 %v2992
    %3630 = vmatpush1.bf16.msra.mxu0 %v2991
    %3631 = vmatprep.subr.bf16.mxu0 %v2998
    %3632 = vmatpush1.bf16.msra.mxu0 %v2997
    %3633 = vmatprep.subr.bf16.mxu0 %v3004
    %3634 = vmatpush1.bf16.msra.mxu0 %v3003
    %3635 = vmatprep.subr.bf16.mxu0 %v3010
    %3636 = vmatpush1.bf16.msra.mxu0 %v3009
    %3637 = vmatprep.subr.bf16.mxu0 %v3016
    %3638 = vmatpush1.bf16.msra.mxu0 %v3015
    %3639 = vmatprep.subr.bf16.mxu0 %v3022
    %3640 = vmatpush1.bf16.msra.mxu0 %v3021
    %3641 = vmatprep.subr.bf16.mxu0 %v3028
    %3642 = vmatpush1.bf16.msra.mxu0 %v3027
    %3643 = vmatprep.subr.bf16.mxu0 %v3034
    %3644 = vmatpush1.bf16.msra.mxu0 %v3033
    %3645 = vmatprep.subr.bf16.mxu0 %v3040
    %3646 = vmatpush1.bf16.msra.mxu0 %v3039
    %3647 = vmatprep.subr.bf16.mxu0 %v3046
    %3648 = vmatpush1.bf16.msra.mxu0 %v3045
    %3649 = vmatprep.subr.bf16.mxu0 %v3052
    %3650 = vmatpush1.bf16.msra.mxu0 %v3051
    %3651 = vmatprep.subr.bf16.mxu0 %v3058
    %3652 = vmatpush1.bf16.msra.mxu0 %v3057
    %3653 = vmatprep.subr.bf16.mxu0 %v3064
    %3654 = vmatpush1.bf16.msra.mxu0 %v3063
    %3655 = vmatprep.subr.bf16.mxu0 %v3070
    %3656 = vmatpush1.bf16.msra.mxu0 %v3069
    %3657 = vmatprep.subr.bf16.mxu0 %v3076
    %3658 = vmatpush1.bf16.msra.mxu0 %v3075
    %3659 = vmatprep.mubr.bf16.mxu0 %v1700
    %3660 = vmatmul.mubr.bf16.gmra.mrb[0].mxu0 %v1699
    %v3661 = vpop.f32.mrb[0].mxu0
    %v3662 = vadd.f32 %v3621, %v3661
    %v3663 = vpop.f32.mrb[0].mxu0
    %v3664 = vadd.f32 %v3623, %v3663
    %v3665 = vpop.f32.mrb[0].mxu0
    %v3666 = vpop.f32.mrb[0].mxu0
    %3667 = vdwg.mxu0
    %3668 = vmatprep.subr.bf16.mxu0 %v3082
    %3669 = vmatpush1.bf16.msra.mxu0 %v3081
    %3670 = vmatprep.subr.bf16.mxu0 %v3088
    %3671 = vmatpush1.bf16.msra.mxu0 %v3087
    %3672 = vmatprep.subr.bf16.mxu0 %v3094
    %3673 = vmatpush1.bf16.msra.mxu0 %v3093
    %3674 = vmatprep.subr.bf16.mxu0 %v3100
    %3675 = vmatpush1.bf16.msra.mxu0 %v3099
    %3676 = vmatprep.subr.bf16.mxu0 %v3106
    %3677 = vmatpush1.bf16.msra.mxu0 %v3105
    %3678 = vmatprep.subr.bf16.mxu0 %v3112
    %3679 = vmatpush1.bf16.msra.mxu0 %v3111
    %3680 = vmatprep.subr.bf16.mxu0 %v3118
    %3681 = vmatpush1.bf16.msra.mxu0 %v3117
    %3682 = vmatprep.subr.bf16.mxu0 %v3124
    %3683 = vmatpush1.bf16.msra.mxu0 %v3123
    %3684 = vmatprep.subr.bf16.mxu0 %v3130
    %3685 = vmatpush1.bf16.msra.mxu0 %v3129
    %3686 = vmatprep.subr.bf16.mxu0 %v3136
    %3687 = vmatpush1.bf16.msra.mxu0 %v3135
    %3688 = vmatprep.subr.bf16.mxu0 %v3142
    %3689 = vmatpush1.bf16.msra.mxu0 %v3141
    %3690 = vmatprep.subr.bf16.mxu0 %v3148
    %3691 = vmatpush1.bf16.msra.mxu0 %v3147
    %3692 = vmatprep.subr.bf16.mxu0 %v3154
    %3693 = vmatpush1.bf16.msra.mxu0 %v3153
    %3694 = vmatprep.subr.bf16.mxu0 %v3160
    %3695 = vmatpush1.bf16.msra.mxu0 %v3159
    %3696 = vmatprep.subr.bf16.mxu0 %v3166
    %3697 = vmatpush1.bf16.msra.mxu0 %v3165
    %3698 = vmatprep.subr.bf16.mxu0 %v3172
    %3699 = vmatpush1.bf16.msra.mxu0 %v3171
    %3700 = vmatprep.mubr.bf16.mxu0 %v1702
    %3701 = vmatmul.mubr.bf16.gmra.mrb[0].mxu0 %v1701
    %v3702 = vpop.f32.mrb[0].mxu0
    %v3703 = vadd.f32 %v3662, %v3702
    %v3704 = vpop.f32.mrb[0].mxu0
    %v3705 = vadd.f32 %v3664, %v3704
    %v3706 = vpop.f32.mrb[0].mxu0
    %v3707 = vpop.f32.mrb[0].mxu0
    %3708 = vdwg.mxu0
    %3709 = vmatprep.subr.bf16.mxu0 %v2892
    %3710 = vmatpush1.bf16.msra.mxu0 %v2891
    %3711 = vmatprep.subr.bf16.mxu0 %v2898
    %3712 = vmatpush1.bf16.msra.mxu0 %v2897
    %3713 = vmatprep.subr.bf16.mxu0 %v2904
    %3714 = vmatpush1.bf16.msra.mxu0 %v2903
    %3715 = vmatprep.subr.bf16.mxu0 %v2910
    %3716 = vmatpush1.bf16.msra.mxu0 %v2909
    %3717 = vmatprep.subr.bf16.mxu0 %v2916
    %3718 = vmatpush1.bf16.msra.mxu0 %v2915
    %3719 = vmatprep.subr.bf16.mxu0 %v2922
    %3720 = vmatpush1.bf16.msra.mxu0 %v2921
    %3721 = vmatprep.subr.bf16.mxu0 %v2928
    %3722 = vmatpush1.bf16.msra.mxu0 %v2927
    %3723 = vmatprep.subr.bf16.mxu0 %v2934
    %3724 = vmatpush1.bf16.msra.mxu0 %v2933
    %3725 = vmatprep.subr.bf16.mxu0 %v2940
    %3726 = vmatpush1.bf16.msra.mxu0 %v2939
    %3727 = vmatprep.subr.bf16.mxu0 %v2946
    %3728 = vmatpush1.bf16.msra.mxu0 %v2945
    %3729 = vmatprep.subr.bf16.mxu0 %v2952
    %3730 = vmatpush1.bf16.msra.mxu0 %v2951
    %3731 = vmatprep.subr.bf16.mxu0 %v2958
    %3732 = vmatpush1.bf16.msra.mxu0 %v2957
    %3733 = vmatprep.subr.bf16.mxu0 %v2964
    %3734 = vmatpush1.bf16.msra.mxu0 %v2963
    %3735 = vmatprep.subr.bf16.mxu0 %v2970
    %3736 = vmatpush1.bf16.msra.mxu0 %v2969
    %3737 = vmatprep.subr.bf16.mxu0 %v2976
    %3738 = vmatpush1.bf16.msra.mxu0 %v2975
    %3739 = vmatprep.subr.bf16.mxu0 %v2982
    %3740 = vmatpush1.bf16.msra.mxu0 %v2981
    %3741 = vmatprep.mubr.bf16.mxu0 %v1698
    %3742 = vmatmul.mubr.bf16.gmra.mrb[0].mxu0 %v1697
    %v3743 = vpop.f32.mrb[0].mxu0
    %v3744 = vadd.f32 %v2012, %v3743
    %v3745 = vpop.f32.mrb[0].mxu0
    %v3746 = vadd.f32 %v2016, %v3745
    %v3747 = vpop.f32.mrb[0].mxu0
    %v3748 = vpop.f32.mrb[0].mxu0
    %3749 = vdwg.mxu0
    %3750 = vmatprep.subr.bf16.mxu0 %v2988
    %3751 = vmatpush1.bf16.msra.mxu0 %v2987
    %3752 = vmatprep.subr.bf16.mxu0 %v2994
    %3753 = vmatpush1.bf16.msra.mxu0 %v2993
    %3754 = vmatprep.subr.bf16.mxu0 %v3000
    %3755 = vmatpush1.bf16.msra.mxu0 %v2999
    %3756 = vmatprep.subr.bf16.mxu0 %v3006
    %3757 = vmatpush1.bf16.msra.mxu0 %v3005
    %3758 = vmatprep.subr.bf16.mxu0 %v3012
    %3759 = vmatpush1.bf16.msra.mxu0 %v3011
    %3760 = vmatprep.subr.bf16.mxu0 %v3018
    %3761 = vmatpush1.bf16.msra.mxu0 %v3017
    %3762 = vmatprep.subr.bf16.mxu0 %v3024
    %3763 = vmatpush1.bf16.msra.mxu0 %v3023
    %3764 = vmatprep.subr.bf16.mxu0 %v3030
    %3765 = vmatpush1.bf16.msra.mxu0 %v3029
    %3766 = vmatprep.subr.bf16.mxu0 %v3036
    %3767 = vmatpush1.bf16.msra.mxu0 %v3035
    %3768 = vmatprep.subr.bf16.mxu0 %v3042
    %3769 = vmatpush1.bf16.msra.mxu0 %v3041
    %3770 = vmatprep.subr.bf16.mxu0 %v3048
    %3771 = vmatpush1.bf16.msra.mxu0 %v3047
    %3772 = vmatprep.subr.bf16.mxu0 %v3054
    %3773 = vmatpush1.bf16.msra.mxu0 %v3053
    %3774 = vmatprep.subr.bf16.mxu0 %v3060
    %3775 = vmatpush1.bf16.msra.mxu0 %v3059
    %3776 = vmatprep.subr.bf16.mxu0 %v3066
    %3777 = vmatpush1.bf16.msra.mxu0 %v3065
    %3778 = vmatprep.subr.bf16.mxu0 %v3072
    %3779 = vmatpush1.bf16.msra.mxu0 %v3071
    %3780 = vmatprep.subr.bf16.mxu0 %v3078
    %3781 = vmatpush1.bf16.msra.mxu0 %v3077
    %3782 = vmatprep.mubr.bf16.mxu0 %v1700
    %3783 = vmatmul.mubr.bf16.gmra.mrb[0].mxu0 %v1699
    %v3784 = vpop.f32.mrb[0].mxu0
    %v3785 = vadd.f32 %v3744, %v3784
    %v3786 = vpop.f32.mrb[0].mxu0
    %v3787 = vadd.f32 %v3746, %v3786
    %v3788 = vpop.f32.mrb[0].mxu0
    %v3789 = vpop.f32.mrb[0].mxu0
    %3790 = vdwg.mxu0
    %3791 = vmatprep.subr.bf16.mxu0 %v3084
    %3792 = vmatpush1.bf16.msra.mxu0 %v3083
    %3793 = vmatprep.subr.bf16.mxu0 %v3090
    %3794 = vmatpush1.bf16.msra.mxu0 %v3089
    %3795 = vmatprep.subr.bf16.mxu0 %v3096
    %3796 = vmatpush1.bf16.msra.mxu0 %v3095
    %3797 = vmatprep.subr.bf16.mxu0 %v3102
    %3798 = vmatpush1.bf16.msra.mxu0 %v3101
    %3799 = vmatprep.subr.bf16.mxu0 %v3108
    %3800 = vmatpush1.bf16.msra.mxu0 %v3107
    %3801 = vmatprep.subr.bf16.mxu0 %v3114
    %3802 = vmatpush1.bf16.msra.mxu0 %v3113
    %3803 = vmatprep.subr.bf16.mxu0 %v3120
    %3804 = vmatpush1.bf16.msra.mxu0 %v3119
    %3805 = vmatprep.subr.bf16.mxu0 %v3126
    %3806 = vmatpush1.bf16.msra.mxu0 %v3125
    %3807 = vmatprep.subr.bf16.mxu0 %v3132
    %3808 = vmatpush1.bf16.msra.mxu0 %v3131
    %3809 = vmatprep.subr.bf16.mxu0 %v3138
    %3810 = vmatpush1.bf16.msra.mxu0 %v3137
    %3811 = vmatprep.subr.bf16.mxu0 %v3144
    %3812 = vmatpush1.bf16.msra.mxu0 %v3143
    %3813 = vmatprep.subr.bf16.mxu0 %v3150
    %3814 = vmatpush1.bf16.msra.mxu0 %v3149
    %3815 = vmatprep.subr.bf16.mxu0 %v3156
    %3816 = vmatpush1.bf16.msra.mxu0 %v3155
    %3817 = vmatprep.subr.bf16.mxu0 %v3162
    %3818 = vmatpush1.bf16.msra.mxu0 %v3161
    %3819 = vmatprep.subr.bf16.mxu0 %v3168
    %3820 = vmatpush1.bf16.msra.mxu0 %v3167
    %3821 = vmatprep.subr.bf16.mxu0 %v3174
    %3822 = vmatpush1.bf16.msra.mxu0 %v3173
    %3823 = vmatprep.mubr.bf16.mxu0 %v1702
    %3824 = vmatmul.mubr.bf16.gmra.mrb[0].mxu0 %v1701
    %v3825 = vpop.f32.mrb[0].mxu0
    %v3826 = vadd.f32 %v3785, %v3825
    %v3827 = vpop.f32.mrb[0].mxu0
    %v3828 = vadd.f32 %v3787, %v3827
    %v3829 = vpop.f32.mrb[0].mxu0
    %v3830 = vpop.f32.mrb[0].mxu0
    %3831 = vdwg.mxu0
    %v3832 = vmax.f32 %v3580, 0.0
    %v3833 = vmax.f32 %v3582, 0.0
    %v3834 = vmax.f32 %v3703, 0.0
    %v3835 = vmax.f32 %v3705, 0.0
    %v3836 = vmax.f32 %v3826, 0.0
    %v3837 = vmax.f32 %v3828, 0.0
    %v3838 = vpack.c.bf16 %v3832, %v3832
    %v3839 = vpack.c.bf16 %v3833, %v3833
    %v3840 = vpack.c.bf16 %v3834, %v3834
    %v3841 = vpack.c.bf16 %v3835, %v3835
    %v3842 = vpack.c.bf16 %v3836, %v3836
    %v3843 = vpack.c.bf16 %v3837, %v3837
    %v3844 = vld [vmem:[#allocation15] sm:$0xff]
    %v3845 = vld [vmem:[#allocation15 + $0x8] sm:$0xff]
    %v3846 = vld [vmem:[#allocation15 + $0x10] sm:$0xff]
    %v3847 = vld [vmem:[#allocation15 + $0x18] sm:$0xff]
    %v3848 = vld [vmem:[#allocation15 + $0x20] sm:$0xff]
    %v3849 = vld [vmem:[#allocation15 + $0x28] sm:$0xff]
    %v3850 = vld [vmem:[#allocation15 + $0x30] sm:$0xff]
    %v3851 = vld [vmem:[#allocation15 + $0x38] sm:$0xff]
    %v3852 = vld [vmem:[#allocation15 + $0x40] sm:$0xff]
    %v3853 = vld [vmem:[#allocation15 + $0x48] sm:$0xff]
    %v3854 = vld [vmem:[#allocation15 + $0x50] sm:$0xff]
    %v3855 = vld [vmem:[#allocation15 + $0x58] sm:$0xff]
    %v3856 = vld [vmem:[#allocation15 + $0x60] sm:$0xff]
    %v3857 = vld [vmem:[#allocation15 + $0x68] sm:$0xff]
    %v3858 = vld [vmem:[#allocation15 + $0x70] sm:$0xff]
    %v3859 = vld [vmem:[#allocation15 + $0x78] sm:$0xff]
    %v3860 = vld [vmem:[#allocation15 + $0x80] sm:$0xff]
    %v3861 = vld [vmem:[#allocation15 + $0x88] sm:$0xff]
    %v3862 = vld [vmem:[#allocation15 + $0x90] sm:$0xff]
    %v3863 = vld [vmem:[#allocation15 + $0x98] sm:$0xff]
    %v3864 = vld [vmem:[#allocation15 + $0xa0] sm:$0xff]
    %v3865 = vld [vmem:[#allocation15 + $0xa8] sm:$0xff]
    %v3866 = vld [vmem:[#allocation15 + $0xb0] sm:$0xff]
    %v3867 = vld [vmem:[#allocation15 + $0xb8] sm:$0xff]
    %v3868 = vld [vmem:[#allocation15 + $0xc0] sm:$0xff]
    %v3869 = vld [vmem:[#allocation15 + $0xc8] sm:$0xff]
    %v3870 = vld [vmem:[#allocation15 + $0xd0] sm:$0xff]
    %v3871 = vld [vmem:[#allocation15 + $0xd8] sm:$0xff]
    %v3872 = vld [vmem:[#allocation15 + $0xe0] sm:$0xff]
    %v3873 = vld [vmem:[#allocation15 + $0xe8] sm:$0xff]
    %v3874 = vld [vmem:[#allocation15 + $0xf0] sm:$0xff]
    %v3875 = vld [vmem:[#allocation15 + $0xf8] sm:$0xff]
    %v3876 = vld [vmem:[#allocation15 + $0x100] sm:$0xff]
    %v3877 = vld [vmem:[#allocation15 + $0x108] sm:$0xff]
    %v3878 = vld [vmem:[#allocation15 + $0x110] sm:$0xff]
    %v3879 = vld [vmem:[#allocation15 + $0x118] sm:$0xff]
    %v3880 = vld [vmem:[#allocation15 + $0x120] sm:$0xff]
    %v3881 = vld [vmem:[#allocation15 + $0x128] sm:$0xff]
    %v3882 = vld [vmem:[#allocation15 + $0x130] sm:$0xff]
    %v3883 = vld [vmem:[#allocation15 + $0x138] sm:$0xff]
    %v3884 = vld [vmem:[#allocation15 + $0x140] sm:$0xff]
    %v3885 = vld [vmem:[#allocation15 + $0x148] sm:$0xff]
    %v3886 = vld [vmem:[#allocation15 + $0x150] sm:$0xff]
    %v3887 = vld [vmem:[#allocation15 + $0x158] sm:$0xff]
    %v3888 = vld [vmem:[#allocation15 + $0x160] sm:$0xff]
    %v3889 = vld [vmem:[#allocation15 + $0x168] sm:$0xff]
    %v3890 = vld [vmem:[#allocation15 + $0x170] sm:$0xff]
    %v3891 = vld [vmem:[#allocation15 + $0x178] sm:$0xff]
    %v3892 = vld [vmem:[#allocation15 + $0x180] sm:$0xff]
    %v3893 = vld [vmem:[#allocation15 + $0x188] sm:$0xff]
    %v3894 = vld [vmem:[#allocation15 + $0x190] sm:$0xff]
    %v3895 = vld [vmem:[#allocation15 + $0x198] sm:$0xff]
    %v3896 = vld [vmem:[#allocation15 + $0x1a0] sm:$0xff]
    %v3897 = vld [vmem:[#allocation15 + $0x1a8] sm:$0xff]
    %v3898 = vld [vmem:[#allocation15 + $0x1b0] sm:$0xff]
    %v3899 = vld [vmem:[#allocation15 + $0x1b8] sm:$0xff]
    %v3900 = vld [vmem:[#allocation15 + $0x1c0] sm:$0xff]
    %v3901 = vld [vmem:[#allocation15 + $0x1c8] sm:$0xff]
    %v3902 = vld [vmem:[#allocation15 + $0x1d0] sm:$0xff]
    %v3903 = vld [vmem:[#allocation15 + $0x1d8] sm:$0xff]
    %v3904 = vld [vmem:[#allocation15 + $0x1e0] sm:$0xff]
    %v3905 = vld [vmem:[#allocation15 + $0x1e8] sm:$0xff]
    %v3906 = vld [vmem:[#allocation15 + $0x1f0] sm:$0xff]
    %v3907 = vld [vmem:[#allocation15 + $0x1f8] sm:$0xff]
    %v3908 = vld [vmem:[#allocation15 + $0x200] sm:$0xff]
    %v3909 = vld [vmem:[#allocation15 + $0x208] sm:$0xff]
    %v3910 = vld [vmem:[#allocation15 + $0x210] sm:$0xff]
    %v3911 = vld [vmem:[#allocation15 + $0x218] sm:$0xff]
    %v3912 = vld [vmem:[#allocation15 + $0x220] sm:$0xff]
    %v3913 = vld [vmem:[#allocation15 + $0x228] sm:$0xff]
    %v3914 = vld [vmem:[#allocation15 + $0x230] sm:$0xff]
    %v3915 = vld [vmem:[#allocation15 + $0x238] sm:$0xff]
    %v3916 = vld [vmem:[#allocation15 + $0x240] sm:$0xff]
    %v3917 = vld [vmem:[#allocation15 + $0x248] sm:$0xff]
    %v3918 = vld [vmem:[#allocation15 + $0x250] sm:$0xff]
    %v3919 = vld [vmem:[#allocation15 + $0x258] sm:$0xff]
    %v3920 = vld [vmem:[#allocation15 + $0x260] sm:$0xff]
    %v3921 = vld [vmem:[#allocation15 + $0x268] sm:$0xff]
    %v3922 = vld [vmem:[#allocation15 + $0x270] sm:$0xff]
    %v3923 = vld [vmem:[#allocation15 + $0x278] sm:$0xff]
    %v3924 = vld [vmem:[#allocation15 + $0x280] sm:$0xff]
    %v3925 = vld [vmem:[#allocation15 + $0x288] sm:$0xff]
    %v3926 = vld [vmem:[#allocation15 + $0x290] sm:$0xff]
    %v3927 = vld [vmem:[#allocation15 + $0x298] sm:$0xff]
    %v3928 = vld [vmem:[#allocation15 + $0x2a0] sm:$0xff]
    %v3929 = vld [vmem:[#allocation15 + $0x2a8] sm:$0xff]
    %v3930 = vld [vmem:[#allocation15 + $0x2b0] sm:$0xff]
    %v3931 = vld [vmem:[#allocation15 + $0x2b8] sm:$0xff]
    %v3932 = vld [vmem:[#allocation15 + $0x2c0] sm:$0xff]
    %v3933 = vld [vmem:[#allocation15 + $0x2c8] sm:$0xff]
    %v3934 = vld [vmem:[#allocation15 + $0x2d0] sm:$0xff]
    %v3935 = vld [vmem:[#allocation15 + $0x2d8] sm:$0xff]
    %v3936 = vld [vmem:[#allocation15 + $0x2e0] sm:$0xff]
    %v3937 = vld [vmem:[#allocation15 + $0x2e8] sm:$0xff]
    %v3938 = vld [vmem:[#allocation15 + $0x2f0] sm:$0xff]
    %v3939 = vld [vmem:[#allocation15 + $0x2f8] sm:$0xff]
    %v3940 = vld [vmem:[#allocation17] sm:$0x3]
    %v3942 = vlaneseq
    %v3943 = vshrl.u32 %v3942, 7
    %v3944 = vsub.s32 0, %v3943
    %v3945 = vrot.slane %v3940, %v3944
    %v3946 = vlaneseq
    %v3947 = vshrl.u32 %v3946, 7
    %v3948 = vsub.s32 1, %v3947
    %v3949 = vrot.slane %v3940, %v3948
    %v4048 = vunpack.c.l.b16 %v3844
    %v4049 = vunpack.c.h.b16 %v3844
    %v4050 = vunpack.c.l.b16 %v3845
    %v4051 = vunpack.c.h.b16 %v3845
    %v4052 = vunpack.c.l.b16 %v3846
    %v4053 = vunpack.c.h.b16 %v3846
    %v4054 = vunpack.c.l.b16 %v3847
    %v4055 = vunpack.c.h.b16 %v3847
    %v4056 = vunpack.c.l.b16 %v3848
    %v4057 = vunpack.c.h.b16 %v3848
    %v4058 = vunpack.c.l.b16 %v3849
    %v4059 = vunpack.c.h.b16 %v3849
    %v4060 = vunpack.c.l.b16 %v3850
    %v4061 = vunpack.c.h.b16 %v3850
    %v4062 = vunpack.c.l.b16 %v3851
    %v4063 = vunpack.c.h.b16 %v3851
    %v4064 = vunpack.c.l.b16 %v3852
    %v4065 = vunpack.c.h.b16 %v3852
    %v4066 = vunpack.c.l.b16 %v3853
    %v4067 = vunpack.c.h.b16 %v3853
    %v4068 = vunpack.c.l.b16 %v3854
    %v4069 = vunpack.c.h.b16 %v3854
    %v4070 = vunpack.c.l.b16 %v3855
    %v4071 = vunpack.c.h.b16 %v3855
    %v4072 = vunpack.c.l.b16 %v3856
    %v4073 = vunpack.c.h.b16 %v3856
    %v4074 = vunpack.c.l.b16 %v3857
    %v4075 = vunpack.c.h.b16 %v3857
    %v4076 = vunpack.c.l.b16 %v3858
    %v4077 = vunpack.c.h.b16 %v3858
    %v4078 = vunpack.c.l.b16 %v3859
    %v4079 = vunpack.c.h.b16 %v3859
    %v4080 = vunpack.c.l.b16 %v3860
    %v4081 = vunpack.c.h.b16 %v3860
    %v4082 = vunpack.c.l.b16 %v3861
    %v4083 = vunpack.c.h.b16 %v3861
    %v4084 = vunpack.c.l.b16 %v3862
    %v4085 = vunpack.c.h.b16 %v3862
    %v4086 = vunpack.c.l.b16 %v3863
    %v4087 = vunpack.c.h.b16 %v3863
    %v4088 = vunpack.c.l.b16 %v3864
    %v4089 = vunpack.c.h.b16 %v3864
    %v4090 = vunpack.c.l.b16 %v3865
    %v4091 = vunpack.c.h.b16 %v3865
    %v4092 = vunpack.c.l.b16 %v3866
    %v4093 = vunpack.c.h.b16 %v3866
    %v4094 = vunpack.c.l.b16 %v3867
    %v4095 = vunpack.c.h.b16 %v3867
    %v4096 = vunpack.c.l.b16 %v3868
    %v4097 = vunpack.c.h.b16 %v3868
    %v4098 = vunpack.c.l.b16 %v3869
    %v4099 = vunpack.c.h.b16 %v3869
    %v4100 = vunpack.c.l.b16 %v3870
    %v4101 = vunpack.c.h.b16 %v3870
    %v4102 = vunpack.c.l.b16 %v3871
    %v4103 = vunpack.c.h.b16 %v3871
    %v4104 = vunpack.c.l.b16 %v3872
    %v4105 = vunpack.c.h.b16 %v3872
    %v4106 = vunpack.c.l.b16 %v3873
    %v4107 = vunpack.c.h.b16 %v3873
    %v4108 = vunpack.c.l.b16 %v3874
    %v4109 = vunpack.c.h.b16 %v3874
    %v4110 = vunpack.c.l.b16 %v3875
    %v4111 = vunpack.c.h.b16 %v3875
    %v4112 = vunpack.c.l.b16 %v3876
    %v4113 = vunpack.c.h.b16 %v3876
    %v4114 = vunpack.c.l.b16 %v3877
    %v4115 = vunpack.c.h.b16 %v3877
    %v4116 = vunpack.c.l.b16 %v3878
    %v4117 = vunpack.c.h.b16 %v3878
    %v4118 = vunpack.c.l.b16 %v3879
    %v4119 = vunpack.c.h.b16 %v3879
    %v4120 = vunpack.c.l.b16 %v3880
    %v4121 = vunpack.c.h.b16 %v3880
    %v4122 = vunpack.c.l.b16 %v3881
    %v4123 = vunpack.c.h.b16 %v3881
    %v4124 = vunpack.c.l.b16 %v3882
    %v4125 = vunpack.c.h.b16 %v3882
    %v4126 = vunpack.c.l.b16 %v3883
    %v4127 = vunpack.c.h.b16 %v3883
    %v4128 = vunpack.c.l.b16 %v3884
    %v4129 = vunpack.c.h.b16 %v3884
    %v4130 = vunpack.c.l.b16 %v3885
    %v4131 = vunpack.c.h.b16 %v3885
    %v4132 = vunpack.c.l.b16 %v3886
    %v4133 = vunpack.c.h.b16 %v3886
    %v4134 = vunpack.c.l.b16 %v3887
    %v4135 = vunpack.c.h.b16 %v3887
    %v4136 = vunpack.c.l.b16 %v3888
    %v4137 = vunpack.c.h.b16 %v3888
    %v4138 = vunpack.c.l.b16 %v3889
    %v4139 = vunpack.c.h.b16 %v3889
    %v4140 = vunpack.c.l.b16 %v3890
    %v4141 = vunpack.c.h.b16 %v3890
    %v4142 = vunpack.c.l.b16 %v3891
    %v4143 = vunpack.c.h.b16 %v3891
    %v4144 = vunpack.c.l.b16 %v3892
    %v4145 = vunpack.c.h.b16 %v3892
    %v4146 = vunpack.c.l.b16 %v3893
    %v4147 = vunpack.c.h.b16 %v3893
    %v4148 = vunpack.c.l.b16 %v3894
    %v4149 = vunpack.c.h.b16 %v3894
    %v4150 = vunpack.c.l.b16 %v3895
    %v4151 = vunpack.c.h.b16 %v3895
    %v4152 = vunpack.c.l.b16 %v3896
    %v4153 = vunpack.c.h.b16 %v3896
    %v4154 = vunpack.c.l.b16 %v3897
    %v4155 = vunpack.c.h.b16 %v3897
    %v4156 = vunpack.c.l.b16 %v3898
    %v4157 = vunpack.c.h.b16 %v3898
    %v4158 = vunpack.c.l.b16 %v3899
    %v4159 = vunpack.c.h.b16 %v3899
    %v4160 = vunpack.c.l.b16 %v3900
    %v4161 = vunpack.c.h.b16 %v3900
    %v4162 = vunpack.c.l.b16 %v3901
    %v4163 = vunpack.c.h.b16 %v3901
    %v4164 = vunpack.c.l.b16 %v3902
    %v4165 = vunpack.c.h.b16 %v3902
    %v4166 = vunpack.c.l.b16 %v3903
    %v4167 = vunpack.c.h.b16 %v3903
    %v4168 = vunpack.c.l.b16 %v3904
    %v4169 = vunpack.c.h.b16 %v3904
    %v4170 = vunpack.c.l.b16 %v3905
    %v4171 = vunpack.c.h.b16 %v3905
    %v4172 = vunpack.c.l.b16 %v3906
    %v4173 = vunpack.c.h.b16 %v3906
    %v4174 = vunpack.c.l.b16 %v3907
    %v4175 = vunpack.c.h.b16 %v3907
    %v4176 = vunpack.c.l.b16 %v3908
    %v4177 = vunpack.c.h.b16 %v3908
    %v4178 = vunpack.c.l.b16 %v3909
    %v4179 = vunpack.c.h.b16 %v3909
    %v4180 = vunpack.c.l.b16 %v3910
    %v4181 = vunpack.c.h.b16 %v3910
    %v4182 = vunpack.c.l.b16 %v3911
    %v4183 = vunpack.c.h.b16 %v3911
    %v4184 = vunpack.c.l.b16 %v3912
    %v4185 = vunpack.c.h.b16 %v3912
    %v4186 = vunpack.c.l.b16 %v3913
    %v4187 = vunpack.c.h.b16 %v3913
    %v4188 = vunpack.c.l.b16 %v3914
    %v4189 = vunpack.c.h.b16 %v3914
    %v4190 = vunpack.c.l.b16 %v3915
    %v4191 = vunpack.c.h.b16 %v3915
    %v4192 = vunpack.c.l.b16 %v3916
    %v4193 = vunpack.c.h.b16 %v3916
    %v4194 = vunpack.c.l.b16 %v3917
    %v4195 = vunpack.c.h.b16 %v3917
    %v4196 = vunpack.c.l.b16 %v3918
    %v4197 = vunpack.c.h.b16 %v3918
    %v4198 = vunpack.c.l.b16 %v3919
    %v4199 = vunpack.c.h.b16 %v3919
    %v4200 = vunpack.c.l.b16 %v3920
    %v4201 = vunpack.c.h.b16 %v3920
    %v4202 = vunpack.c.l.b16 %v3921
    %v4203 = vunpack.c.h.b16 %v3921
    %v4204 = vunpack.c.l.b16 %v3922
    %v4205 = vunpack.c.h.b16 %v3922
    %v4206 = vunpack.c.l.b16 %v3923
    %v4207 = vunpack.c.h.b16 %v3923
    %v4208 = vunpack.c.l.b16 %v3924
    %v4209 = vunpack.c.h.b16 %v3924
    %v4210 = vunpack.c.l.b16 %v3925
    %v4211 = vunpack.c.h.b16 %v3925
    %v4212 = vunpack.c.l.b16 %v3926
    %v4213 = vunpack.c.h.b16 %v3926
    %v4214 = vunpack.c.l.b16 %v3927
    %v4215 = vunpack.c.h.b16 %v3927
    %v4216 = vunpack.c.l.b16 %v3928
    %v4217 = vunpack.c.h.b16 %v3928
    %v4218 = vunpack.c.l.b16 %v3929
    %v4219 = vunpack.c.h.b16 %v3929
    %v4220 = vunpack.c.l.b16 %v3930
    %v4221 = vunpack.c.h.b16 %v3930
    %v4222 = vunpack.c.l.b16 %v3931
    %v4223 = vunpack.c.h.b16 %v3931
    %v4224 = vunpack.c.l.b16 %v3932
    %v4225 = vunpack.c.h.b16 %v3932
    %v4226 = vunpack.c.l.b16 %v3933
    %v4227 = vunpack.c.h.b16 %v3933
    %v4228 = vunpack.c.l.b16 %v3934
    %v4229 = vunpack.c.h.b16 %v3934
    %v4230 = vunpack.c.l.b16 %v3935
    %v4231 = vunpack.c.h.b16 %v3935
    %v4232 = vunpack.c.l.b16 %v3936
    %v4233 = vunpack.c.h.b16 %v3936
    %v4234 = vunpack.c.l.b16 %v3937
    %v4235 = vunpack.c.h.b16 %v3937
    %v4236 = vunpack.c.l.b16 %v3938
    %v4237 = vunpack.c.h.b16 %v3938
    %v4238 = vunpack.c.l.b16 %v3939
    %v4239 = vunpack.c.h.b16 %v3939
    %v4240 = vpack.c.b16 %v4050, %v4048
    %v4241 = vpack.c.b16 %v4051, %v4049
    %v4242 = vpack.c.b16 %v4054, %v4052
    %v4243 = vpack.c.b16 %v4055, %v4053
    %v4244 = vpack.c.b16 %v4058, %v4056
    %v4245 = vpack.c.b16 %v4059, %v4057
    %v4246 = vpack.c.b16 %v4062, %v4060
    %v4247 = vpack.c.b16 %v4063, %v4061
    %v4248 = vpack.c.b16 %v4066, %v4064
    %v4249 = vpack.c.b16 %v4067, %v4065
    %v4250 = vpack.c.b16 %v4070, %v4068
    %v4251 = vpack.c.b16 %v4071, %v4069
    %v4252 = vpack.c.b16 %v4074, %v4072
    %v4253 = vpack.c.b16 %v4075, %v4073
    %v4254 = vpack.c.b16 %v4078, %v4076
    %v4255 = vpack.c.b16 %v4079, %v4077
    %v4256 = vpack.c.b16 %v4082, %v4080
    %v4257 = vpack.c.b16 %v4083, %v4081
    %v4258 = vpack.c.b16 %v4086, %v4084
    %v4259 = vpack.c.b16 %v4087, %v4085
    %v4260 = vpack.c.b16 %v4090, %v4088
    %v4261 = vpack.c.b16 %v4091, %v4089
    %v4262 = vpack.c.b16 %v4094, %v4092
    %v4263 = vpack.c.b16 %v4095, %v4093
    %v4264 = vpack.c.b16 %v4098, %v4096
    %v4265 = vpack.c.b16 %v4099, %v4097
    %v4266 = vpack.c.b16 %v4102, %v4100
    %v4267 = vpack.c.b16 %v4103, %v4101
    %v4268 = vpack.c.b16 %v4106, %v4104
    %v4269 = vpack.c.b16 %v4107, %v4105
    %v4270 = vpack.c.b16 %v4110, %v4108
    %v4271 = vpack.c.b16 %v4111, %v4109
    %v4272 = vpack.c.b16 %v4114, %v4112
    %v4273 = vpack.c.b16 %v4115, %v4113
    %v4274 = vpack.c.b16 %v4118, %v4116
    %v4275 = vpack.c.b16 %v4119, %v4117
    %v4276 = vpack.c.b16 %v4122, %v4120
    %v4277 = vpack.c.b16 %v4123, %v4121
    %v4278 = vpack.c.b16 %v4126, %v4124
    %v4279 = vpack.c.b16 %v4127, %v4125
    %v4280 = vpack.c.b16 %v4130, %v4128
    %v4281 = vpack.c.b16 %v4131, %v4129
    %v4282 = vpack.c.b16 %v4134, %v4132
    %v4283 = vpack.c.b16 %v4135, %v4133
    %v4284 = vpack.c.b16 %v4138, %v4136
    %v4285 = vpack.c.b16 %v4139, %v4137
    %v4286 = vpack.c.b16 %v4142, %v4140
    %v4287 = vpack.c.b16 %v4143, %v4141
    %v4288 = vpack.c.b16 %v4146, %v4144
    %v4289 = vpack.c.b16 %v4147, %v4145
    %v4290 = vpack.c.b16 %v4150, %v4148
    %v4291 = vpack.c.b16 %v4151, %v4149
    %v4292 = vpack.c.b16 %v4154, %v4152
    %v4293 = vpack.c.b16 %v4155, %v4153
    %v4294 = vpack.c.b16 %v4158, %v4156
    %v4295 = vpack.c.b16 %v4159, %v4157
    %v4296 = vpack.c.b16 %v4162, %v4160
    %v4297 = vpack.c.b16 %v4163, %v4161
    %v4298 = vpack.c.b16 %v4166, %v4164
    %v4299 = vpack.c.b16 %v4167, %v4165
    %v4300 = vpack.c.b16 %v4170, %v4168
    %v4301 = vpack.c.b16 %v4171, %v4169
    %v4302 = vpack.c.b16 %v4174, %v4172
    %v4303 = vpack.c.b16 %v4175, %v4173
    %v4304 = vpack.c.b16 %v4178, %v4176
    %v4305 = vpack.c.b16 %v4179, %v4177
    %v4306 = vpack.c.b16 %v4182, %v4180
    %v4307 = vpack.c.b16 %v4183, %v4181
    %v4308 = vpack.c.b16 %v4186, %v4184
    %v4309 = vpack.c.b16 %v4187, %v4185
    %v4310 = vpack.c.b16 %v4190, %v4188
    %v4311 = vpack.c.b16 %v4191, %v4189
    %v4312 = vpack.c.b16 %v4194, %v4192
    %v4313 = vpack.c.b16 %v4195, %v4193
    %v4314 = vpack.c.b16 %v4198, %v4196
    %v4315 = vpack.c.b16 %v4199, %v4197
    %v4316 = vpack.c.b16 %v4202, %v4200
    %v4317 = vpack.c.b16 %v4203, %v4201
    %v4318 = vpack.c.b16 %v4206, %v4204
    %v4319 = vpack.c.b16 %v4207, %v4205
    %v4320 = vpack.c.b16 %v4210, %v4208
    %v4321 = vpack.c.b16 %v4211, %v4209
    %v4322 = vpack.c.b16 %v4214, %v4212
    %v4323 = vpack.c.b16 %v4215, %v4213
    %v4324 = vpack.c.b16 %v4218, %v4216
    %v4325 = vpack.c.b16 %v4219, %v4217
    %v4326 = vpack.c.b16 %v4222, %v4220
    %v4327 = vpack.c.b16 %v4223, %v4221
    %v4328 = vpack.c.b16 %v4226, %v4224
    %v4329 = vpack.c.b16 %v4227, %v4225
    %v4330 = vpack.c.b16 %v4230, %v4228
    %v4331 = vpack.c.b16 %v4231, %v4229
    %v4332 = vpack.c.b16 %v4234, %v4232
    %v4333 = vpack.c.b16 %v4235, %v4233
    %v4334 = vpack.c.b16 %v4238, %v4236
    %v4335 = vpack.c.b16 %v4239, %v4237
    %4432 = vmatprep.subr.bf16.mxu0 %v4241
    %4433 = vmatpush1.bf16.msra.mxu0 %v4240
    %4434 = vmatprep.subr.bf16.mxu0 %v4243
    %4435 = vmatpush1.bf16.msra.mxu0 %v4242
    %4436 = vmatprep.subr.bf16.mxu0 %v4245
    %4437 = vmatpush1.bf16.msra.mxu0 %v4244
    %4438 = vmatprep.subr.bf16.mxu0 %v4247
    %4439 = vmatpush1.bf16.msra.mxu0 %v4246
    %4440 = vmatprep.subr.bf16.mxu0 %v4249
    %4441 = vmatpush1.bf16.msra.mxu0 %v4248
    %4442 = vmatprep.subr.bf16.mxu0 %v4251
    %4443 = vmatpush1.bf16.msra.mxu0 %v4250
    %4444 = vmatprep.subr.bf16.mxu0 %v4253
    %4445 = vmatpush1.bf16.msra.mxu0 %v4252
    %4446 = vmatprep.subr.bf16.mxu0 %v4255
    %4447 = vmatpush1.bf16.msra.mxu0 %v4254
    %4448 = vmatprep.subr.bf16.mxu0 %v4257
    %4449 = vmatpush1.bf16.msra.mxu0 %v4256
    %4450 = vmatprep.subr.bf16.mxu0 %v4259
    %4451 = vmatpush1.bf16.msra.mxu0 %v4258
    %4452 = vmatprep.subr.bf16.mxu0 %v4261
    %4453 = vmatpush1.bf16.msra.mxu0 %v4260
    %4454 = vmatprep.subr.bf16.mxu0 %v4263
    %4455 = vmatpush1.bf16.msra.mxu0 %v4262
    %4456 = vmatprep.subr.bf16.mxu0 %v4265
    %4457 = vmatpush1.bf16.msra.mxu0 %v4264
    %4458 = vmatprep.subr.bf16.mxu0 %v4267
    %4459 = vmatpush1.bf16.msra.mxu0 %v4266
    %4460 = vmatprep.subr.bf16.mxu0 %v4269
    %4461 = vmatpush1.bf16.msra.mxu0 %v4268
    %4462 = vmatprep.subr.bf16.mxu0 %v4271
    %4463 = vmatpush1.bf16.msra.mxu0 %v4270
    %4464 = vmatprep.mubr.bf16.mxu0 %v3839
    %4465 = vmatmul.mubr.bf16.gmra.mrb[0].mxu0 %v3838
    %v4466 = vpop.f32.mrb[0].mxu0
    %v4467 = vadd.f32 %v3945, %v4466
    %v4468 = vpop.f32.mrb[0].mxu0
    %v4469 = vadd.f32 %v3949, %v4468
    %v4470 = vpop.f32.mrb[0].mxu0
    %v4471 = vpop.f32.mrb[0].mxu0
    %4472 = vdwg.mxu0
    %4473 = vmatprep.subr.bf16.mxu0 %v4273
    %4474 = vmatpush1.bf16.msra.mxu0 %v4272
    %4475 = vmatprep.subr.bf16.mxu0 %v4275
    %4476 = vmatpush1.bf16.msra.mxu0 %v4274
    %4477 = vmatprep.subr.bf16.mxu0 %v4277
    %4478 = vmatpush1.bf16.msra.mxu0 %v4276
    %4479 = vmatprep.subr.bf16.mxu0 %v4279
    %4480 = vmatpush1.bf16.msra.mxu0 %v4278
    %4481 = vmatprep.subr.bf16.mxu0 %v4281
    %4482 = vmatpush1.bf16.msra.mxu0 %v4280
    %4483 = vmatprep.subr.bf16.mxu0 %v4283
    %4484 = vmatpush1.bf16.msra.mxu0 %v4282
    %4485 = vmatprep.subr.bf16.mxu0 %v4285
    %4486 = vmatpush1.bf16.msra.mxu0 %v4284
    %4487 = vmatprep.subr.bf16.mxu0 %v4287
    %4488 = vmatpush1.bf16.msra.mxu0 %v4286
    %4489 = vmatprep.subr.bf16.mxu0 %v4289
    %4490 = vmatpush1.bf16.msra.mxu0 %v4288
    %4491 = vmatprep.subr.bf16.mxu0 %v4291
    %4492 = vmatpush1.bf16.msra.mxu0 %v4290
    %4493 = vmatprep.subr.bf16.mxu0 %v4293
    %4494 = vmatpush1.bf16.msra.mxu0 %v4292
    %4495 = vmatprep.subr.bf16.mxu0 %v4295
    %4496 = vmatpush1.bf16.msra.mxu0 %v4294
    %4497 = vmatprep.subr.bf16.mxu0 %v4297
    %4498 = vmatpush1.bf16.msra.mxu0 %v4296
    %4499 = vmatprep.subr.bf16.mxu0 %v4299
    %4500 = vmatpush1.bf16.msra.mxu0 %v4298
    %4501 = vmatprep.subr.bf16.mxu0 %v4301
    %4502 = vmatpush1.bf16.msra.mxu0 %v4300
    %4503 = vmatprep.subr.bf16.mxu0 %v4303
    %4504 = vmatpush1.bf16.msra.mxu0 %v4302
    %4505 = vmatprep.mubr.bf16.mxu0 %v3841
    %4506 = vmatmul.mubr.bf16.gmra.mrb[0].mxu0 %v3840
    %v4507 = vpop.f32.mrb[0].mxu0
    %v4508 = vadd.f32 %v4467, %v4507
    %v4509 = vpop.f32.mrb[0].mxu0
    %v4510 = vadd.f32 %v4469, %v4509
    %v4511 = vpop.f32.mrb[0].mxu0
    %v4512 = vpop.f32.mrb[0].mxu0
    %4513 = vdwg.mxu0
    %4514 = vmatprep.subr.bf16.mxu0 %v4305
    %4515 = vmatpush1.bf16.msra.mxu0 %v4304
    %4516 = vmatprep.subr.bf16.mxu0 %v4307
    %4517 = vmatpush1.bf16.msra.mxu0 %v4306
    %4518 = vmatprep.subr.bf16.mxu0 %v4309
    %4519 = vmatpush1.bf16.msra.mxu0 %v4308
    %4520 = vmatprep.subr.bf16.mxu0 %v4311
    %4521 = vmatpush1.bf16.msra.mxu0 %v4310
    %4522 = vmatprep.subr.bf16.mxu0 %v4313
    %4523 = vmatpush1.bf16.msra.mxu0 %v4312
    %4524 = vmatprep.subr.bf16.mxu0 %v4315
    %4525 = vmatpush1.bf16.msra.mxu0 %v4314
    %4526 = vmatprep.subr.bf16.mxu0 %v4317
    %4527 = vmatpush1.bf16.msra.mxu0 %v4316
    %4528 = vmatprep.subr.bf16.mxu0 %v4319
    %4529 = vmatpush1.bf16.msra.mxu0 %v4318
    %4530 = vmatprep.subr.bf16.mxu0 %v4321
    %4531 = vmatpush1.bf16.msra.mxu0 %v4320
    %4532 = vmatprep.subr.bf16.mxu0 %v4323
    %4533 = vmatpush1.bf16.msra.mxu0 %v4322
    %4534 = vmatprep.subr.bf16.mxu0 %v4325
    %4535 = vmatpush1.bf16.msra.mxu0 %v4324
    %4536 = vmatprep.subr.bf16.mxu0 %v4327
    %4537 = vmatpush1.bf16.msra.mxu0 %v4326
    %4538 = vmatprep.subr.bf16.mxu0 %v4329
    %4539 = vmatpush1.bf16.msra.mxu0 %v4328
    %4540 = vmatprep.subr.bf16.mxu0 %v4331
    %4541 = vmatpush1.bf16.msra.mxu0 %v4330
    %4542 = vmatprep.subr.bf16.mxu0 %v4333
    %4543 = vmatpush1.bf16.msra.mxu0 %v4332
    %4544 = vmatprep.subr.bf16.mxu0 %v4335
    %4545 = vmatpush1.bf16.msra.mxu0 %v4334
    %4546 = vmatprep.mubr.bf16.mxu0 %v3843
    %4547 = vmatmul.mubr.bf16.gmra.mrb[0].mxu0 %v3842
    %v4548 = vpop.f32.mrb[0].mxu0
    %v4549 = vadd.f32 %v4508, %v4548
    %v4550 = vpop.f32.mrb[0].mxu0
    %v4551 = vadd.f32 %v4510, %v4550
    %v4552 = vpop.f32.mrb[0].mxu0
    %v4553 = vpop.f32.mrb[0].mxu0
    %4554 = vdwg.mxu0
    %v4555 = vmax.f32 %v4549, 0.0
    %v4556 = vmax.f32 %v4551, 0.0
    %v4557 = vpack.c.bf16 %v4555, %v4555
    %v4558 = vpack.c.bf16 %v4556, %v4556
    %v4559 = vld [vmem:[#allocation18] sm:$0xf]
    %v4560 = vld [vmem:[#allocation18 + $0x4] sm:$0xf]
    %v4561 = vld [vmem:[#allocation18 + $0x8] sm:$0xf]
    %v4562 = vld [vmem:[#allocation18 + $0xc] sm:$0xf]
    %v4563 = vld [vmem:[#allocation18 + $0x10] sm:$0xf]
    %v4564 = vld [vmem:[#allocation18 + $0x14] sm:$0xf]
    %v4565 = vld [vmem:[#allocation18 + $0x18] sm:$0xf]
    %v4566 = vld [vmem:[#allocation18 + $0x1c] sm:$0xf]
    %v4567 = vld [vmem:[#allocation18 + $0x20] sm:$0xf]
    %v4568 = vld [vmem:[#allocation18 + $0x24] sm:$0xf]
    %v4569 = vld [vmem:[#allocation18 + $0x28] sm:$0xf]
    %v4570 = vld [vmem:[#allocation18 + $0x2c] sm:$0xf]
    %v4571 = vld [vmem:[#allocation18 + $0x30] sm:$0xf]
    %v4572 = vld [vmem:[#allocation18 + $0x34] sm:$0xf]
    %v4573 = vld [vmem:[#allocation18 + $0x38] sm:$0xf]
    %v4574 = vld [vmem:[#allocation18 + $0x3c] sm:$0xf]
    %v4575 = vld [vmem:[#allocation18 + $0x40] sm:$0xf]
    %v4576 = vld [vmem:[#allocation18 + $0x44] sm:$0xf]
    %v4577 = vld [vmem:[#allocation18 + $0x48] sm:$0xf]
    %v4578 = vld [vmem:[#allocation18 + $0x4c] sm:$0xf]
    %v4579 = vld [vmem:[#allocation18 + $0x50] sm:$0xf]
    %v4580 = vld [vmem:[#allocation18 + $0x54] sm:$0xf]
    %v4581 = vld [vmem:[#allocation18 + $0x58] sm:$0xf]
    %v4582 = vld [vmem:[#allocation18 + $0x5c] sm:$0xf]
    %v4583 = vld [vmem:[#allocation18 + $0x60] sm:$0xf]
    %v4584 = vld [vmem:[#allocation18 + $0x64] sm:$0xf]
    %v4585 = vld [vmem:[#allocation18 + $0x68] sm:$0xf]
    %v4586 = vld [vmem:[#allocation18 + $0x6c] sm:$0xf]
    %v4587 = vld [vmem:[#allocation18 + $0x70] sm:$0xf]
    %v4588 = vld [vmem:[#allocation18 + $0x74] sm:$0xf]
    %v4589 = vld [vmem:[#allocation18 + $0x78] sm:$0xf]
    %v4590 = vld [vmem:[#allocation18 + $0x7c] sm:$0xf]
    %v4591 = vld [vmem:[#allocation20] sm:$0x1]
    %v4593 = vlaneseq
    %v4594 = vshrl.u32 %v4593, 7
    %v4595 = vsub.s32 0, %v4594
    %v4596 = vrot.slane %v4591, %v4595
    %v4630 = vunpack.c.l.b16 %v4559
    %v4631 = vunpack.c.l.b16 %v4560
    %v4632 = vunpack.c.l.b16 %v4561
    %v4633 = vunpack.c.l.b16 %v4562
    %v4634 = vunpack.c.l.b16 %v4563
    %v4635 = vunpack.c.l.b16 %v4564
    %v4636 = vunpack.c.l.b16 %v4565
    %v4637 = vunpack.c.l.b16 %v4566
    %v4638 = vunpack.c.l.b16 %v4567
    %v4639 = vunpack.c.l.b16 %v4568
    %v4640 = vunpack.c.l.b16 %v4569
    %v4641 = vunpack.c.l.b16 %v4570
    %v4642 = vunpack.c.l.b16 %v4571
    %v4643 = vunpack.c.l.b16 %v4572
    %v4644 = vunpack.c.l.b16 %v4573
    %v4645 = vunpack.c.l.b16 %v4574
    %v4646 = vunpack.c.l.b16 %v4575
    %v4647 = vunpack.c.l.b16 %v4576
    %v4648 = vunpack.c.l.b16 %v4577
    %v4649 = vunpack.c.l.b16 %v4578
    %v4650 = vunpack.c.l.b16 %v4579
    %v4651 = vunpack.c.l.b16 %v4580
    %v4652 = vunpack.c.l.b16 %v4581
    %v4653 = vunpack.c.l.b16 %v4582
    %v4654 = vunpack.c.l.b16 %v4583
    %v4655 = vunpack.c.l.b16 %v4584
    %v4656 = vunpack.c.l.b16 %v4585
    %v4657 = vunpack.c.l.b16 %v4586
    %v4658 = vunpack.c.l.b16 %v4587
    %v4659 = vunpack.c.l.b16 %v4588
    %v4660 = vunpack.c.l.b16 %v4589
    %v4661 = vunpack.c.l.b16 %v4590
    %v4662 = vpack.c.b16 %v4631, %v4630
    %v4663 = vpack.c.b16 %v4633, %v4632
    %v4664 = vpack.c.b16 %v4635, %v4634
    %v4665 = vpack.c.b16 %v4637, %v4636
    %v4666 = vpack.c.b16 %v4639, %v4638
    %v4667 = vpack.c.b16 %v4641, %v4640
    %v4668 = vpack.c.b16 %v4643, %v4642
    %v4669 = vpack.c.b16 %v4645, %v4644
    %v4670 = vpack.c.b16 %v4647, %v4646
    %v4671 = vpack.c.b16 %v4649, %v4648
    %v4672 = vpack.c.b16 %v4651, %v4650
    %v4673 = vpack.c.b16 %v4653, %v4652
    %v4674 = vpack.c.b16 %v4655, %v4654
    %v4675 = vpack.c.b16 %v4657, %v4656
    %v4676 = vpack.c.b16 %v4659, %v4658
    %v4677 = vpack.c.b16 %v4661, %v4660
    %4694 = vmatprep.subr.bf16.mxu0 0
    %4695 = vmatpush1.bf16.msra.mxu0 %v4662
    %4696 = vmatprep.subr.bf16.mxu0 0
    %4697 = vmatpush1.bf16.msra.mxu0 %v4663
    %4698 = vmatprep.subr.bf16.mxu0 0
    %4699 = vmatpush1.bf16.msra.mxu0 %v4664
    %4700 = vmatprep.subr.bf16.mxu0 0
    %4701 = vmatpush1.bf16.msra.mxu0 %v4665
    %4702 = vmatprep.subr.bf16.mxu0 0
    %4703 = vmatpush1.bf16.msra.mxu0 %v4666
    %4704 = vmatprep.subr.bf16.mxu0 0
    %4705 = vmatpush1.bf16.msra.mxu0 %v4667
    %4706 = vmatprep.subr.bf16.mxu0 0
    %4707 = vmatpush1.bf16.msra.mxu0 %v4668
    %4708 = vmatprep.subr.bf16.mxu0 0
    %4709 = vmatpush1.bf16.msra.mxu0 %v4669
    %4710 = vmatprep.subr.bf16.mxu0 0
    %4711 = vmatpush1.bf16.msra.mxu0 %v4670
    %4712 = vmatprep.subr.bf16.mxu0 0
    %4713 = vmatpush1.bf16.msra.mxu0 %v4671
    %4714 = vmatprep.subr.bf16.mxu0 0
    %4715 = vmatpush1.bf16.msra.mxu0 %v4672
    %4716 = vmatprep.subr.bf16.mxu0 0
    %4717 = vmatpush1.bf16.msra.mxu0 %v4673
    %4718 = vmatprep.subr.bf16.mxu0 0
    %4719 = vmatpush1.bf16.msra.mxu0 %v4674
    %4720 = vmatprep.subr.bf16.mxu0 0
    %4721 = vmatpush1.bf16.msra.mxu0 %v4675
    %4722 = vmatprep.subr.bf16.mxu0 0
    %4723 = vmatpush1.bf16.msra.mxu0 %v4676
    %4724 = vmatprep.subr.bf16.mxu0 0
    %4725 = vmatpush1.bf16.msra.mxu0 %v4677
    %4726 = vmatprep.mubr.bf16.mxu0 %v4558
    %4727 = vmatmul.mubr.bf16.gmra.mrb[0].mxu0 %v4557
    %v4728 = vpop.f32.mrb[0].mxu0
    %v4729 = vadd.f32 %v4596, %v4728
    %v4730 = vpop.f32.mrb[0].mxu0
    %v4731 = vpop.f32.mrb[0].mxu0
    %v4732 = vpop.f32.mrb[0].mxu0
    %4733 = vdwg.mxu0
    %v4734 = vmax.f32 %v4729, 0.0
    %v4735 = vpack.c.bf16 %v4734, %v4734
    %v4736 = vld [vmem:[#allocation21] sm:$0x1]
    %v4737 = vld [vmem:[#allocation2] sm:$0x1]
    %4739 = vset.pattern.permute.xlu0 0
    %4740 = vperm.xlu0 %4739, %v4737
    %v4741 = vpop.permute.xlu0 %4740
    %v4743 = vlaneseq
    %v4744 = vshrl.u32 %v4743, 7
    %v4745 = vsub.s32 0, %v4744
    %v4746 = vrot.slane %v4741, %v4745
    %4747 = vmatprep.subr.bf16.mxu0 0
    %4748 = vmatpush1.bf16.xpose.msra.mxu0 %v4735
    %4749 = vmatprep.subr.bf16.mxu0 0
    %4750 = vmatpush1.bf16.xpose.msra.mxu0 0
    %4751 = vmatprep.subr.bf16.mxu0 0
    %4752 = vmatpush1.bf16.xpose.msra.mxu0 0
    %4753 = vmatprep.subr.bf16.mxu0 0
    %4754 = vmatpush1.bf16.xpose.msra.mxu0 0
    %4755 = vmatprep.subr.bf16.mxu0 0
    %4756 = vmatpush1.bf16.xpose.msra.mxu0 0
    %4757 = vmatprep.subr.bf16.mxu0 0
    %4758 = vmatpush1.bf16.xpose.msra.mxu0 0
    %4759 = vmatprep.subr.bf16.mxu0 0
    %4760 = vmatpush1.bf16.xpose.msra.mxu0 0
    %4761 = vmatprep.subr.bf16.mxu0 0
    %4762 = vmatpush1.bf16.xpose.msra.mxu0 0
    %4763 = vmatprep.subr.bf16.mxu0 0
    %4764 = vmatpush1.bf16.xpose.msra.mxu0 0
    %4765 = vmatprep.subr.bf16.mxu0 0
    %4766 = vmatpush1.bf16.xpose.msra.mxu0 0
    %4767 = vmatprep.subr.bf16.mxu0 0
    %4768 = vmatpush1.bf16.xpose.msra.mxu0 0
    %4769 = vmatprep.subr.bf16.mxu0 0
    %4770 = vmatpush1.bf16.xpose.msra.mxu0 0
    %4771 = vmatprep.subr.bf16.mxu0 0
    %4772 = vmatpush1.bf16.xpose.msra.mxu0 0
    %4773 = vmatprep.subr.bf16.mxu0 0
    %4774 = vmatpush1.bf16.xpose.msra.mxu0 0
    %4775 = vmatprep.subr.bf16.mxu0 0
    %4776 = vmatpush1.bf16.xpose.msra.mxu0 0
    %4777 = vmatprep.subr.bf16.mxu0 0
    %4778 = vmatpush1.bf16.xpose.msra.mxu0 0
    %4779 = vmatprep.mubr.bf16.mxu0 0
    %4780 = vmatmul.mubr.bf16.gmra.mrb[0].mxu0 %v4736
    %v4781 = vpop.f32.mrb[0].mxu0
    %v4782 = vadd.f32 %v4746, %v4781
    %v4783 = vpop.f32.mrb[0].mxu0
    %v4784 = vpop.f32.mrb[0].mxu0
    %v4785 = vpop.f32.mrb[0].mxu0
    %4786 = vdwg.mxu0
    %v4787 = vmax.f32 %v4782, 0.0
    %vm4788 = vcmask 57344
    %4789 = vst.msk [vmem:[#allocation23] sm:$0x1] %vm4788, %v4787
    // Predicated region
    $region102: #{uv_model_forward.1} parent=1 // pred_check
      _
    $region103: #{uv_model_forward.1} parent=1 // pred_check_branch
      %4791 = sbr.rel (0) target = $region105
    $region104: #{uv_model_forward.1} parent=1 // pred_region
      %s4793 = ssub.s32 16, 16
      %4794 = vsyncadd [#allocation5], %s4793
      %s4796 = sshll.u32 [#allocation23], 4
      %s4797 = int_to_ptr.vmem [resolvable:$true] %s4796
      %4799 = dma.vmem_to_hbm [thread:$0]  %s4797, 16, %s13, [#allocation5]
    $region105: #{uv_model_forward.1} parent=1 // pred_fallthru
      _
    // Predicated region
    $region106: #{uv_model_forward.1} parent=1 // pred_check
      _
    $region107: #{uv_model_forward.1} parent=1 // pred_check_branch
      %4801 = sbr.rel (0) target = $region109
    $region108: #{uv_model_forward.1} parent=1 // pred_region
      %4802 = dma.done [#allocation5], 16
    $region109: #{uv_model_forward.1} parent=1 // pred_fallthru
      _
    %4803 = vsyncpa [#allocation4], 1
    %4804 = vsyncpa [#allocation7], 1
    %4805 = vsyncpa [#allocation10], 1
    %4806 = vsyncpa [#allocation13], 1
    %4807 = vsyncpa [#allocation16], 1
    %4808 = vsyncpa [#allocation19], 1
    %4809 = vsyncpa [#allocation22], 1
    %4810 = vsyncpa [#allocation5], 1

</llo_original>
